<compile_context>
chip_gen: v7x
topology: tpu7x:2x2x1
jax: 0.10.0
libtpu: 0.0.40
codegen_flags: <defaults>
</compile_context>

<pallas_src>
import functools
import math

import jax
import jax.numpy as jnp
from jax.experimental import pallas as pl
from jax.experimental.pallas import tpu as pltpu


def _layer_norm(x, gamma, beta, eps):
    mu = jnp.mean(x, axis=-1, keepdims=True)
    var = jnp.mean((x - mu) ** 2, axis=-1, keepdims=True)
    return (x - mu) * jax.lax.rsqrt(var + eps) * gamma + beta


def _encoder_layer_kernel(
    x_ref,
    wq_ref, bq_ref, wk_ref, bk_ref, wv_ref, bv_ref,
    wo_ref, bo_ref, g1_ref, be1_ref,
    w1_ref, b1_ref, w2_ref, b2_ref, g2_ref, be2_ref,
    out_ref, *maybe_attn,
    n_head, d_k, d_v, emit_attn, eps,
):
    attn_ref = maybe_attn[0] if emit_attn else None

    bt, S, D = x_ref.shape
    mm = wq_ref.dtype                                    # bf16

    x = x_ref[...]                                       # (bt, S, D) f32
    xf = x.reshape(bt * S, D)                            # lane-dense M = bt*S
    xb = xf.astype(mm)                                   # cast once per batch block

    # ---- Head-fused Q/K/V projections: one wide matmul each ----------------
    q = (jnp.dot(xb, wq_ref[...], preferred_element_type=jnp.float32)
         + bq_ref[...]).astype(mm).reshape(bt, S, n_head * d_k)
    k = (jnp.dot(xb, wk_ref[...], preferred_element_type=jnp.float32)
         + bk_ref[...]).astype(mm).reshape(bt, S, n_head * d_k)
    v = (jnp.dot(xb, wv_ref[...], preferred_element_type=jnp.float32)
         + bv_ref[...]).astype(mm).reshape(bt, S, n_head * d_v)

    scale = 1.0 / math.sqrt(d_k)
    ctx_heads = []
    # Statically unrolled head loop; score working set is (bt, S, S) per head.
    for h in range(n_head):
        qh = q[:, :, h * d_k:(h + 1) * d_k]
        kh = k[:, :, h * d_k:(h + 1) * d_k]
        vh = v[:, :, h * d_v:(h + 1) * d_v]
        # Q K^T via batched contraction of the last dims (no explicit transpose).
        s = jnp.einsum("bqd,bkd->bqk", qh, kh,
                       preferred_element_type=jnp.float32) * scale
        s = s - jnp.max(s, axis=-1, keepdims=True)
        e = jnp.exp(s)
        attn = e / jnp.sum(e, axis=-1, keepdims=True)    # exact: user-visible output
        if emit_attn:
            attn_ref[:, h:h + 1, :, :] = attn.reshape(bt, 1, S, S).astype(attn_ref.dtype)
        ctx_heads.append(
            jnp.einsum("bqk,bkd->bqd", attn.astype(mm), vh,
                       preferred_element_type=jnp.float32))

    # Lane concat of per-head contexts -> full-depth (K = H*d_v) out-projection.
    ctx = jnp.concatenate(ctx_heads, axis=-1).reshape(bt * S, n_head * d_v)
    mha = jnp.dot(ctx.astype(mm), wo_ref[...],
                  preferred_element_type=jnp.float32) + bo_ref[...]

    y = _layer_norm(mha + xf, g1_ref[...], be1_ref[...], eps)

    # ---- Position-wise FFN + residual + LayerNorm (dropout = identity) -----
    h1 = jnp.maximum(
        jnp.dot(y.astype(mm), w1_ref[...],
                preferred_element_type=jnp.float32) + b1_ref[...], 0.0)
    h2 = jnp.dot(h1.astype(mm), w2_ref[...],
                 preferred_element_type=jnp.float32) + b2_ref[...]
    out = _layer_norm(h2 + y, g2_ref[...], be2_ref[...], eps)
    out_ref[...] = out.reshape(bt, S, D).astype(out_ref.dtype)


def encoder_layer(x, params, *, n_head, d_k, d_v, return_attn=True,
                  block_b=None, eps=1e-6, attn_dtype=jnp.float32,
                  out_dtype=None, vmem_budget_bytes=44 * 1024 * 1024):
    B, S, D = x.shape
    d_inner = params["w1"].shape[1]
    mm_dtype = jnp.bfloat16
    out_dtype = x.dtype if out_dtype is None else out_dtype

    wq = params["wq"].astype(mm_dtype)        # (D, H*dk)
    wk = params["wk"].astype(mm_dtype)
    wv = params["wv"].astype(mm_dtype)
    wo = params["wo"].astype(mm_dtype)        # (H*dv, D)
    w1 = params["w1"].astype(mm_dtype)        # (D, d_inner)
    w2 = params["w2"].astype(mm_dtype)        # (d_inner, D)

    resident_arrays = (wq, wk, wv, wo, w1, w2,
                       params["bq"], params["bk"], params["bv"], params["bo"],
                       params["g1"], params["be1"], params["b1"], params["b2"],
                       params["g2"], params["be2"])
    weight_bytes = sum(int(a.size) * jnp.dtype(a.dtype).itemsize
                       for a in resident_arrays)
    attn_bytes = jnp.dtype(attn_dtype).itemsize

    def vmem_estimate(bt):
        m = bt * S
        b = 0
        b += 2 * 2 * m * D * 4                        # x / out blocks, double-buffered
        if return_attn:
            b += 2 * bt * n_head * S * S * attn_bytes
        b += 3 * m * n_head * d_k * (4 + 2)           # q/k/v (f32 + bf16 copies)
        b += 2 * bt * S * S * 4                       # one head's scores + probs
        b += m * n_head * d_v * (4 + 2)               # ctx concat
        b += m * d_inner * (4 + 2)                    # FFN hidden
        b += 4 * m * D * 4                            # mha / y / h2 / out temps
        return b + weight_bytes                       # weights single-buffered

    if block_b is None:
        block_b = 1
        for cand in sorted((d for d in range(1, B + 1) if B % d == 0),
                           reverse=True):
            if B >= 2 and B // cand < 2:
                continue                              # >= 2 parallel blocks (v7x: 2 TCs)
            if vmem_estimate(cand) <= vmem_budget_bytes:
                block_b = cand
                break
    bt = block_b
    assert B % bt == 0

    kernel = functools.partial(
        _encoder_layer_kernel, n_head=n_head, d_k=d_k, d_v=d_v,
        emit_attn=return_attn, eps=eps)

    out_shape = [jax.ShapeDtypeStruct((B, S, D), out_dtype)]
    if return_attn:
        out_shape.append(jax.ShapeDtypeStruct((B, n_head, S, S), attn_dtype))

    args = (x, wq, params["bq"], wk, params["bk"], wv, params["bv"],
            wo, params["bo"], params["g1"], params["be1"],
            w1, params["b1"], w2, params["b2"], params["g2"], params["be2"])

    def build(single_buffer_weights):
        def resident(a):
            nd = a.ndim
            kw = {}
            if single_buffer_weights:
                kw["pipeline_mode"] = pl.Buffered(1)  # constant block: no double-buffer
            return pl.BlockSpec(a.shape, lambda b, _n=nd: (0,) * _n, **kw)

        in_specs = [pl.BlockSpec((bt, S, D), lambda b: (b, 0, 0))]
        in_specs += [resident(a) for a in args[1:]]

        out_specs = [pl.BlockSpec((bt, S, D), lambda b: (b, 0, 0))]
        if return_attn:
            out_specs.append(
                pl.BlockSpec((bt, n_head, S, S), lambda b: (b, 0, 0, 0)))

        return pl.pallas_call(
            kernel,
            out_shape=out_shape,
            grid_spec=pltpu.PrefetchScalarGridSpec(
                num_scalar_prefetch=0,
                grid=(B // bt,),                       # batch blocks only
                in_specs=in_specs,
                out_specs=out_specs),
            compiler_params=pltpu.CompilerParams(
                dimension_semantics=("parallel",),
                vmem_limit_bytes=64 * 1024 * 1024),    # fits v7x physical VMEM
        )

    try:
        outs = build(True)(*args)
    except Exception:
        # Fallback for JAX versions without pipeline_mode=Buffered(1) support:
        # identical kernel, default double-buffered weights.
        outs = build(False)(*args)

    if return_attn:
        return outs[0], outs[1]
    return outs[0], None


def init_params(key, d_model, d_inner, n_head, d_k, d_v):
    ks = jax.random.split(key, 6)
    scale = 0.02
    return {
        # Linear weights stored as (in, out) so the kernel does x @ W + b.
        "wq": scale * jax.random.normal(ks[0], (d_model, n_head * d_k), jnp.float32),
        "bq": jnp.zeros((1, n_head * d_k), jnp.float32),
        "wk": scale * jax.random.normal(ks[1], (d_model, n_head * d_k), jnp.float32),
        "bk": jnp.zeros((1, n_head * d_k), jnp.float32),
        "wv": scale * jax.random.normal(ks[2], (d_model, n_head * d_v), jnp.float32),
        "bv": jnp.zeros((1, n_head * d_v), jnp.float32),
        "wo": scale * jax.random.normal(ks[3], (n_head * d_v, d_model), jnp.float32),
        "bo": jnp.zeros((1, d_model), jnp.float32),
        "g1": jnp.ones((1, d_model), jnp.float32),
        "be1": jnp.zeros((1, d_model), jnp.float32),
        "w1": scale * jax.random.normal(ks[4], (d_model, d_inner), jnp.float32),
        "b1": jnp.zeros((1, d_inner), jnp.float32),
        "w2": scale * jax.random.normal(ks[5], (d_inner, d_model), jnp.float32),
        "b2": jnp.zeros((1, d_model), jnp.float32),
        "g2": jnp.ones((1, d_model), jnp.float32),
        "be2": jnp.zeros((1, d_model), jnp.float32),
    }


if __name__ == "__main__":
    B, S = 2, 8
    d_model, d_inner, n_head, d_k, d_v = 32, 64, 4, 8, 8

    key = jax.random.PRNGKey(0)
    kx, kp = jax.random.split(key)
    x = jax.random.normal(kx, (B, S, d_model), jnp.float32)
    params = init_params(kp, d_model, d_inner, n_head, d_k, d_v)

    enc_out, enc_attn = encoder_layer(x, params, n_head=n_head, d_k=d_k, d_v=d_v)
    jax.block_until_ready((enc_out, enc_attn))

    assert enc_out.shape == (B, S, d_model)
    assert enc_attn.shape == (B, n_head, S, S)
    print("KERNEL_OK")
</pallas_src>

<mosaic_0001>
module attributes {stable_mosaic.version = 11 : i64} {
  func.func @_encoder_layer_kernel(%arg0: i32, %arg1: memref<1x8x32xf32, #tpu.memory_space<vmem>>, %arg2: memref<32x32xbf16, #tpu.memory_space<vmem>>, %arg3: memref<1x32xf32, #tpu.memory_space<vmem>>, %arg4: memref<32x32xbf16, #tpu.memory_space<vmem>>, %arg5: memref<1x32xf32, #tpu.memory_space<vmem>>, %arg6: memref<32x32xbf16, #tpu.memory_space<vmem>>, %arg7: memref<1x32xf32, #tpu.memory_space<vmem>>, %arg8: memref<32x32xbf16, #tpu.memory_space<vmem>>, %arg9: memref<1x32xf32, #tpu.memory_space<vmem>>, %arg10: memref<1x32xf32, #tpu.memory_space<vmem>>, %arg11: memref<1x32xf32, #tpu.memory_space<vmem>>, %arg12: memref<32x64xbf16, #tpu.memory_space<vmem>>, %arg13: memref<1x64xf32, #tpu.memory_space<vmem>>, %arg14: memref<64x32xbf16, #tpu.memory_space<vmem>>, %arg15: memref<1x32xf32, #tpu.memory_space<vmem>>, %arg16: memref<1x32xf32, #tpu.memory_space<vmem>>, %arg17: memref<1x32xf32, #tpu.memory_space<vmem>>, %arg18: memref<1x8x32xf32, #tpu.memory_space<vmem>>, %arg19: memref<1x4x8x8xf32, #tpu.memory_space<vmem>>) attributes {dimension_semantics = [#tpu.dimension_semantics<parallel>], iteration_bounds = array<i64: 2>, scalar_prefetch = 0 : i64, scratch_operands = 0 : i64, tpu.core_type = #tpu.core_type<tc>, window_params = [{transform_indices = @transform_0, window_bounds = array<i64: 1, 8, 32>}, {pipeline_mode = #tpu.pipeline_mode<synchronous>, transform_indices = @transform_1, window_bounds = array<i64: 32, 32>}, {pipeline_mode = #tpu.pipeline_mode<synchronous>, transform_indices = @transform_2, window_bounds = array<i64: 1, 32>}, {pipeline_mode = #tpu.pipeline_mode<synchronous>, transform_indices = @transform_3, window_bounds = array<i64: 32, 32>}, {pipeline_mode = #tpu.pipeline_mode<synchronous>, transform_indices = @transform_4, window_bounds = array<i64: 1, 32>}, {pipeline_mode = #tpu.pipeline_mode<synchronous>, transform_indices = @transform_5, window_bounds = array<i64: 32, 32>}, {pipeline_mode = #tpu.pipeline_mode<synchronous>, transform_indices = @transform_6, window_bounds = array<i64: 1, 32>}, {pipeline_mode = #tpu.pipeline_mode<synchronous>, transform_indices = @transform_7, window_bounds = array<i64: 32, 32>}, {pipeline_mode = #tpu.pipeline_mode<synchronous>, transform_indices = @transform_8, window_bounds = array<i64: 1, 32>}, {pipeline_mode = #tpu.pipeline_mode<synchronous>, transform_indices = @transform_9, window_bounds = array<i64: 1, 32>}, {pipeline_mode = #tpu.pipeline_mode<synchronous>, transform_indices = @transform_10, window_bounds = array<i64: 1, 32>}, {pipeline_mode = #tpu.pipeline_mode<synchronous>, transform_indices = @transform_11, window_bounds = array<i64: 32, 64>}, {pipeline_mode = #tpu.pipeline_mode<synchronous>, transform_indices = @transform_12, window_bounds = array<i64: 1, 64>}, {pipeline_mode = #tpu.pipeline_mode<synchronous>, transform_indices = @transform_13, window_bounds = array<i64: 64, 32>}, {pipeline_mode = #tpu.pipeline_mode<synchronous>, transform_indices = @transform_14, window_bounds = array<i64: 1, 32>}, {pipeline_mode = #tpu.pipeline_mode<synchronous>, transform_indices = @transform_15, window_bounds = array<i64: 1, 32>}, {pipeline_mode = #tpu.pipeline_mode<synchronous>, transform_indices = @transform_16, window_bounds = array<i64: 1, 32>}, {transform_indices = @transform_17, window_bounds = array<i64: 1, 8, 32>}, {transform_indices = @transform_18, window_bounds = array<i64: 1, 4, 8, 8>}]} {
    %c0 = arith.constant 0 : index
    %c0_0 = arith.constant 0 : index
    %c0_1 = arith.constant 0 : index
    %0 = vector.load %arg1[%c0, %c0_0, %c0_1] : memref<1x8x32xf32, #tpu.memory_space<vmem>>, vector<1x8x32xf32>
    %1 = vector.shape_cast %0 : vector<1x8x32xf32> to vector<8x32xf32>
    %2 = arith.truncf %1 : vector<8x32xf32> to vector<8x32xbf16>
    %c0_2 = arith.constant 0 : index
    %c0_3 = arith.constant 0 : index
    %3 = vector.load %arg2[%c0_2, %c0_3] : memref<32x32xbf16, #tpu.memory_space<vmem>>, vector<32x32xbf16>
    %cst = arith.constant dense<0.000000e+00> : vector<8x32xf32>
    %4 = tpu.matmul %2, %3, %cst {dimension_numbers = #tpu.dot_dimension_numbers<[1], [0], [0], [1], [0, 0, 1, 1], [], []>} : vector<8x32xbf16>, vector<32x32xbf16>, vector<8x32xf32> -> vector<8x32xf32>
    %c0_4 = arith.constant 0 : index
    %c0_5 = arith.constant 0 : index
    %5 = vector.load %arg3[%c0_4, %c0_5] : memref<1x32xf32, #tpu.memory_space<vmem>>, vector<1x32xf32>
    %6 = vector.broadcast %5 : vector<1x32xf32> to vector<8x32xf32>
    %7 = arith.addf %4, %6 : vector<8x32xf32>
    %8 = arith.truncf %7 : vector<8x32xf32> to vector<8x32xbf16>
    %9 = vector.shape_cast %8 : vector<8x32xbf16> to vector<1x8x32xbf16>
    %c0_6 = arith.constant 0 : index
    %c0_7 = arith.constant 0 : index
    %10 = vector.load %arg4[%c0_6, %c0_7] : memref<32x32xbf16, #tpu.memory_space<vmem>>, vector<32x32xbf16>
    %cst_8 = arith.constant dense<0.000000e+00> : vector<8x32xf32>
    %11 = tpu.matmul %2, %10, %cst_8 {dimension_numbers = #tpu.dot_dimension_numbers<[1], [0], [0], [1], [0, 0, 1, 1], [], []>} : vector<8x32xbf16>, vector<32x32xbf16>, vector<8x32xf32> -> vector<8x32xf32>
    %c0_9 = arith.constant 0 : index
    %c0_10 = arith.constant 0 : index
    %12 = vector.load %arg5[%c0_9, %c0_10] : memref<1x32xf32, #tpu.memory_space<vmem>>, vector<1x32xf32>
    %13 = vector.broadcast %12 : vector<1x32xf32> to vector<8x32xf32>
    %14 = arith.addf %11, %13 : vector<8x32xf32>
    %15 = arith.truncf %14 : vector<8x32xf32> to vector<8x32xbf16>
    %16 = vector.shape_cast %15 : vector<8x32xbf16> to vector<1x8x32xbf16>
    %c0_11 = arith.constant 0 : index
    %c0_12 = arith.constant 0 : index
    %17 = vector.load %arg6[%c0_11, %c0_12] : memref<32x32xbf16, #tpu.memory_space<vmem>>, vector<32x32xbf16>
    %cst_13 = arith.constant dense<0.000000e+00> : vector<8x32xf32>
    %18 = tpu.matmul %2, %17, %cst_13 {dimension_numbers = #tpu.dot_dimension_numbers<[1], [0], [0], [1], [0, 0, 1, 1], [], []>} : vector<8x32xbf16>, vector<32x32xbf16>, vector<8x32xf32> -> vector<8x32xf32>
    %c0_14 = arith.constant 0 : index
    %c0_15 = arith.constant 0 : index
    %19 = vector.load %arg7[%c0_14, %c0_15] : memref<1x32xf32, #tpu.memory_space<vmem>>, vector<1x32xf32>
    %20 = vector.broadcast %19 : vector<1x32xf32> to vector<8x32xf32>
    %21 = arith.addf %18, %20 : vector<8x32xf32>
    %22 = arith.truncf %21 : vector<8x32xf32> to vector<8x32xbf16>
    %23 = vector.shape_cast %22 : vector<8x32xbf16> to vector<1x8x32xbf16>
    %24 = vector.extract_strided_slice %9 {offsets = [0, 0, 0], sizes = [1, 8, 8], strides = [1, 1, 1]} : vector<1x8x32xbf16> to vector<1x8x8xbf16>
    %25 = vector.extract_strided_slice %16 {offsets = [0, 0, 0], sizes = [1, 8, 8], strides = [1, 1, 1]} : vector<1x8x32xbf16> to vector<1x8x8xbf16>
    %26 = vector.extract_strided_slice %23 {offsets = [0, 0, 0], sizes = [1, 8, 8], strides = [1, 1, 1]} : vector<1x8x32xbf16> to vector<1x8x8xbf16>
    "tpu.trace_start"() <{level = 10 : i32, message = "bqd,bkd->bqk"}> : () -> ()
    %cst_16 = arith.constant dense<0.000000e+00> : vector<1x8x8xf32>
    %27 = tpu.matmul %24, %25, %cst_16 {dimension_numbers = #tpu.dot_dimension_numbers<[2], [2], [1], [1], [0, 0, 0, 1, 1, 1], [0], [0]>} : vector<1x8x8xbf16>, vector<1x8x8xbf16>, vector<1x8x8xf32> -> vector<1x8x8xf32>
    "tpu.trace_stop"() : () -> ()
    %cst_17 = arith.constant 0.353553385 : f32
    %28 = vector.broadcast %cst_17 : f32 to vector<1x8x8xf32>
    %29 = arith.mulf %27, %28 : vector<1x8x8xf32>
    %cst_18 = arith.constant dense<0xFF800000> : vector<1x8xf32>
    %30 = vector.multi_reduction <maximumf>, %29, %cst_18 [2] : vector<1x8x8xf32> to vector<1x8xf32>
    %31 = vector.shape_cast %30 : vector<1x8xf32> to vector<1x8x1xf32>
    %32 = vector.broadcast %31 : vector<1x8x1xf32> to vector<1x8x8xf32>
    %33 = arith.subf %29, %32 : vector<1x8x8xf32>
    %34 = math.exp %33 : vector<1x8x8xf32>
    %cst_19 = arith.constant dense<0.000000e+00> : vector<1x8xf32>
    %35 = vector.multi_reduction <add>, %34, %cst_19 [2] : vector<1x8x8xf32> to vector<1x8xf32>
    %36 = vector.shape_cast %35 : vector<1x8xf32> to vector<1x8x1xf32>
    %37 = vector.broadcast %36 : vector<1x8x1xf32> to vector<1x8x8xf32>
    %38 = arith.divf %34, %37 : vector<1x8x8xf32>
    %39 = vector.shape_cast %38 : vector<1x8x8xf32> to vector<1x1x8x8xf32>
    %c0_20 = arith.constant 0 : index
    %c0_21 = arith.constant 0 : index
    %c0_22 = arith.constant 0 : index
    %c0_23 = arith.constant 0 : index
    %40 = vector.load %arg19[%c0_20, %c0_21, %c0_22, %c0_23] : memref<1x4x8x8xf32, #tpu.memory_space<vmem>>, vector<1x1x8x8xf32>
    tpu.vector_store %arg19[%c0_20, %c0_21, %c0_22, %c0_23], %39 {strides = array<i32>} : memref<1x4x8x8xf32, #tpu.memory_space<vmem>>, vector<1x1x8x8xf32>,
    %41 = arith.truncf %38 : vector<1x8x8xf32> to vector<1x8x8xbf16>
    "tpu.trace_start"() <{level = 10 : i32, message = "bqk,bkd->bqd"}> : () -> ()
    %cst_24 = arith.constant dense<0.000000e+00> : vector<1x8x8xf32>
    %42 = tpu.matmul %41, %26, %cst_24 {dimension_numbers = #tpu.dot_dimension_numbers<[2], [1], [1], [2], [0, 0, 0, 1, 1, 2], [0], [0]>} : vector<1x8x8xbf16>, vector<1x8x8xbf16>, vector<1x8x8xf32> -> vector<1x8x8xf32>
    "tpu.trace_stop"() : () -> ()
    %43 = vector.extract_strided_slice %9 {offsets = [0, 0, 8], sizes = [1, 8, 8], strides = [1, 1, 1]} : vector<1x8x32xbf16> to vector<1x8x8xbf16>
    %44 = vector.extract_strided_slice %16 {offsets = [0, 0, 8], sizes = [1, 8, 8], strides = [1, 1, 1]} : vector<1x8x32xbf16> to vector<1x8x8xbf16>
    %45 = vector.extract_strided_slice %23 {offsets = [0, 0, 8], sizes = [1, 8, 8], strides = [1, 1, 1]} : vector<1x8x32xbf16> to vector<1x8x8xbf16>
    "tpu.trace_start"() <{level = 10 : i32, message = "bqd,bkd->bqk"}> : () -> ()
    %cst_25 = arith.constant dense<0.000000e+00> : vector<1x8x8xf32>
    %46 = tpu.matmul %43, %44, %cst_25 {dimension_numbers = #tpu.dot_dimension_numbers<[2], [2], [1], [1], [0, 0, 0, 1, 1, 1], [0], [0]>} : vector<1x8x8xbf16>, vector<1x8x8xbf16>, vector<1x8x8xf32> -> vector<1x8x8xf32>
    "tpu.trace_stop"() : () -> ()
    %cst_26 = arith.constant 0.353553385 : f32
    %47 = vector.broadcast %cst_26 : f32 to vector<1x8x8xf32>
    %48 = arith.mulf %46, %47 : vector<1x8x8xf32>
    %cst_27 = arith.constant dense<0xFF800000> : vector<1x8xf32>
    %49 = vector.multi_reduction <maximumf>, %48, %cst_27 [2] : vector<1x8x8xf32> to vector<1x8xf32>
    %50 = vector.shape_cast %49 : vector<1x8xf32> to vector<1x8x1xf32>
    %51 = vector.broadcast %50 : vector<1x8x1xf32> to vector<1x8x8xf32>
    %52 = arith.subf %48, %51 : vector<1x8x8xf32>
    %53 = math.exp %52 : vector<1x8x8xf32>
    %cst_28 = arith.constant dense<0.000000e+00> : vector<1x8xf32>
    %54 = vector.multi_reduction <add>, %53, %cst_28 [2] : vector<1x8x8xf32> to vector<1x8xf32>
    %55 = vector.shape_cast %54 : vector<1x8xf32> to vector<1x8x1xf32>
    %56 = vector.broadcast %55 : vector<1x8x1xf32> to vector<1x8x8xf32>
    %57 = arith.divf %53, %56 : vector<1x8x8xf32>
    %58 = vector.shape_cast %57 : vector<1x8x8xf32> to vector<1x1x8x8xf32>
    %c0_29 = arith.constant 0 : index
    %c1 = arith.constant 1 : index
    %c0_30 = arith.constant 0 : index
    %c0_31 = arith.constant 0 : index
    %59 = vector.load %arg19[%c0_29, %c1, %c0_30, %c0_31] : memref<1x4x8x8xf32, #tpu.memory_space<vmem>>, vector<1x1x8x8xf32>
    tpu.vector_store %arg19[%c0_29, %c1, %c0_30, %c0_31], %58 {strides = array<i32>} : memref<1x4x8x8xf32, #tpu.memory_space<vmem>>, vector<1x1x8x8xf32>,
    %60 = arith.truncf %57 : vector<1x8x8xf32> to vector<1x8x8xbf16>
    "tpu.trace_start"() <{level = 10 : i32, message = "bqk,bkd->bqd"}> : () -> ()
    %cst_32 = arith.constant dense<0.000000e+00> : vector<1x8x8xf32>
    %61 = tpu.matmul %60, %45, %cst_32 {dimension_numbers = #tpu.dot_dimension_numbers<[2], [1], [1], [2], [0, 0, 0, 1, 1, 2], [0], [0]>} : vector<1x8x8xbf16>, vector<1x8x8xbf16>, vector<1x8x8xf32> -> vector<1x8x8xf32>
    "tpu.trace_stop"() : () -> ()
    %62 = vector.extract_strided_slice %9 {offsets = [0, 0, 16], sizes = [1, 8, 8], strides = [1, 1, 1]} : vector<1x8x32xbf16> to vector<1x8x8xbf16>
    %63 = vector.extract_strided_slice %16 {offsets = [0, 0, 16], sizes = [1, 8, 8], strides = [1, 1, 1]} : vector<1x8x32xbf16> to vector<1x8x8xbf16>
    %64 = vector.extract_strided_slice %23 {offsets = [0, 0, 16], sizes = [1, 8, 8], strides = [1, 1, 1]} : vector<1x8x32xbf16> to vector<1x8x8xbf16>
    "tpu.trace_start"() <{level = 10 : i32, message = "bqd,bkd->bqk"}> : () -> ()
    %cst_33 = arith.constant dense<0.000000e+00> : vector<1x8x8xf32>
    %65 = tpu.matmul %62, %63, %cst_33 {dimension_numbers = #tpu.dot_dimension_numbers<[2], [2], [1], [1], [0, 0, 0, 1, 1, 1], [0], [0]>} : vector<1x8x8xbf16>, vector<1x8x8xbf16>, vector<1x8x8xf32> -> vector<1x8x8xf32>
    "tpu.trace_stop"() : () -> ()
    %cst_34 = arith.constant 0.353553385 : f32
    %66 = vector.broadcast %cst_34 : f32 to vector<1x8x8xf32>
    %67 = arith.mulf %65, %66 : vector<1x8x8xf32>
    %cst_35 = arith.constant dense<0xFF800000> : vector<1x8xf32>
    %68 = vector.multi_reduction <maximumf>, %67, %cst_35 [2] : vector<1x8x8xf32> to vector<1x8xf32>
    %69 = vector.shape_cast %68 : vector<1x8xf32> to vector<1x8x1xf32>
    %70 = vector.broadcast %69 : vector<1x8x1xf32> to vector<1x8x8xf32>
    %71 = arith.subf %67, %70 : vector<1x8x8xf32>
    %72 = math.exp %71 : vector<1x8x8xf32>
    %cst_36 = arith.constant dense<0.000000e+00> : vector<1x8xf32>
    %73 = vector.multi_reduction <add>, %72, %cst_36 [2] : vector<1x8x8xf32> to vector<1x8xf32>
    %74 = vector.shape_cast %73 : vector<1x8xf32> to vector<1x8x1xf32>
    %75 = vector.broadcast %74 : vector<1x8x1xf32> to vector<1x8x8xf32>
    %76 = arith.divf %72, %75 : vector<1x8x8xf32>
    %77 = vector.shape_cast %76 : vector<1x8x8xf32> to vector<1x1x8x8xf32>
    %c0_37 = arith.constant 0 : index
    %c2 = arith.constant 2 : index
    %c0_38 = arith.constant 0 : index
    %c0_39 = arith.constant 0 : index
    %78 = vector.load %arg19[%c0_37, %c2, %c0_38, %c0_39] : memref<1x4x8x8xf32, #tpu.memory_space<vmem>>, vector<1x1x8x8xf32>
    tpu.vector_store %arg19[%c0_37, %c2, %c0_38, %c0_39], %77 {strides = array<i32>} : memref<1x4x8x8xf32, #tpu.memory_space<vmem>>, vector<1x1x8x8xf32>,
    %79 = arith.truncf %76 : vector<1x8x8xf32> to vector<1x8x8xbf16>
    "tpu.trace_start"() <{level = 10 : i32, message = "bqk,bkd->bqd"}> : () -> ()
    %cst_40 = arith.constant dense<0.000000e+00> : vector<1x8x8xf32>
    %80 = tpu.matmul %79, %64, %cst_40 {dimension_numbers = #tpu.dot_dimension_numbers<[2], [1], [1], [2], [0, 0, 0, 1, 1, 2], [0], [0]>} : vector<1x8x8xbf16>, vector<1x8x8xbf16>, vector<1x8x8xf32> -> vector<1x8x8xf32>
    "tpu.trace_stop"() : () -> ()
    %81 = vector.extract_strided_slice %9 {offsets = [0, 0, 24], sizes = [1, 8, 8], strides = [1, 1, 1]} : vector<1x8x32xbf16> to vector<1x8x8xbf16>
    %82 = vector.extract_strided_slice %16 {offsets = [0, 0, 24], sizes = [1, 8, 8], strides = [1, 1, 1]} : vector<1x8x32xbf16> to vector<1x8x8xbf16>
    %83 = vector.extract_strided_slice %23 {offsets = [0, 0, 24], sizes = [1, 8, 8], strides = [1, 1, 1]} : vector<1x8x32xbf16> to vector<1x8x8xbf16>
    "tpu.trace_start"() <{level = 10 : i32, message = "bqd,bkd->bqk"}> : () -> ()
    %cst_41 = arith.constant dense<0.000000e+00> : vector<1x8x8xf32>
    %84 = tpu.matmul %81, %82, %cst_41 {dimension_numbers = #tpu.dot_dimension_numbers<[2], [2], [1], [1], [0, 0, 0, 1, 1, 1], [0], [0]>} : vector<1x8x8xbf16>, vector<1x8x8xbf16>, vector<1x8x8xf32> -> vector<1x8x8xf32>
    "tpu.trace_stop"() : () -> ()
    %cst_42 = arith.constant 0.353553385 : f32
    %85 = vector.broadcast %cst_42 : f32 to vector<1x8x8xf32>
    %86 = arith.mulf %84, %85 : vector<1x8x8xf32>
    %cst_43 = arith.constant dense<0xFF800000> : vector<1x8xf32>
    %87 = vector.multi_reduction <maximumf>, %86, %cst_43 [2] : vector<1x8x8xf32> to vector<1x8xf32>
    %88 = vector.shape_cast %87 : vector<1x8xf32> to vector<1x8x1xf32>
    %89 = vector.broadcast %88 : vector<1x8x1xf32> to vector<1x8x8xf32>
    %90 = arith.subf %86, %89 : vector<1x8x8xf32>
    %91 = math.exp %90 : vector<1x8x8xf32>
    %cst_44 = arith.constant dense<0.000000e+00> : vector<1x8xf32>
    %92 = vector.multi_reduction <add>, %91, %cst_44 [2] : vector<1x8x8xf32> to vector<1x8xf32>
    %93 = vector.shape_cast %92 : vector<1x8xf32> to vector<1x8x1xf32>
    %94 = vector.broadcast %93 : vector<1x8x1xf32> to vector<1x8x8xf32>
    %95 = arith.divf %91, %94 : vector<1x8x8xf32>
    %96 = vector.shape_cast %95 : vector<1x8x8xf32> to vector<1x1x8x8xf32>
    %c0_45 = arith.constant 0 : index
    %c3 = arith.constant 3 : index
    %c0_46 = arith.constant 0 : index
    %c0_47 = arith.constant 0 : index
    %97 = vector.load %arg19[%c0_45, %c3, %c0_46, %c0_47] : memref<1x4x8x8xf32, #tpu.memory_space<vmem>>, vector<1x1x8x8xf32>
    tpu.vector_store %arg19[%c0_45, %c3, %c0_46, %c0_47], %96 {strides = array<i32>} : memref<1x4x8x8xf32, #tpu.memory_space<vmem>>, vector<1x1x8x8xf32>,
    %98 = arith.truncf %95 : vector<1x8x8xf32> to vector<1x8x8xbf16>
    "tpu.trace_start"() <{level = 10 : i32, message = "bqk,bkd->bqd"}> : () -> ()
    %cst_48 = arith.constant dense<0.000000e+00> : vector<1x8x8xf32>
    %99 = tpu.matmul %98, %83, %cst_48 {dimension_numbers = #tpu.dot_dimension_numbers<[2], [1], [1], [2], [0, 0, 0, 1, 1, 2], [0], [0]>} : vector<1x8x8xbf16>, vector<1x8x8xbf16>, vector<1x8x8xf32> -> vector<1x8x8xf32>
    "tpu.trace_stop"() : () -> ()
    %100 = tpu.concatenate %42, %61, %80, %99 in 2 : vector<1x8x8xf32>, vector<1x8x8xf32>, vector<1x8x8xf32>, vector<1x8x8xf32> -> vector<1x8x32xf32>
    %101 = vector.shape_cast %100 : vector<1x8x32xf32> to vector<8x32xf32>
    %102 = arith.truncf %101 : vector<8x32xf32> to vector<8x32xbf16>
    %c0_49 = arith.constant 0 : index
    %c0_50 = arith.constant 0 : index
    %103 = vector.load %arg8[%c0_49, %c0_50] : memref<32x32xbf16, #tpu.memory_space<vmem>>, vector<32x32xbf16>
    %cst_51 = arith.constant dense<0.000000e+00> : vector<8x32xf32>
    %104 = tpu.matmul %102, %103, %cst_51 {dimension_numbers = #tpu.dot_dimension_numbers<[1], [0], [0], [1], [0, 0, 1, 1], [], []>} : vector<8x32xbf16>, vector<32x32xbf16>, vector<8x32xf32> -> vector<8x32xf32>
    %c0_52 = arith.constant 0 : index
    %c0_53 = arith.constant 0 : index
    %105 = vector.load %arg9[%c0_52, %c0_53] : memref<1x32xf32, #tpu.memory_space<vmem>>, vector<1x32xf32>
    %106 = vector.broadcast %105 : vector<1x32xf32> to vector<8x32xf32>
    %107 = arith.addf %104, %106 : vector<8x32xf32>
    %108 = arith.addf %107, %1 : vector<8x32xf32>
    %c0_54 = arith.constant 0 : index
    %c0_55 = arith.constant 0 : index
    %109 = vector.load %arg10[%c0_54, %c0_55] : memref<1x32xf32, #tpu.memory_space<vmem>>, vector<1x32xf32>
    %c0_56 = arith.constant 0 : index
    %c0_57 = arith.constant 0 : index
    %110 = vector.load %arg11[%c0_56, %c0_57] : memref<1x32xf32, #tpu.memory_space<vmem>>, vector<1x32xf32>
    %cst_58 = arith.constant dense<0.000000e+00> : vector<8xf32>
    %111 = vector.multi_reduction <add>, %108, %cst_58 [1] : vector<8x32xf32> to vector<8xf32>
    %112 = vector.shape_cast %111 : vector<8xf32> to vector<8x1xf32>
    %cst_59 = arith.constant 3.200000e+01 : f32
    %113 = vector.broadcast %cst_59 : f32 to vector<8x1xf32>
    %114 = arith.divf %112, %113 : vector<8x1xf32>
    %115 = vector.broadcast %114 : vector<8x1xf32> to vector<8x32xf32>
    %116 = arith.subf %108, %115 : vector<8x32xf32>
    %117 = arith.mulf %116, %116 : vector<8x32xf32>
    %cst_60 = arith.constant dense<0.000000e+00> : vector<8xf32>
    %118 = vector.multi_reduction <add>, %117, %cst_60 [1] : vector<8x32xf32> to vector<8xf32>
    %119 = vector.shape_cast %118 : vector<8xf32> to vector<8x1xf32>
    %cst_61 = arith.constant 3.200000e+01 : f32
    %120 = vector.broadcast %cst_61 : f32 to vector<8x1xf32>
    %121 = arith.divf %119, %120 : vector<8x1xf32>
    %122 = vector.broadcast %114 : vector<8x1xf32> to vector<8x32xf32>
    %123 = arith.subf %108, %122 : vector<8x32xf32>
    %cst_62 = arith.constant 9.99999997E-7 : f32
    %124 = vector.broadcast %cst_62 : f32 to vector<8x1xf32>
    %125 = arith.addf %121, %124 : vector<8x1xf32>
    %126 = math.rsqrt %125 : vector<8x1xf32>
    %127 = vector.broadcast %126 : vector<8x1xf32> to vector<8x32xf32>
    %128 = arith.mulf %123, %127 : vector<8x32xf32>
    %129 = vector.broadcast %109 : vector<1x32xf32> to vector<8x32xf32>
    %130 = arith.mulf %128, %129 : vector<8x32xf32>
    %131 = vector.broadcast %110 : vector<1x32xf32> to vector<8x32xf32>
    %132 = arith.addf %130, %131 : vector<8x32xf32>
    %133 = arith.truncf %132 : vector<8x32xf32> to vector<8x32xbf16>
    %c0_63 = arith.constant 0 : index
    %c0_64 = arith.constant 0 : index
    %134 = vector.load %arg12[%c0_63, %c0_64] : memref<32x64xbf16, #tpu.memory_space<vmem>>, vector<32x64xbf16>
    %cst_65 = arith.constant dense<0.000000e+00> : vector<8x64xf32>
    %135 = tpu.matmul %133, %134, %cst_65 {dimension_numbers = #tpu.dot_dimension_numbers<[1], [0], [0], [1], [0, 0, 1, 1], [], []>} : vector<8x32xbf16>, vector<32x64xbf16>, vector<8x64xf32> -> vector<8x64xf32>
    %c0_66 = arith.constant 0 : index
    %c0_67 = arith.constant 0 : index
    %136 = vector.load %arg13[%c0_66, %c0_67] : memref<1x64xf32, #tpu.memory_space<vmem>>, vector<1x64xf32>
    %137 = vector.broadcast %136 : vector<1x64xf32> to vector<8x64xf32>
    %138 = arith.addf %135, %137 : vector<8x64xf32>
    %cst_68 = arith.constant 0.000000e+00 : f32
    %139 = vector.broadcast %cst_68 : f32 to vector<8x64xf32>
    %140 = arith.maximumf %138, %139 : vector<8x64xf32>
    %141 = arith.truncf %140 : vector<8x64xf32> to vector<8x64xbf16>
    %c0_69 = arith.constant 0 : index
    %c0_70 = arith.constant 0 : index
    %142 = vector.load %arg14[%c0_69, %c0_70] : memref<64x32xbf16, #tpu.memory_space<vmem>>, vector<64x32xbf16>
    %cst_71 = arith.constant dense<0.000000e+00> : vector<8x32xf32>
    %143 = tpu.matmul %141, %142, %cst_71 {dimension_numbers = #tpu.dot_dimension_numbers<[1], [0], [0], [1], [0, 0, 1, 1], [], []>} : vector<8x64xbf16>, vector<64x32xbf16>, vector<8x32xf32> -> vector<8x32xf32>
    %c0_72 = arith.constant 0 : index
    %c0_73 = arith.constant 0 : index
    %144 = vector.load %arg15[%c0_72, %c0_73] : memref<1x32xf32, #tpu.memory_space<vmem>>, vector<1x32xf32>
    %145 = vector.broadcast %144 : vector<1x32xf32> to vector<8x32xf32>
    %146 = arith.addf %143, %145 : vector<8x32xf32>
    %147 = arith.addf %146, %132 : vector<8x32xf32>
    %c0_74 = arith.constant 0 : index
    %c0_75 = arith.constant 0 : index
    %148 = vector.load %arg16[%c0_74, %c0_75] : memref<1x32xf32, #tpu.memory_space<vmem>>, vector<1x32xf32>
    %c0_76 = arith.constant 0 : index
    %c0_77 = arith.constant 0 : index
    %149 = vector.load %arg17[%c0_76, %c0_77] : memref<1x32xf32, #tpu.memory_space<vmem>>, vector<1x32xf32>
    %cst_78 = arith.constant dense<0.000000e+00> : vector<8xf32>
    %150 = vector.multi_reduction <add>, %147, %cst_78 [1] : vector<8x32xf32> to vector<8xf32>
    %151 = vector.shape_cast %150 : vector<8xf32> to vector<8x1xf32>
    %cst_79 = arith.constant 3.200000e+01 : f32
    %152 = vector.broadcast %cst_79 : f32 to vector<8x1xf32>
    %153 = arith.divf %151, %152 : vector<8x1xf32>
    %154 = vector.broadcast %153 : vector<8x1xf32> to vector<8x32xf32>
    %155 = arith.subf %147, %154 : vector<8x32xf32>
    %156 = arith.mulf %155, %155 : vector<8x32xf32>
    %cst_80 = arith.constant dense<0.000000e+00> : vector<8xf32>
    %157 = vector.multi_reduction <add>, %156, %cst_80 [1] : vector<8x32xf32> to vector<8xf32>
    %158 = vector.shape_cast %157 : vector<8xf32> to vector<8x1xf32>
    %cst_81 = arith.constant 3.200000e+01 : f32
    %159 = vector.broadcast %cst_81 : f32 to vector<8x1xf32>
    %160 = arith.divf %158, %159 : vector<8x1xf32>
    %161 = vector.broadcast %153 : vector<8x1xf32> to vector<8x32xf32>
    %162 = arith.subf %147, %161 : vector<8x32xf32>
    %cst_82 = arith.constant 9.99999997E-7 : f32
    %163 = vector.broadcast %cst_82 : f32 to vector<8x1xf32>
    %164 = arith.addf %160, %163 : vector<8x1xf32>
    %165 = math.rsqrt %164 : vector<8x1xf32>
    %166 = vector.broadcast %165 : vector<8x1xf32> to vector<8x32xf32>
    %167 = arith.mulf %162, %166 : vector<8x32xf32>
    %168 = vector.broadcast %148 : vector<1x32xf32> to vector<8x32xf32>
    %169 = arith.mulf %167, %168 : vector<8x32xf32>
    %170 = vector.broadcast %149 : vector<1x32xf32> to vector<8x32xf32>
    %171 = arith.addf %169, %170 : vector<8x32xf32>
    %172 = vector.shape_cast %171 : vector<8x32xf32> to vector<1x8x32xf32>
    %c0_83 = arith.constant 0 : index
    %c0_84 = arith.constant 0 : index
    %c0_85 = arith.constant 0 : index
    %173 = vector.load %arg18[%c0_83, %c0_84, %c0_85] : memref<1x8x32xf32, #tpu.memory_space<vmem>>, vector<1x8x32xf32>
    tpu.vector_store %arg18[%c0_83, %c0_84, %c0_85], %172 {strides = array<i32>} : memref<1x8x32xf32, #tpu.memory_space<vmem>>, vector<1x8x32xf32>,
    return
  }
  func.func @transform_0(%arg0: i32) -> (i32, i32, i32) {
    %c0_i32 = arith.constant 0 : i32
    %c0_i32_0 = arith.constant 0 : i32
    %c0_i32_1 = arith.constant 0 : i32
    return %arg0, %c0_i32, %c0_i32_0 : i32, i32, i32
  }
  func.func @transform_1(%arg0: i32) -> (i32, i32) {
    %c0_i32 = arith.constant 0 : i32
    %c0_i32_0 = arith.constant 0 : i32
    %c0_i32_1 = arith.constant 0 : i32
    return %c0_i32, %c0_i32_0 : i32, i32
  }
  func.func @transform_2(%arg0: i32) -> (i32, i32) {
    %c0_i32 = arith.constant 0 : i32
    %c0_i32_0 = arith.constant 0 : i32
    %c0_i32_1 = arith.constant 0 : i32
    return %c0_i32, %c0_i32_0 : i32, i32
  }
  func.func @transform_3(%arg0: i32) -> (i32, i32) {
    %c0_i32 = arith.constant 0 : i32
    %c0_i32_0 = arith.constant 0 : i32
    %c0_i32_1 = arith.constant 0 : i32
    return %c0_i32, %c0_i32_0 : i32, i32
  }
  func.func @transform_4(%arg0: i32) -> (i32, i32) {
    %c0_i32 = arith.constant 0 : i32
    %c0_i32_0 = arith.constant 0 : i32
    %c0_i32_1 = arith.constant 0 : i32
    return %c0_i32, %c0_i32_0 : i32, i32
  }
  func.func @transform_5(%arg0: i32) -> (i32, i32) {
    %c0_i32 = arith.constant 0 : i32
    %c0_i32_0 = arith.constant 0 : i32
    %c0_i32_1 = arith.constant 0 : i32
    return %c0_i32, %c0_i32_0 : i32, i32
  }
  func.func @transform_6(%arg0: i32) -> (i32, i32) {
    %c0_i32 = arith.constant 0 : i32
    %c0_i32_0 = arith.constant 0 : i32
    %c0_i32_1 = arith.constant 0 : i32
    return %c0_i32, %c0_i32_0 : i32, i32
  }
  func.func @transform_7(%arg0: i32) -> (i32, i32) {
    %c0_i32 = arith.constant 0 : i32
    %c0_i32_0 = arith.constant 0 : i32
    %c0_i32_1 = arith.constant 0 : i32
    return %c0_i32, %c0_i32_0 : i32, i32
  }
  func.func @transform_8(%arg0: i32) -> (i32, i32) {
    %c0_i32 = arith.constant 0 : i32
    %c0_i32_0 = arith.constant 0 : i32
    %c0_i32_1 = arith.constant 0 : i32
    return %c0_i32, %c0_i32_0 : i32, i32
  }
  func.func @transform_9(%arg0: i32) -> (i32, i32) {
    %c0_i32 = arith.constant 0 : i32
    %c0_i32_0 = arith.constant 0 : i32
    %c0_i32_1 = arith.constant 0 : i32
    return %c0_i32, %c0_i32_0 : i32, i32
  }
  func.func @transform_10(%arg0: i32) -> (i32, i32) {
    %c0_i32 = arith.constant 0 : i32
    %c0_i32_0 = arith.constant 0 : i32
    %c0_i32_1 = arith.constant 0 : i32
    return %c0_i32, %c0_i32_0 : i32, i32
  }
  func.func @transform_11(%arg0: i32) -> (i32, i32) {
    %c0_i32 = arith.constant 0 : i32
    %c0_i32_0 = arith.constant 0 : i32
    %c0_i32_1 = arith.constant 0 : i32
    return %c0_i32, %c0_i32_0 : i32, i32
  }
  func.func @transform_12(%arg0: i32) -> (i32, i32) {
    %c0_i32 = arith.constant 0 : i32
    %c0_i32_0 = arith.constant 0 : i32
    %c0_i32_1 = arith.constant 0 : i32
    return %c0_i32, %c0_i32_0 : i32, i32
  }
  func.func @transform_13(%arg0: i32) -> (i32, i32) {
    %c0_i32 = arith.constant 0 : i32
    %c0_i32_0 = arith.constant 0 : i32
    %c0_i32_1 = arith.constant 0 : i32
    return %c0_i32, %c0_i32_0 : i32, i32
  }
  func.func @transform_14(%arg0: i32) -> (i32, i32) {
    %c0_i32 = arith.constant 0 : i32
    %c0_i32_0 = arith.constant 0 : i32
    %c0_i32_1 = arith.constant 0 : i32
    return %c0_i32, %c0_i32_0 : i32, i32
  }
  func.func @transform_15(%arg0: i32) -> (i32, i32) {
    %c0_i32 = arith.constant 0 : i32
    %c0_i32_0 = arith.constant 0 : i32
    %c0_i32_1 = arith.constant 0 : i32
    return %c0_i32, %c0_i32_0 : i32, i32
  }
  func.func @transform_16(%arg0: i32) -> (i32, i32) {
    %c0_i32 = arith.constant 0 : i32
    %c0_i32_0 = arith.constant 0 : i32
    %c0_i32_1 = arith.constant 0 : i32
    return %c0_i32, %c0_i32_0 : i32, i32
  }
  func.func @transform_17(%arg0: i32) -> (i32, i32, i32) {
    %c0_i32 = arith.constant 0 : i32
    %c0_i32_0 = arith.constant 0 : i32
    %c0_i32_1 = arith.constant 0 : i32
    return %arg0, %c0_i32, %c0_i32_0 : i32, i32, i32
  }
  func.func @transform_18(%arg0: i32) -> (i32, i32, i32, i32) {
    %c0_i32 = arith.constant 0 : i32
    %c0_i32_0 = arith.constant 0 : i32
    %c0_i32_1 = arith.constant 0 : i32
    %c0_i32_2 = arith.constant 0 : i32
    return %arg0, %c0_i32, %c0_i32_0, %c0_i32_1 : i32, i32, i32, i32
  }
}

module attributes {stable_mosaic.version = 11 : i64} {
  func.func @_encoder_layer_kernel(%arg0: i32, %arg1: memref<1x8x32xf32, #tpu.memory_space<vmem>>, %arg2: memref<32x32xbf16, #tpu.memory_space<vmem>>, %arg3: memref<1x32xf32, #tpu.memory_space<vmem>>, %arg4: memref<32x32xbf16, #tpu.memory_space<vmem>>, %arg5: memref<1x32xf32, #tpu.memory_space<vmem>>, %arg6: memref<32x32xbf16, #tpu.memory_space<vmem>>, %arg7: memref<1x32xf32, #tpu.memory_space<vmem>>, %arg8: memref<32x32xbf16, #tpu.memory_space<vmem>>, %arg9: memref<1x32xf32, #tpu.memory_space<vmem>>, %arg10: memref<1x32xf32, #tpu.memory_space<vmem>>, %arg11: memref<1x32xf32, #tpu.memory_space<vmem>>, %arg12: memref<32x64xbf16, #tpu.memory_space<vmem>>, %arg13: memref<1x64xf32, #tpu.memory_space<vmem>>, %arg14: memref<64x32xbf16, #tpu.memory_space<vmem>>, %arg15: memref<1x32xf32, #tpu.memory_space<vmem>>, %arg16: memref<1x32xf32, #tpu.memory_space<vmem>>, %arg17: memref<1x32xf32, #tpu.memory_space<vmem>>, %arg18: memref<1x8x32xf32, #tpu.memory_space<vmem>>, %arg19: memref<1x4x8x8xf32, #tpu.memory_space<vmem>>) attributes {dimension_semantics = [#tpu.dimension_semantics<parallel>], iteration_bounds = array<i64: 2>, scalar_prefetch = 0 : i64, scratch_operands = 0 : i64, tpu.core_type = #tpu.core_type<tc>, window_params = [{transform_indices = @transform_0, window_bounds = array<i64: 1, 8, 32>}, {pipeline_mode = #tpu.pipeline_mode<synchronous>, transform_indices = @transform_1, window_bounds = array<i64: 32, 32>}, {pipeline_mode = #tpu.pipeline_mode<synchronous>, transform_indices = @transform_2, window_bounds = array<i64: 1, 32>}, {pipeline_mode = #tpu.pipeline_mode<synchronous>, transform_indices = @transform_3, window_bounds = array<i64: 32, 32>}, {pipeline_mode = #tpu.pipeline_mode<synchronous>, transform_indices = @transform_4, window_bounds = array<i64: 1, 32>}, {pipeline_mode = #tpu.pipeline_mode<synchronous>, transform_indices = @transform_5, window_bounds = array<i64: 32, 32>}, {pipeline_mode = #tpu.pipeline_mode<synchronous>, transform_indices = @transform_6, window_bounds = array<i64: 1, 32>}, {pipeline_mode = #tpu.pipeline_mode<synchronous>, transform_indices = @transform_7, window_bounds = array<i64: 32, 32>}, {pipeline_mode = #tpu.pipeline_mode<synchronous>, transform_indices = @transform_8, window_bounds = array<i64: 1, 32>}, {pipeline_mode = #tpu.pipeline_mode<synchronous>, transform_indices = @transform_9, window_bounds = array<i64: 1, 32>}, {pipeline_mode = #tpu.pipeline_mode<synchronous>, transform_indices = @transform_10, window_bounds = array<i64: 1, 32>}, {pipeline_mode = #tpu.pipeline_mode<synchronous>, transform_indices = @transform_11, window_bounds = array<i64: 32, 64>}, {pipeline_mode = #tpu.pipeline_mode<synchronous>, transform_indices = @transform_12, window_bounds = array<i64: 1, 64>}, {pipeline_mode = #tpu.pipeline_mode<synchronous>, transform_indices = @transform_13, window_bounds = array<i64: 64, 32>}, {pipeline_mode = #tpu.pipeline_mode<synchronous>, transform_indices = @transform_14, window_bounds = array<i64: 1, 32>}, {pipeline_mode = #tpu.pipeline_mode<synchronous>, transform_indices = @transform_15, window_bounds = array<i64: 1, 32>}, {pipeline_mode = #tpu.pipeline_mode<synchronous>, transform_indices = @transform_16, window_bounds = array<i64: 1, 32>}, {transform_indices = @transform_17, window_bounds = array<i64: 1, 8, 32>}, {transform_indices = @transform_18, window_bounds = array<i64: 1, 4, 8, 8>}]} {
    %c0 = arith.constant 0 : index
    %c0_0 = arith.constant 0 : index
    %c0_1 = arith.constant 0 : index
    %0 = vector.load %arg1[%c0, %c0_0, %c0_1] : memref<1x8x32xf32, #tpu.memory_space<vmem>>, vector<1x8x32xf32>
    %1 = vector.shape_cast %0 : vector<1x8x32xf32> to vector<8x32xf32>
    %2 = arith.truncf %1 : vector<8x32xf32> to vector<8x32xbf16>
    %c0_2 = arith.constant 0 : index
    %c0_3 = arith.constant 0 : index
    %3 = vector.load %arg2[%c0_2, %c0_3] : memref<32x32xbf16, #tpu.memory_space<vmem>>, vector<32x32xbf16>
    %cst = arith.constant dense<0.000000e+00> : vector<8x32xf32>
    %4 = tpu.matmul %2, %3, %cst {dimension_numbers = #tpu.dot_dimension_numbers<[1], [0], [0], [1], [0, 0, 1, 1], [], []>} : vector<8x32xbf16>, vector<32x32xbf16>, vector<8x32xf32> -> vector<8x32xf32>
    %c0_4 = arith.constant 0 : index
    %c0_5 = arith.constant 0 : index
    %5 = vector.load %arg3[%c0_4, %c0_5] : memref<1x32xf32, #tpu.memory_space<vmem>>, vector<1x32xf32>
    %6 = vector.broadcast %5 : vector<1x32xf32> to vector<8x32xf32>
    %7 = arith.addf %4, %6 : vector<8x32xf32>
    %8 = arith.truncf %7 : vector<8x32xf32> to vector<8x32xbf16>
    %9 = vector.shape_cast %8 : vector<8x32xbf16> to vector<1x8x32xbf16>
    %c0_6 = arith.constant 0 : index
    %c0_7 = arith.constant 0 : index
    %10 = vector.load %arg4[%c0_6, %c0_7] : memref<32x32xbf16, #tpu.memory_space<vmem>>, vector<32x32xbf16>
    %cst_8 = arith.constant dense<0.000000e+00> : vector<8x32xf32>
    %11 = tpu.matmul %2, %10, %cst_8 {dimension_numbers = #tpu.dot_dimension_numbers<[1], [0], [0], [1], [0, 0, 1, 1], [], []>} : vector<8x32xbf16>, vector<32x32xbf16>, vector<8x32xf32> -> vector<8x32xf32>
    %c0_9 = arith.constant 0 : index
    %c0_10 = arith.constant 0 : index
    %12 = vector.load %arg5[%c0_9, %c0_10] : memref<1x32xf32, #tpu.memory_space<vmem>>, vector<1x32xf32>
    %13 = vector.broadcast %12 : vector<1x32xf32> to vector<8x32xf32>
    %14 = arith.addf %11, %13 : vector<8x32xf32>
    %15 = arith.truncf %14 : vector<8x32xf32> to vector<8x32xbf16>
    %16 = vector.shape_cast %15 : vector<8x32xbf16> to vector<1x8x32xbf16>
    %c0_11 = arith.constant 0 : index
    %c0_12 = arith.constant 0 : index
    %17 = vector.load %arg6[%c0_11, %c0_12] : memref<32x32xbf16, #tpu.memory_space<vmem>>, vector<32x32xbf16>
    %cst_13 = arith.constant dense<0.000000e+00> : vector<8x32xf32>
    %18 = tpu.matmul %2, %17, %cst_13 {dimension_numbers = #tpu.dot_dimension_numbers<[1], [0], [0], [1], [0, 0, 1, 1], [], []>} : vector<8x32xbf16>, vector<32x32xbf16>, vector<8x32xf32> -> vector<8x32xf32>
    %c0_14 = arith.constant 0 : index
    %c0_15 = arith.constant 0 : index
    %19 = vector.load %arg7[%c0_14, %c0_15] : memref<1x32xf32, #tpu.memory_space<vmem>>, vector<1x32xf32>
    %20 = vector.broadcast %19 : vector<1x32xf32> to vector<8x32xf32>
    %21 = arith.addf %18, %20 : vector<8x32xf32>
    %22 = arith.truncf %21 : vector<8x32xf32> to vector<8x32xbf16>
    %23 = vector.shape_cast %22 : vector<8x32xbf16> to vector<1x8x32xbf16>
    %24 = vector.extract_strided_slice %9 {offsets = [0, 0, 0], sizes = [1, 8, 8], strides = [1, 1, 1]} : vector<1x8x32xbf16> to vector<1x8x8xbf16>
    %25 = vector.extract_strided_slice %16 {offsets = [0, 0, 0], sizes = [1, 8, 8], strides = [1, 1, 1]} : vector<1x8x32xbf16> to vector<1x8x8xbf16>
    %26 = vector.extract_strided_slice %23 {offsets = [0, 0, 0], sizes = [1, 8, 8], strides = [1, 1, 1]} : vector<1x8x32xbf16> to vector<1x8x8xbf16>
    "tpu.trace_start"() <{level = 10 : i32, message = "bqd,bkd->bqk"}> : () -> ()
    %cst_16 = arith.constant dense<0.000000e+00> : vector<1x8x8xf32>
    %27 = tpu.matmul %24, %25, %cst_16 {dimension_numbers = #tpu.dot_dimension_numbers<[2], [2], [1], [1], [0, 0, 0, 1, 1, 1], [0], [0]>} : vector<1x8x8xbf16>, vector<1x8x8xbf16>, vector<1x8x8xf32> -> vector<1x8x8xf32>
    "tpu.trace_stop"() : () -> ()
    %cst_17 = arith.constant 0.353553385 : f32
    %28 = vector.broadcast %cst_17 : f32 to vector<1x8x8xf32>
    %29 = arith.mulf %27, %28 : vector<1x8x8xf32>
    %cst_18 = arith.constant dense<0xFF800000> : vector<1x8xf32>
    %30 = vector.multi_reduction <maximumf>, %29, %cst_18 [2] : vector<1x8x8xf32> to vector<1x8xf32>
    %31 = vector.shape_cast %30 : vector<1x8xf32> to vector<1x8x1xf32>
    %32 = vector.broadcast %31 : vector<1x8x1xf32> to vector<1x8x8xf32>
    %33 = arith.subf %29, %32 : vector<1x8x8xf32>
    %34 = math.exp %33 : vector<1x8x8xf32>
    %cst_19 = arith.constant dense<0.000000e+00> : vector<1x8xf32>
    %35 = vector.multi_reduction <add>, %34, %cst_19 [2] : vector<1x8x8xf32> to vector<1x8xf32>
    %36 = vector.shape_cast %35 : vector<1x8xf32> to vector<1x8x1xf32>
    %37 = vector.broadcast %36 : vector<1x8x1xf32> to vector<1x8x8xf32>
    %38 = arith.divf %34, %37 : vector<1x8x8xf32>
    %39 = vector.shape_cast %38 : vector<1x8x8xf32> to vector<1x1x8x8xf32>
    %c0_20 = arith.constant 0 : index
    %c0_21 = arith.constant 0 : index
    %c0_22 = arith.constant 0 : index
    %c0_23 = arith.constant 0 : index
    %40 = vector.load %arg19[%c0_20, %c0_21, %c0_22, %c0_23] : memref<1x4x8x8xf32, #tpu.memory_space<vmem>>, vector<1x1x8x8xf32>
    tpu.vector_store %arg19[%c0_20, %c0_21, %c0_22, %c0_23], %39 {strides = array<i32>} : memref<1x4x8x8xf32, #tpu.memory_space<vmem>>, vector<1x1x8x8xf32>,
    %41 = arith.truncf %38 : vector<1x8x8xf32> to vector<1x8x8xbf16>
    "tpu.trace_start"() <{level = 10 : i32, message = "bqk,bkd->bqd"}> : () -> ()
    %cst_24 = arith.constant dense<0.000000e+00> : vector<1x8x8xf32>
    %42 = tpu.matmul %41, %26, %cst_24 {dimension_numbers = #tpu.dot_dimension_numbers<[2], [1], [1], [2], [0, 0, 0, 1, 1, 2], [0], [0]>} : vector<1x8x8xbf16>, vector<1x8x8xbf16>, vector<1x8x8xf32> -> vector<1x8x8xf32>
    "tpu.trace_stop"() : () -> ()
    %43 = vector.extract_strided_slice %9 {offsets = [0, 0, 8], sizes = [1, 8, 8], strides = [1, 1, 1]} : vector<1x8x32xbf16> to vector<1x8x8xbf16>
    %44 = vector.extract_strided_slice %16 {offsets = [0, 0, 8], sizes = [1, 8, 8], strides = [1, 1, 1]} : vector<1x8x32xbf16> to vector<1x8x8xbf16>
    %45 = vector.extract_strided_slice %23 {offsets = [0, 0, 8], sizes = [1, 8, 8], strides = [1, 1, 1]} : vector<1x8x32xbf16> to vector<1x8x8xbf16>
    "tpu.trace_start"() <{level = 10 : i32, message = "bqd,bkd->bqk"}> : () -> ()
    %cst_25 = arith.constant dense<0.000000e+00> : vector<1x8x8xf32>
    %46 = tpu.matmul %43, %44, %cst_25 {dimension_numbers = #tpu.dot_dimension_numbers<[2], [2], [1], [1], [0, 0, 0, 1, 1, 1], [0], [0]>} : vector<1x8x8xbf16>, vector<1x8x8xbf16>, vector<1x8x8xf32> -> vector<1x8x8xf32>
    "tpu.trace_stop"() : () -> ()
    %cst_26 = arith.constant 0.353553385 : f32
    %47 = vector.broadcast %cst_26 : f32 to vector<1x8x8xf32>
    %48 = arith.mulf %46, %47 : vector<1x8x8xf32>
    %cst_27 = arith.constant dense<0xFF800000> : vector<1x8xf32>
    %49 = vector.multi_reduction <maximumf>, %48, %cst_27 [2] : vector<1x8x8xf32> to vector<1x8xf32>
    %50 = vector.shape_cast %49 : vector<1x8xf32> to vector<1x8x1xf32>
    %51 = vector.broadcast %50 : vector<1x8x1xf32> to vector<1x8x8xf32>
    %52 = arith.subf %48, %51 : vector<1x8x8xf32>
    %53 = math.exp %52 : vector<1x8x8xf32>
    %cst_28 = arith.constant dense<0.000000e+00> : vector<1x8xf32>
    %54 = vector.multi_reduction <add>, %53, %cst_28 [2] : vector<1x8x8xf32> to vector<1x8xf32>
    %55 = vector.shape_cast %54 : vector<1x8xf32> to vector<1x8x1xf32>
    %56 = vector.broadcast %55 : vector<1x8x1xf32> to vector<1x8x8xf32>
    %57 = arith.divf %53, %56 : vector<1x8x8xf32>
    %58 = vector.shape_cast %57 : vector<1x8x8xf32> to vector<1x1x8x8xf32>
    %c0_29 = arith.constant 0 : index
    %c1 = arith.constant 1 : index
    %c0_30 = arith.constant 0 : index
    %c0_31 = arith.constant 0 : index
    %59 = vector.load %arg19[%c0_29, %c1, %c0_30, %c0_31] : memref<1x4x8x8xf32, #tpu.memory_space<vmem>>, vector<1x1x8x8xf32>
    tpu.vector_store %arg19[%c0_29, %c1, %c0_30, %c0_31], %58 {strides = array<i32>} : memref<1x4x8x8xf32, #tpu.memory_space<vmem>>, vector<1x1x8x8xf32>,
    %60 = arith.truncf %57 : vector<1x8x8xf32> to vector<1x8x8xbf16>
    "tpu.trace_start"() <{level = 10 : i32, message = "bqk,bkd->bqd"}> : () -> ()
    %cst_32 = arith.constant dense<0.000000e+00> : vector<1x8x8xf32>
    %61 = tpu.matmul %60, %45, %cst_32 {dimension_numbers = #tpu.dot_dimension_numbers<[2], [1], [1], [2], [0, 0, 0, 1, 1, 2], [0], [0]>} : vector<1x8x8xbf16>, vector<1x8x8xbf16>, vector<1x8x8xf32> -> vector<1x8x8xf32>
    "tpu.trace_stop"() : () -> ()
    %62 = vector.extract_strided_slice %9 {offsets = [0, 0, 16], sizes = [1, 8, 8], strides = [1, 1, 1]} : vector<1x8x32xbf16> to vector<1x8x8xbf16>
    %63 = vector.extract_strided_slice %16 {offsets = [0, 0, 16], sizes = [1, 8, 8], strides = [1, 1, 1]} : vector<1x8x32xbf16> to vector<1x8x8xbf16>
    %64 = vector.extract_strided_slice %23 {offsets = [0, 0, 16], sizes = [1, 8, 8], strides = [1, 1, 1]} : vector<1x8x32xbf16> to vector<1x8x8xbf16>
    "tpu.trace_start"() <{level = 10 : i32, message = "bqd,bkd->bqk"}> : () -> ()
    %cst_33 = arith.constant dense<0.000000e+00> : vector<1x8x8xf32>
    %65 = tpu.matmul %62, %63, %cst_33 {dimension_numbers = #tpu.dot_dimension_numbers<[2], [2], [1], [1], [0, 0, 0, 1, 1, 1], [0], [0]>} : vector<1x8x8xbf16>, vector<1x8x8xbf16>, vector<1x8x8xf32> -> vector<1x8x8xf32>
    "tpu.trace_stop"() : () -> ()
    %cst_34 = arith.constant 0.353553385 : f32
    %66 = vector.broadcast %cst_34 : f32 to vector<1x8x8xf32>
    %67 = arith.mulf %65, %66 : vector<1x8x8xf32>
    %cst_35 = arith.constant dense<0xFF800000> : vector<1x8xf32>
    %68 = vector.multi_reduction <maximumf>, %67, %cst_35 [2] : vector<1x8x8xf32> to vector<1x8xf32>
    %69 = vector.shape_cast %68 : vector<1x8xf32> to vector<1x8x1xf32>
    %70 = vector.broadcast %69 : vector<1x8x1xf32> to vector<1x8x8xf32>
    %71 = arith.subf %67, %70 : vector<1x8x8xf32>
    %72 = math.exp %71 : vector<1x8x8xf32>
    %cst_36 = arith.constant dense<0.000000e+00> : vector<1x8xf32>
    %73 = vector.multi_reduction <add>, %72, %cst_36 [2] : vector<1x8x8xf32> to vector<1x8xf32>
    %74 = vector.shape_cast %73 : vector<1x8xf32> to vector<1x8x1xf32>
    %75 = vector.broadcast %74 : vector<1x8x1xf32> to vector<1x8x8xf32>
    %76 = arith.divf %72, %75 : vector<1x8x8xf32>
    %77 = vector.shape_cast %76 : vector<1x8x8xf32> to vector<1x1x8x8xf32>
    %c0_37 = arith.constant 0 : index
    %c2 = arith.constant 2 : index
    %c0_38 = arith.constant 0 : index
    %c0_39 = arith.constant 0 : index
    %78 = vector.load %arg19[%c0_37, %c2, %c0_38, %c0_39] : memref<1x4x8x8xf32, #tpu.memory_space<vmem>>, vector<1x1x8x8xf32>
    tpu.vector_store %arg19[%c0_37, %c2, %c0_38, %c0_39], %77 {strides = array<i32>} : memref<1x4x8x8xf32, #tpu.memory_space<vmem>>, vector<1x1x8x8xf32>,
    %79 = arith.truncf %76 : vector<1x8x8xf32> to vector<1x8x8xbf16>
    "tpu.trace_start"() <{level = 10 : i32, message = "bqk,bkd->bqd"}> : () -> ()
    %cst_40 = arith.constant dense<0.000000e+00> : vector<1x8x8xf32>
    %80 = tpu.matmul %79, %64, %cst_40 {dimension_numbers = #tpu.dot_dimension_numbers<[2], [1], [1], [2], [0, 0, 0, 1, 1, 2], [0], [0]>} : vector<1x8x8xbf16>, vector<1x8x8xbf16>, vector<1x8x8xf32> -> vector<1x8x8xf32>
    "tpu.trace_stop"() : () -> ()
    %81 = vector.extract_strided_slice %9 {offsets = [0, 0, 24], sizes = [1, 8, 8], strides = [1, 1, 1]} : vector<1x8x32xbf16> to vector<1x8x8xbf16>
    %82 = vector.extract_strided_slice %16 {offsets = [0, 0, 24], sizes = [1, 8, 8], strides = [1, 1, 1]} : vector<1x8x32xbf16> to vector<1x8x8xbf16>
    %83 = vector.extract_strided_slice %23 {offsets = [0, 0, 24], sizes = [1, 8, 8], strides = [1, 1, 1]} : vector<1x8x32xbf16> to vector<1x8x8xbf16>
    "tpu.trace_start"() <{level = 10 : i32, message = "bqd,bkd->bqk"}> : () -> ()
    %cst_41 = arith.constant dense<0.000000e+00> : vector<1x8x8xf32>
    %84 = tpu.matmul %81, %82, %cst_41 {dimension_numbers = #tpu.dot_dimension_numbers<[2], [2], [1], [1], [0, 0, 0, 1, 1, 1], [0], [0]>} : vector<1x8x8xbf16>, vector<1x8x8xbf16>, vector<1x8x8xf32> -> vector<1x8x8xf32>
    "tpu.trace_stop"() : () -> ()
    %cst_42 = arith.constant 0.353553385 : f32
    %85 = vector.broadcast %cst_42 : f32 to vector<1x8x8xf32>
    %86 = arith.mulf %84, %85 : vector<1x8x8xf32>
    %cst_43 = arith.constant dense<0xFF800000> : vector<1x8xf32>
    %87 = vector.multi_reduction <maximumf>, %86, %cst_43 [2] : vector<1x8x8xf32> to vector<1x8xf32>
    %88 = vector.shape_cast %87 : vector<1x8xf32> to vector<1x8x1xf32>
    %89 = vector.broadcast %88 : vector<1x8x1xf32> to vector<1x8x8xf32>
    %90 = arith.subf %86, %89 : vector<1x8x8xf32>
    %91 = math.exp %90 : vector<1x8x8xf32>
    %cst_44 = arith.constant dense<0.000000e+00> : vector<1x8xf32>
    %92 = vector.multi_reduction <add>, %91, %cst_44 [2] : vector<1x8x8xf32> to vector<1x8xf32>
    %93 = vector.shape_cast %92 : vector<1x8xf32> to vector<1x8x1xf32>
    %94 = vector.broadcast %93 : vector<1x8x1xf32> to vector<1x8x8xf32>
    %95 = arith.divf %91, %94 : vector<1x8x8xf32>
    %96 = vector.shape_cast %95 : vector<1x8x8xf32> to vector<1x1x8x8xf32>
    %c0_45 = arith.constant 0 : index
    %c3 = arith.constant 3 : index
    %c0_46 = arith.constant 0 : index
    %c0_47 = arith.constant 0 : index
    %97 = vector.load %arg19[%c0_45, %c3, %c0_46, %c0_47] : memref<1x4x8x8xf32, #tpu.memory_space<vmem>>, vector<1x1x8x8xf32>
    tpu.vector_store %arg19[%c0_45, %c3, %c0_46, %c0_47], %96 {strides = array<i32>} : memref<1x4x8x8xf32, #tpu.memory_space<vmem>>, vector<1x1x8x8xf32>,
    %98 = arith.truncf %95 : vector<1x8x8xf32> to vector<1x8x8xbf16>
    "tpu.trace_start"() <{level = 10 : i32, message = "bqk,bkd->bqd"}> : () -> ()
    %cst_48 = arith.constant dense<0.000000e+00> : vector<1x8x8xf32>
    %99 = tpu.matmul %98, %83, %cst_48 {dimension_numbers = #tpu.dot_dimension_numbers<[2], [1], [1], [2], [0, 0, 0, 1, 1, 2], [0], [0]>} : vector<1x8x8xbf16>, vector<1x8x8xbf16>, vector<1x8x8xf32> -> vector<1x8x8xf32>
    "tpu.trace_stop"() : () -> ()
    %100 = tpu.concatenate %42, %61, %80, %99 in 2 : vector<1x8x8xf32>, vector<1x8x8xf32>, vector<1x8x8xf32>, vector<1x8x8xf32> -> vector<1x8x32xf32>
    %101 = vector.shape_cast %100 : vector<1x8x32xf32> to vector<8x32xf32>
    %102 = arith.truncf %101 : vector<8x32xf32> to vector<8x32xbf16>
    %c0_49 = arith.constant 0 : index
    %c0_50 = arith.constant 0 : index
    %103 = vector.load %arg8[%c0_49, %c0_50] : memref<32x32xbf16, #tpu.memory_space<vmem>>, vector<32x32xbf16>
    %cst_51 = arith.constant dense<0.000000e+00> : vector<8x32xf32>
    %104 = tpu.matmul %102, %103, %cst_51 {dimension_numbers = #tpu.dot_dimension_numbers<[1], [0], [0], [1], [0, 0, 1, 1], [], []>} : vector<8x32xbf16>, vector<32x32xbf16>, vector<8x32xf32> -> vector<8x32xf32>
    %c0_52 = arith.constant 0 : index
    %c0_53 = arith.constant 0 : index
    %105 = vector.load %arg9[%c0_52, %c0_53] : memref<1x32xf32, #tpu.memory_space<vmem>>, vector<1x32xf32>
    %106 = vector.broadcast %105 : vector<1x32xf32> to vector<8x32xf32>
    %107 = arith.addf %104, %106 : vector<8x32xf32>
    %108 = arith.addf %107, %1 : vector<8x32xf32>
    %c0_54 = arith.constant 0 : index
    %c0_55 = arith.constant 0 : index
    %109 = vector.load %arg10[%c0_54, %c0_55] : memref<1x32xf32, #tpu.memory_space<vmem>>, vector<1x32xf32>
    %c0_56 = arith.constant 0 : index
    %c0_57 = arith.constant 0 : index
    %110 = vector.load %arg11[%c0_56, %c0_57] : memref<1x32xf32, #tpu.memory_space<vmem>>, vector<1x32xf32>
    %cst_58 = arith.constant dense<0.000000e+00> : vector<8xf32>
    %111 = vector.multi_reduction <add>, %108, %cst_58 [1] : vector<8x32xf32> to vector<8xf32>
    %112 = vector.shape_cast %111 : vector<8xf32> to vector<8x1xf32>
    %cst_59 = arith.constant 3.200000e+01 : f32
    %113 = vector.broadcast %cst_59 : f32 to vector<8x1xf32>
    %114 = arith.divf %112, %113 : vector<8x1xf32>
    %115 = vector.broadcast %114 : vector<8x1xf32> to vector<8x32xf32>
    %116 = arith.subf %108, %115 : vector<8x32xf32>
    %117 = arith.mulf %116, %116 : vector<8x32xf32>
    %cst_60 = arith.constant dense<0.000000e+00> : vector<8xf32>
    %118 = vector.multi_reduction <add>, %117, %cst_60 [1] : vector<8x32xf32> to vector<8xf32>
    %119 = vector.shape_cast %118 : vector<8xf32> to vector<8x1xf32>
    %cst_61 = arith.constant 3.200000e+01 : f32
    %120 = vector.broadcast %cst_61 : f32 to vector<8x1xf32>
    %121 = arith.divf %119, %120 : vector<8x1xf32>
    %122 = vector.broadcast %114 : vector<8x1xf32> to vector<8x32xf32>
    %123 = arith.subf %108, %122 : vector<8x32xf32>
    %cst_62 = arith.constant 9.99999997E-7 : f32
    %124 = vector.broadcast %cst_62 : f32 to vector<8x1xf32>
    %125 = arith.addf %121, %124 : vector<8x1xf32>
    %126 = math.rsqrt %125 : vector<8x1xf32>
    %127 = vector.broadcast %126 : vector<8x1xf32> to vector<8x32xf32>
    %128 = arith.mulf %123, %127 : vector<8x32xf32>
    %129 = vector.broadcast %109 : vector<1x32xf32> to vector<8x32xf32>
    %130 = arith.mulf %128, %129 : vector<8x32xf32>
    %131 = vector.broadcast %110 : vector<1x32xf32> to vector<8x32xf32>
    %132 = arith.addf %130, %131 : vector<8x32xf32>
    %133 = arith.truncf %132 : vector<8x32xf32> to vector<8x32xbf16>
    %c0_63 = arith.constant 0 : index
    %c0_64 = arith.constant 0 : index
    %134 = vector.load %arg12[%c0_63, %c0_64] : memref<32x64xbf16, #tpu.memory_space<vmem>>, vector<32x64xbf16>
    %cst_65 = arith.constant dense<0.000000e+00> : vector<8x64xf32>
    %135 = tpu.matmul %133, %134, %cst_65 {dimension_numbers = #tpu.dot_dimension_numbers<[1], [0], [0], [1], [0, 0, 1, 1], [], []>} : vector<8x32xbf16>, vector<32x64xbf16>, vector<8x64xf32> -> vector<8x64xf32>
    %c0_66 = arith.constant 0 : index
    %c0_67 = arith.constant 0 : index
    %136 = vector.load %arg13[%c0_66, %c0_67] : memref<1x64xf32, #tpu.memory_space<vmem>>, vector<1x64xf32>
    %137 = vector.broadcast %136 : vector<1x64xf32> to vector<8x64xf32>
    %138 = arith.addf %135, %137 : vector<8x64xf32>
    %cst_68 = arith.constant 0.000000e+00 : f32
    %139 = vector.broadcast %cst_68 : f32 to vector<8x64xf32>
    %140 = arith.maximumf %138, %139 : vector<8x64xf32>
    %141 = arith.truncf %140 : vector<8x64xf32> to vector<8x64xbf16>
    %c0_69 = arith.constant 0 : index
    %c0_70 = arith.constant 0 : index
    %142 = vector.load %arg14[%c0_69, %c0_70] : memref<64x32xbf16, #tpu.memory_space<vmem>>, vector<64x32xbf16>
    %cst_71 = arith.constant dense<0.000000e+00> : vector<8x32xf32>
    %143 = tpu.matmul %141, %142, %cst_71 {dimension_numbers = #tpu.dot_dimension_numbers<[1], [0], [0], [1], [0, 0, 1, 1], [], []>} : vector<8x64xbf16>, vector<64x32xbf16>, vector<8x32xf32> -> vector<8x32xf32>
    %c0_72 = arith.constant 0 : index
    %c0_73 = arith.constant 0 : index
    %144 = vector.load %arg15[%c0_72, %c0_73] : memref<1x32xf32, #tpu.memory_space<vmem>>, vector<1x32xf32>
    %145 = vector.broadcast %144 : vector<1x32xf32> to vector<8x32xf32>
    %146 = arith.addf %143, %145 : vector<8x32xf32>
    %147 = arith.addf %146, %132 : vector<8x32xf32>
    %c0_74 = arith.constant 0 : index
    %c0_75 = arith.constant 0 : index
    %148 = vector.load %arg16[%c0_74, %c0_75] : memref<1x32xf32, #tpu.memory_space<vmem>>, vector<1x32xf32>
    %c0_76 = arith.constant 0 : index
    %c0_77 = arith.constant 0 : index
    %149 = vector.load %arg17[%c0_76, %c0_77] : memref<1x32xf32, #tpu.memory_space<vmem>>, vector<1x32xf32>
    %cst_78 = arith.constant dense<0.000000e+00> : vector<8xf32>
    %150 = vector.multi_reduction <add>, %147, %cst_78 [1] : vector<8x32xf32> to vector<8xf32>
    %151 = vector.shape_cast %150 : vector<8xf32> to vector<8x1xf32>
    %cst_79 = arith.constant 3.200000e+01 : f32
    %152 = vector.broadcast %cst_79 : f32 to vector<8x1xf32>
    %153 = arith.divf %151, %152 : vector<8x1xf32>
    %154 = vector.broadcast %153 : vector<8x1xf32> to vector<8x32xf32>
    %155 = arith.subf %147, %154 : vector<8x32xf32>
    %156 = arith.mulf %155, %155 : vector<8x32xf32>
    %cst_80 = arith.constant dense<0.000000e+00> : vector<8xf32>
    %157 = vector.multi_reduction <add>, %156, %cst_80 [1] : vector<8x32xf32> to vector<8xf32>
    %158 = vector.shape_cast %157 : vector<8xf32> to vector<8x1xf32>
    %cst_81 = arith.constant 3.200000e+01 : f32
    %159 = vector.broadcast %cst_81 : f32 to vector<8x1xf32>
    %160 = arith.divf %158, %159 : vector<8x1xf32>
    %161 = vector.broadcast %153 : vector<8x1xf32> to vector<8x32xf32>
    %162 = arith.subf %147, %161 : vector<8x32xf32>
    %cst_82 = arith.constant 9.99999997E-7 : f32
    %163 = vector.broadcast %cst_82 : f32 to vector<8x1xf32>
    %164 = arith.addf %160, %163 : vector<8x1xf32>
    %165 = math.rsqrt %164 : vector<8x1xf32>
    %166 = vector.broadcast %165 : vector<8x1xf32> to vector<8x32xf32>
    %167 = arith.mulf %162, %166 : vector<8x32xf32>
    %168 = vector.broadcast %148 : vector<1x32xf32> to vector<8x32xf32>
    %169 = arith.mulf %167, %168 : vector<8x32xf32>
    %170 = vector.broadcast %149 : vector<1x32xf32> to vector<8x32xf32>
    %171 = arith.addf %169, %170 : vector<8x32xf32>
    %172 = vector.shape_cast %171 : vector<8x32xf32> to vector<1x8x32xf32>
    %c0_83 = arith.constant 0 : index
    %c0_84 = arith.constant 0 : index
    %c0_85 = arith.constant 0 : index
    %173 = vector.load %arg18[%c0_83, %c0_84, %c0_85] : memref<1x8x32xf32, #tpu.memory_space<vmem>>, vector<1x8x32xf32>
    tpu.vector_store %arg18[%c0_83, %c0_84, %c0_85], %172 {strides = array<i32>} : memref<1x8x32xf32, #tpu.memory_space<vmem>>, vector<1x8x32xf32>,
    return
  }
  func.func @transform_0(%arg0: i32) -> (i32, i32, i32) {
    %c0_i32 = arith.constant 0 : i32
    %c0_i32_0 = arith.constant 0 : i32
    %c0_i32_1 = arith.constant 0 : i32
    return %arg0, %c0_i32, %c0_i32_0 : i32, i32, i32
  }
  func.func @transform_1(%arg0: i32) -> (i32, i32) {
    %c0_i32 = arith.constant 0 : i32
    %c0_i32_0 = arith.constant 0 : i32
    %c0_i32_1 = arith.constant 0 : i32
    return %c0_i32, %c0_i32_0 : i32, i32
  }
  func.func @transform_2(%arg0: i32) -> (i32, i32) {
    %c0_i32 = arith.constant 0 : i32
    %c0_i32_0 = arith.constant 0 : i32
    %c0_i32_1 = arith.constant 0 : i32
    return %c0_i32, %c0_i32_0 : i32, i32
  }
  func.func @transform_3(%arg0: i32) -> (i32, i32) {
    %c0_i32 = arith.constant 0 : i32
    %c0_i32_0 = arith.constant 0 : i32
    %c0_i32_1 = arith.constant 0 : i32
    return %c0_i32, %c0_i32_0 : i32, i32
  }
  func.func @transform_4(%arg0: i32) -> (i32, i32) {
    %c0_i32 = arith.constant 0 : i32
    %c0_i32_0 = arith.constant 0 : i32
    %c0_i32_1 = arith.constant 0 : i32
    return %c0_i32, %c0_i32_0 : i32, i32
  }
  func.func @transform_5(%arg0: i32) -> (i32, i32) {
    %c0_i32 = arith.constant 0 : i32
    %c0_i32_0 = arith.constant 0 : i32
    %c0_i32_1 = arith.constant 0 : i32
    return %c0_i32, %c0_i32_0 : i32, i32
  }
  func.func @transform_6(%arg0: i32) -> (i32, i32) {
    %c0_i32 = arith.constant 0 : i32
    %c0_i32_0 = arith.constant 0 : i32
    %c0_i32_1 = arith.constant 0 : i32
    return %c0_i32, %c0_i32_0 : i32, i32
  }
  func.func @transform_7(%arg0: i32) -> (i32, i32) {
    %c0_i32 = arith.constant 0 : i32
    %c0_i32_0 = arith.constant 0 : i32
    %c0_i32_1 = arith.constant 0 : i32
    return %c0_i32, %c0_i32_0 : i32, i32
  }
  func.func @transform_8(%arg0: i32) -> (i32, i32) {
    %c0_i32 = arith.constant 0 : i32
    %c0_i32_0 = arith.constant 0 : i32
    %c0_i32_1 = arith.constant 0 : i32
    return %c0_i32, %c0_i32_0 : i32, i32
  }
  func.func @transform_9(%arg0: i32) -> (i32, i32) {
    %c0_i32 = arith.constant 0 : i32
    %c0_i32_0 = arith.constant 0 : i32
    %c0_i32_1 = arith.constant 0 : i32
    return %c0_i32, %c0_i32_0 : i32, i32
  }
  func.func @transform_10(%arg0: i32) -> (i32, i32) {
    %c0_i32 = arith.constant 0 : i32
    %c0_i32_0 = arith.constant 0 : i32
    %c0_i32_1 = arith.constant 0 : i32
    return %c0_i32, %c0_i32_0 : i32, i32
  }
  func.func @transform_11(%arg0: i32) -> (i32, i32) {
    %c0_i32 = arith.constant 0 : i32
    %c0_i32_0 = arith.constant 0 : i32
    %c0_i32_1 = arith.constant 0 : i32
    return %c0_i32, %c0_i32_0 : i32, i32
  }
  func.func @transform_12(%arg0: i32) -> (i32, i32) {
    %c0_i32 = arith.constant 0 : i32
    %c0_i32_0 = arith.constant 0 : i32
    %c0_i32_1 = arith.constant 0 : i32
    return %c0_i32, %c0_i32_0 : i32, i32
  }
  func.func @transform_13(%arg0: i32) -> (i32, i32) {
    %c0_i32 = arith.constant 0 : i32
    %c0_i32_0 = arith.constant 0 : i32
    %c0_i32_1 = arith.constant 0 : i32
    return %c0_i32, %c0_i32_0 : i32, i32
  }
  func.func @transform_14(%arg0: i32) -> (i32, i32) {
    %c0_i32 = arith.constant 0 : i32
    %c0_i32_0 = arith.constant 0 : i32
    %c0_i32_1 = arith.constant 0 : i32
    return %c0_i32, %c0_i32_0 : i32, i32
  }
  func.func @transform_15(%arg0: i32) -> (i32, i32) {
    %c0_i32 = arith.constant 0 : i32
    %c0_i32_0 = arith.constant 0 : i32
    %c0_i32_1 = arith.constant 0 : i32
    return %c0_i32, %c0_i32_0 : i32, i32
  }
  func.func @transform_16(%arg0: i32) -> (i32, i32) {
    %c0_i32 = arith.constant 0 : i32
    %c0_i32_0 = arith.constant 0 : i32
    %c0_i32_1 = arith.constant 0 : i32
    return %c0_i32, %c0_i32_0 : i32, i32
  }
  func.func @transform_17(%arg0: i32) -> (i32, i32, i32) {
    %c0_i32 = arith.constant 0 : i32
    %c0_i32_0 = arith.constant 0 : i32
    %c0_i32_1 = arith.constant 0 : i32
    return %arg0, %c0_i32, %c0_i32_0 : i32, i32, i32
  }
  func.func @transform_18(%arg0: i32) -> (i32, i32, i32, i32) {
    %c0_i32 = arith.constant 0 : i32
    %c0_i32_0 = arith.constant 0 : i32
    %c0_i32_1 = arith.constant 0 : i32
    %c0_i32_2 = arith.constant 0 : i32
    return %arg0, %c0_i32, %c0_i32_0, %c0_i32_1 : i32, i32, i32, i32
  }
}

</mosaic_0001>

<llo_original>
// kernel: tpu_custom_call.1
$region0: #{tpu_custom_call.1}
  #allocation0 [shape = 'u32[]', space=smem, size = 0x4, offset = 0x4, fixed_abs, tag = 'smem constant byte address 0x4 - core index']
  #allocation1 [shape = 'u32[144,128]{1,0:T(1,128)}', space=vmem, size = 0x12000, scoped, tag = 'internal scratch']
  %s0 = inlined_call_operand.hbm [shape: f32[2,8,32], index: 0, kind: input, shape index: {}]
  %s1 = inlined_call_operand.hbm [shape: bf16[32,32], index: 1, kind: input, shape index: {}]
  %s2 = inlined_call_operand.hbm [shape: f32[1,32], index: 2, kind: input, shape index: {}]
  %s3 = inlined_call_operand.hbm [shape: bf16[32,32], index: 3, kind: input, shape index: {}]
  %s4 = inlined_call_operand.hbm [shape: f32[1,32], index: 4, kind: input, shape index: {}]
  %s5 = inlined_call_operand.hbm [shape: bf16[32,32], index: 5, kind: input, shape index: {}]
  %s6 = inlined_call_operand.hbm [shape: f32[1,32], index: 6, kind: input, shape index: {}]
  %s7 = inlined_call_operand.hbm [shape: bf16[32,32], index: 7, kind: input, shape index: {}]
  %s8 = inlined_call_operand.hbm [shape: f32[1,32], index: 8, kind: input, shape index: {}]
  %s9 = inlined_call_operand.hbm [shape: f32[1,32], index: 9, kind: input, shape index: {}]
  %s10 = inlined_call_operand.hbm [shape: f32[1,32], index: 10, kind: input, shape index: {}]
  %s11 = inlined_call_operand.hbm [shape: bf16[32,64], index: 11, kind: input, shape index: {}]
  %s12 = inlined_call_operand.hbm [shape: f32[1,64], index: 12, kind: input, shape index: {}]
  %s13 = inlined_call_operand.hbm [shape: bf16[64,32], index: 13, kind: input, shape index: {}]
  %s14 = inlined_call_operand.hbm [shape: f32[1,32], index: 14, kind: input, shape index: {}]
  %s15 = inlined_call_operand.hbm [shape: f32[1,32], index: 15, kind: input, shape index: {}]
  %s16 = inlined_call_operand.hbm [shape: f32[1,32], index: 16, kind: input, shape index: {}]
  %s17 = inlined_call_operand.hbm [shape: f32[2,8,32], index: 17, kind: output, shape index: {0}]
  %s18 = inlined_call_operand.hbm [shape: f32[2,4,8,8], index: 18, kind: output, shape index: {1}]
  %19 = xla_tuple %s17, %s18
  %s20 = sld [smem:[#allocation0]]
  $region177: #{tpu_custom_call.1} parent=0
    _
  %s22 = ssub.s32 1, %s20
  %s23 = scalar_select 0, %s22, %s20
  $region1: #{tpu_custom_call.1} parent=0
    #allocation2 [shape = 'u8[8192]{0}', space=vmem, size = 0x2000, scoped, tag = 'input window, operand 0']
    #allocation3 [shape = 's32[2]{0}', space=sflag, size = 0x8, scoped, tag = 'scoped memory for tpu_custom_call.1']
    #allocation4 [shape = 's32[2]{0}', space=sflag, size = 0x8, scoped, tag = 'scoped memory for tpu_custom_call.1']
    #allocation5 [shape = 'u8[8192]{0}', space=vmem, size = 0x2000, scoped, tag = 'input window, operand 1, single buffered']
    #allocation6 [shape = 's32[1]{0}', space=sflag, size = 0x4, scoped, tag = 'scoped memory for tpu_custom_call.1']
    #allocation7 [shape = 'u8[512]{0}', space=vmem, size = 0x400, scoped, tag = 'input window, operand 2, single buffered']
    #allocation8 [shape = 'u8[8192]{0}', space=vmem, size = 0x2000, scoped, tag = 'input window, operand 3, single buffered']
    #allocation9 [shape = 's32[1]{0}', space=sflag, size = 0x4, scoped, tag = 'scoped memory for tpu_custom_call.1']
    #allocation10 [shape = 'u8[512]{0}', space=vmem, size = 0x400, scoped, tag = 'input window, operand 4, single buffered']
    #allocation11 [shape = 'u8[8192]{0}', space=vmem, size = 0x2000, scoped, tag = 'input window, operand 5, single buffered']
    #allocation12 [shape = 's32[1]{0}', space=sflag, size = 0x4, scoped, tag = 'scoped memory for tpu_custom_call.1']
    #allocation13 [shape = 'u8[512]{0}', space=vmem, size = 0x400, scoped, tag = 'input window, operand 6, single buffered']
    #allocation14 [shape = 'u8[8192]{0}', space=vmem, size = 0x2000, scoped, tag = 'input window, operand 7, single buffered']
    #allocation15 [shape = 's32[1]{0}', space=sflag, size = 0x4, scoped, tag = 'scoped memory for tpu_custom_call.1']
    #allocation16 [shape = 'u8[512]{0}', space=vmem, size = 0x400, scoped, tag = 'input window, operand 8, single buffered']
    #allocation17 [shape = 'u8[512]{0}', space=vmem, size = 0x400, scoped, tag = 'input window, operand 9, single buffered']
    #allocation18 [shape = 's32[1]{0}', space=sflag, size = 0x4, scoped, tag = 'scoped memory for tpu_custom_call.1']
    #allocation19 [shape = 'u8[512]{0}', space=vmem, size = 0x400, scoped, tag = 'input window, operand 10, single buffered']
    #allocation20 [shape = 'u8[8192]{0}', space=vmem, size = 0x2000, scoped, tag = 'input window, operand 11, single buffered']
    #allocation21 [shape = 's32[1]{0}', space=sflag, size = 0x4, scoped, tag = 'scoped memory for tpu_custom_call.1']
    #allocation22 [shape = 'u8[512]{0}', space=vmem, size = 0x400, scoped, tag = 'input window, operand 12, single buffered']
    #allocation23 [shape = 'u8[16384]{0}', space=vmem, size = 0x4000, scoped, tag = 'input window, operand 13, single buffered']
    #allocation24 [shape = 's32[1]{0}', space=sflag, size = 0x4, scoped, tag = 'scoped memory for tpu_custom_call.1']
    #allocation25 [shape = 'u8[512]{0}', space=vmem, size = 0x400, scoped, tag = 'input window, operand 14, single buffered']
    #allocation26 [shape = 'u8[512]{0}', space=vmem, size = 0x400, scoped, tag = 'input window, operand 15, single buffered']
    #allocation27 [shape = 's32[1]{0}', space=sflag, size = 0x4, scoped, tag = 'scoped memory for tpu_custom_call.1']
    #allocation28 [shape = 'u8[512]{0}', space=vmem, size = 0x400, scoped, tag = 'input window, operand 16, single buffered']
    #allocation29 [shape = 'u8[8192]{0}', space=vmem, size = 0x2000, scoped, tag = 'output window, operand 0']
    #allocation30 [shape = 'u8[32768]{0}', space=vmem, size = 0x8000, scoped, tag = 'output window, operand 1']
    #allocation31 [shape = 's32[2]{0}', space=sflag, size = 0x8, scoped, tag = 'scoped memory for tpu_custom_call.1']
    %24 = vsyncpa [#allocation3], 0
    %s25 = scalar_lea.sflag [#allocation3], 1
    %26 = vsyncpa %s25, 0
    %27 = vsyncpa [#allocation6], 0
    %28 = vsyncpa [#allocation9], 0
    %29 = vsyncpa [#allocation12], 0
    %30 = vsyncpa [#allocation15], 0
    %31 = vsyncpa [#allocation18], 0
    %32 = vsyncpa [#allocation21], 0
    %33 = vsyncpa [#allocation24], 0
    %34 = vsyncpa [#allocation27], 0
    %35 = vsyncpa [#allocation4], 0
    %s36 = scalar_lea.sflag [#allocation4], 1
    %37 = vsyncpa %s36, 0
    %38 = vsyncpa [#allocation31], 0
    %s39 = scalar_lea.sflag [#allocation31], 1
    %40 = vsyncpa %s39, 0
    loop: start=0, step=1, limit=4
    $region2: #{tpu_custom_call.1} parent=1 // loop_pre_header
      _
    $region3: #{tpu_custom_call.1} parent=1 // loop_header
      %s42 = sphi 0, %s46
      %p43 = scmp.ge.s32.totalorder %s42, 4
      %s52 = sphi 0, %s54
      %s55 = sphi 0, %s52
      %s56 = sphi 0, %s55
      %s72 = sphi 0, %s56
      %s76 = sphi 0, %s76
      %s78 = sphi 0, %s76
      %s79 = sphi 0, %s78
      %s93 = sphi 0, %s79
      %s97 = sphi 0, %s97
      %s99 = sphi 0, %s97
      %s100 = sphi 0, %s99
      %s114 = sphi 0, %s100
      %s118 = sphi 0, %s118
      %s120 = sphi 0, %s118
      %s121 = sphi 0, %s120
      %s135 = sphi 0, %s121
      %s139 = sphi 0, %s139
      %s141 = sphi 0, %s139
      %s142 = sphi 0, %s141
      %s156 = sphi 0, %s142
      %s160 = sphi 0, %s160
      %s162 = sphi 0, %s160
      %s163 = sphi 0, %s162
      %s177 = sphi 0, %s163
      %s181 = sphi 0, %s181
      %s183 = sphi 0, %s181
      %s184 = sphi 0, %s183
      %s198 = sphi 0, %s184
      %s202 = sphi 0, %s202
      %s204 = sphi 0, %s202
      %s205 = sphi 0, %s204
      %s219 = sphi 0, %s205
      %s223 = sphi 0, %s223
      %s225 = sphi 0, %s223
      %s226 = sphi 0, %s225
      %s240 = sphi 0, %s226
      %s244 = sphi 0, %s244
      %s246 = sphi 0, %s244
      %s247 = sphi 0, %s246
      %s261 = sphi 0, %s247
      %s265 = sphi 0, %s265
      %s267 = sphi 0, %s265
      %s268 = sphi 0, %s267
      %s282 = sphi 0, %s268
      %s286 = sphi 0, %s286
      %s288 = sphi 0, %s286
      %s289 = sphi 0, %s288
      %s303 = sphi 0, %s289
      %s307 = sphi 0, %s307
      %s309 = sphi 0, %s307
      %s310 = sphi 0, %s309
      %s324 = sphi 0, %s310
      %s328 = sphi 0, %s328
      %s330 = sphi 0, %s328
      %s331 = sphi 0, %s330
      %s345 = sphi 0, %s331
      %s349 = sphi 0, %s349
      %s351 = sphi 0, %s349
      %s352 = sphi 0, %s351
      %s366 = sphi 0, %s352
      %s370 = sphi 0, %s370
      %s372 = sphi 0, %s370
      %s373 = sphi 0, %s372
      %s387 = sphi 0, %s373
      %s391 = sphi 0, %s391
      %s393 = sphi 0, %s391
      %s394 = sphi 0, %s393
      %s408 = sphi 0, %s394
      %s414 = sphi 0, %s416
      %s417 = sphi 0, %s414
      %s418 = sphi 0, %s417
      %s434 = sphi 0, %s418
      %s440 = sphi 0, %s442
      %s443 = sphi 0, %s440
      %s444 = sphi 0, %s443
      %s460 = sphi 0, %s444
    $region4: #{tpu_custom_call.1} parent=1 // loop_header_branch
      %45 = sbr.rel (%p43) target = $region8
    $region5: #{tpu_custom_call.1} parent=1 // loop_body
      %s47 = ssub.s32 %s42, 1
      %s48 = ssub.s32 %s42, 2
      %s49 = sadd.s32 %s42, 1
      %s50 = ssub.s32 %s42, %s49
      %p51 = scmp.eq.s32.totalorder %s50, 0
      %s53 = sadd.s32 %s52, 1
      %s54 = scalar_select %p51, %s52, %s53
      %p57 = pneg %p51
      %p58 = scmp.eq.s32.totalorder %s42, 1
      %p59 = por %p57, %p58
      %p60 = scmp.ne.s32.totalorder %s52, %s55
      %p61 = scmp.eq.s32.totalorder %s42, 0
      %p62 = por %p60, %p61
      %p63 = scmp.ne.s32.totalorder %s52, %s55
      %p64 = scmp.eq.s32.totalorder %s47, 1
      %p65 = por %p63, %p64
      %p66 = scmp.ne.s32.totalorder %s55, %s56
      %p67 = scmp.eq.s32.totalorder %s47, 0
      %p68 = por %p66, %p67
      %p69 = scmp.ne.s32.totalorder %s55, %s56
      %p70 = scmp.eq.s32.totalorder %s48, 1
      %p71 = por %p69, %p70
      %p73 = scmp.ne.s32.totalorder %s56, %s72
      %p74 = scmp.eq.s32.totalorder %s48, 0
      %p75 = por %p73, %p74
      %s77 = sadd.s32 %s76, 1
      %p80 = scmp.eq.s32.totalorder %s42, 1
      %p81 = scmp.ne.s32.totalorder %s76, %s78
      %p82 = scmp.eq.s32.totalorder %s42, 0
      %p83 = por %p81, %p82
      %p84 = scmp.ne.s32.totalorder %s76, %s78
      %p85 = scmp.eq.s32.totalorder %s47, 1
      %p86 = por %p84, %p85
      %p87 = scmp.ne.s32.totalorder %s78, %s79
      %p88 = scmp.eq.s32.totalorder %s47, 0
      %p89 = por %p87, %p88
      %p90 = scmp.ne.s32.totalorder %s78, %s79
      %p91 = scmp.eq.s32.totalorder %s48, 1
      %p92 = por %p90, %p91
      %p94 = scmp.ne.s32.totalorder %s79, %s93
      %p95 = scmp.eq.s32.totalorder %s48, 0
      %p96 = por %p94, %p95
      %s98 = sadd.s32 %s97, 1
      %p101 = scmp.eq.s32.totalorder %s42, 1
      %p102 = scmp.ne.s32.totalorder %s97, %s99
      %p103 = scmp.eq.s32.totalorder %s42, 0
      %p104 = por %p102, %p103
      %p105 = scmp.ne.s32.totalorder %s97, %s99
      %p106 = scmp.eq.s32.totalorder %s47, 1
      %p107 = por %p105, %p106
      %p108 = scmp.ne.s32.totalorder %s99, %s100
      %p109 = scmp.eq.s32.totalorder %s47, 0
      %p110 = por %p108, %p109
      %p111 = scmp.ne.s32.totalorder %s99, %s100
      %p112 = scmp.eq.s32.totalorder %s48, 1
      %p113 = por %p111, %p112
      %p115 = scmp.ne.s32.totalorder %s100, %s114
      %p116 = scmp.eq.s32.totalorder %s48, 0
      %p117 = por %p115, %p116
      %s119 = sadd.s32 %s118, 1
      %p122 = scmp.eq.s32.totalorder %s42, 1
      %p123 = scmp.ne.s32.totalorder %s118, %s120
      %p124 = scmp.eq.s32.totalorder %s42, 0
      %p125 = por %p123, %p124
      %p126 = scmp.ne.s32.totalorder %s118, %s120
      %p127 = scmp.eq.s32.totalorder %s47, 1
      %p128 = por %p126, %p127
      %p129 = scmp.ne.s32.totalorder %s120, %s121
      %p130 = scmp.eq.s32.totalorder %s47, 0
      %p131 = por %p129, %p130
      %p132 = scmp.ne.s32.totalorder %s120, %s121
      %p133 = scmp.eq.s32.totalorder %s48, 1
      %p134 = por %p132, %p133
      %p136 = scmp.ne.s32.totalorder %s121, %s135
      %p137 = scmp.eq.s32.totalorder %s48, 0
      %p138 = por %p136, %p137
      %s140 = sadd.s32 %s139, 1
      %p143 = scmp.eq.s32.totalorder %s42, 1
      %p144 = scmp.ne.s32.totalorder %s139, %s141
      %p145 = scmp.eq.s32.totalorder %s42, 0
      %p146 = por %p144, %p145
      %p147 = scmp.ne.s32.totalorder %s139, %s141
      %p148 = scmp.eq.s32.totalorder %s47, 1
      %p149 = por %p147, %p148
      %p150 = scmp.ne.s32.totalorder %s141, %s142
      %p151 = scmp.eq.s32.totalorder %s47, 0
      %p152 = por %p150, %p151
      %p153 = scmp.ne.s32.totalorder %s141, %s142
      %p154 = scmp.eq.s32.totalorder %s48, 1
      %p155 = por %p153, %p154
      %p157 = scmp.ne.s32.totalorder %s142, %s156
      %p158 = scmp.eq.s32.totalorder %s48, 0
      %p159 = por %p157, %p158
      %s161 = sadd.s32 %s160, 1
      %p164 = scmp.eq.s32.totalorder %s42, 1
      %p165 = scmp.ne.s32.totalorder %s160, %s162
      %p166 = scmp.eq.s32.totalorder %s42, 0
      %p167 = por %p165, %p166
      %p168 = scmp.ne.s32.totalorder %s160, %s162
      %p169 = scmp.eq.s32.totalorder %s47, 1
      %p170 = por %p168, %p169
      %p171 = scmp.ne.s32.totalorder %s162, %s163
      %p172 = scmp.eq.s32.totalorder %s47, 0
      %p173 = por %p171, %p172
      %p174 = scmp.ne.s32.totalorder %s162, %s163
      %p175 = scmp.eq.s32.totalorder %s48, 1
      %p176 = por %p174, %p175
      %p178 = scmp.ne.s32.totalorder %s163, %s177
      %p179 = scmp.eq.s32.totalorder %s48, 0
      %p180 = por %p178, %p179
      %s182 = sadd.s32 %s181, 1
      %p185 = scmp.eq.s32.totalorder %s42, 1
      %p186 = scmp.ne.s32.totalorder %s181, %s183
      %p187 = scmp.eq.s32.totalorder %s42, 0
      %p188 = por %p186, %p187
      %p189 = scmp.ne.s32.totalorder %s181, %s183
      %p190 = scmp.eq.s32.totalorder %s47, 1
      %p191 = por %p189, %p190
      %p192 = scmp.ne.s32.totalorder %s183, %s184
      %p193 = scmp.eq.s32.totalorder %s47, 0
      %p194 = por %p192, %p193
      %p195 = scmp.ne.s32.totalorder %s183, %s184
      %p196 = scmp.eq.s32.totalorder %s48, 1
      %p197 = por %p195, %p196
      %p199 = scmp.ne.s32.totalorder %s184, %s198
      %p200 = scmp.eq.s32.totalorder %s48, 0
      %p201 = por %p199, %p200
      %s203 = sadd.s32 %s202, 1
      %p206 = scmp.eq.s32.totalorder %s42, 1
      %p207 = scmp.ne.s32.totalorder %s202, %s204
      %p208 = scmp.eq.s32.totalorder %s42, 0
      %p209 = por %p207, %p208
      %p210 = scmp.ne.s32.totalorder %s202, %s204
      %p211 = scmp.eq.s32.totalorder %s47, 1
      %p212 = por %p210, %p211
      %p213 = scmp.ne.s32.totalorder %s204, %s205
      %p214 = scmp.eq.s32.totalorder %s47, 0
      %p215 = por %p213, %p214
      %p216 = scmp.ne.s32.totalorder %s204, %s205
      %p217 = scmp.eq.s32.totalorder %s48, 1
      %p218 = por %p216, %p217
      %p220 = scmp.ne.s32.totalorder %s205, %s219
      %p221 = scmp.eq.s32.totalorder %s48, 0
      %p222 = por %p220, %p221
      %s224 = sadd.s32 %s223, 1
      %p227 = scmp.eq.s32.totalorder %s42, 1
      %p228 = scmp.ne.s32.totalorder %s223, %s225
      %p229 = scmp.eq.s32.totalorder %s42, 0
      %p230 = por %p228, %p229
      %p231 = scmp.ne.s32.totalorder %s223, %s225
      %p232 = scmp.eq.s32.totalorder %s47, 1
      %p233 = por %p231, %p232
      %p234 = scmp.ne.s32.totalorder %s225, %s226
      %p235 = scmp.eq.s32.totalorder %s47, 0
      %p236 = por %p234, %p235
      %p237 = scmp.ne.s32.totalorder %s225, %s226
      %p238 = scmp.eq.s32.totalorder %s48, 1
      %p239 = por %p237, %p238
      %p241 = scmp.ne.s32.totalorder %s226, %s240
      %p242 = scmp.eq.s32.totalorder %s48, 0
      %p243 = por %p241, %p242
      %s245 = sadd.s32 %s244, 1
      %p248 = scmp.eq.s32.totalorder %s42, 1
      %p249 = scmp.ne.s32.totalorder %s244, %s246
      %p250 = scmp.eq.s32.totalorder %s42, 0
      %p251 = por %p249, %p250
      %p252 = scmp.ne.s32.totalorder %s244, %s246
      %p253 = scmp.eq.s32.totalorder %s47, 1
      %p254 = por %p252, %p253
      %p255 = scmp.ne.s32.totalorder %s246, %s247
      %p256 = scmp.eq.s32.totalorder %s47, 0
      %p257 = por %p255, %p256
      %p258 = scmp.ne.s32.totalorder %s246, %s247
      %p259 = scmp.eq.s32.totalorder %s48, 1
      %p260 = por %p258, %p259
      %p262 = scmp.ne.s32.totalorder %s247, %s261
      %p263 = scmp.eq.s32.totalorder %s48, 0
      %p264 = por %p262, %p263
      %s266 = sadd.s32 %s265, 1
      %p269 = scmp.eq.s32.totalorder %s42, 1
      %p270 = scmp.ne.s32.totalorder %s265, %s267
      %p271 = scmp.eq.s32.totalorder %s42, 0
      %p272 = por %p270, %p271
      %p273 = scmp.ne.s32.totalorder %s265, %s267
      %p274 = scmp.eq.s32.totalorder %s47, 1
      %p275 = por %p273, %p274
      %p276 = scmp.ne.s32.totalorder %s267, %s268
      %p277 = scmp.eq.s32.totalorder %s47, 0
      %p278 = por %p276, %p277
      %p279 = scmp.ne.s32.totalorder %s267, %s268
      %p280 = scmp.eq.s32.totalorder %s48, 1
      %p281 = por %p279, %p280
      %p283 = scmp.ne.s32.totalorder %s268, %s282
      %p284 = scmp.eq.s32.totalorder %s48, 0
      %p285 = por %p283, %p284
      %s287 = sadd.s32 %s286, 1
      %p290 = scmp.eq.s32.totalorder %s42, 1
      %p291 = scmp.ne.s32.totalorder %s286, %s288
      %p292 = scmp.eq.s32.totalorder %s42, 0
      %p293 = por %p291, %p292
      %p294 = scmp.ne.s32.totalorder %s286, %s288
      %p295 = scmp.eq.s32.totalorder %s47, 1
      %p296 = por %p294, %p295
      %p297 = scmp.ne.s32.totalorder %s288, %s289
      %p298 = scmp.eq.s32.totalorder %s47, 0
      %p299 = por %p297, %p298
      %p300 = scmp.ne.s32.totalorder %s288, %s289
      %p301 = scmp.eq.s32.totalorder %s48, 1
      %p302 = por %p300, %p301
      %p304 = scmp.ne.s32.totalorder %s289, %s303
      %p305 = scmp.eq.s32.totalorder %s48, 0
      %p306 = por %p304, %p305
      %s308 = sadd.s32 %s307, 1
      %p311 = scmp.eq.s32.totalorder %s42, 1
      %p312 = scmp.ne.s32.totalorder %s307, %s309
      %p313 = scmp.eq.s32.totalorder %s42, 0
      %p314 = por %p312, %p313
      %p315 = scmp.ne.s32.totalorder %s307, %s309
      %p316 = scmp.eq.s32.totalorder %s47, 1
      %p317 = por %p315, %p316
      %p318 = scmp.ne.s32.totalorder %s309, %s310
      %p319 = scmp.eq.s32.totalorder %s47, 0
      %p320 = por %p318, %p319
      %p321 = scmp.ne.s32.totalorder %s309, %s310
      %p322 = scmp.eq.s32.totalorder %s48, 1
      %p323 = por %p321, %p322
      %p325 = scmp.ne.s32.totalorder %s310, %s324
      %p326 = scmp.eq.s32.totalorder %s48, 0
      %p327 = por %p325, %p326
      %s329 = sadd.s32 %s328, 1
      %p332 = scmp.eq.s32.totalorder %s42, 1
      %p333 = scmp.ne.s32.totalorder %s328, %s330
      %p334 = scmp.eq.s32.totalorder %s42, 0
      %p335 = por %p333, %p334
      %p336 = scmp.ne.s32.totalorder %s328, %s330
      %p337 = scmp.eq.s32.totalorder %s47, 1
      %p338 = por %p336, %p337
      %p339 = scmp.ne.s32.totalorder %s330, %s331
      %p340 = scmp.eq.s32.totalorder %s47, 0
      %p341 = por %p339, %p340
      %p342 = scmp.ne.s32.totalorder %s330, %s331
      %p343 = scmp.eq.s32.totalorder %s48, 1
      %p344 = por %p342, %p343
      %p346 = scmp.ne.s32.totalorder %s331, %s345
      %p347 = scmp.eq.s32.totalorder %s48, 0
      %p348 = por %p346, %p347
      %s350 = sadd.s32 %s349, 1
      %p353 = scmp.eq.s32.totalorder %s42, 1
      %p354 = scmp.ne.s32.totalorder %s349, %s351
      %p355 = scmp.eq.s32.totalorder %s42, 0
      %p356 = por %p354, %p355
      %p357 = scmp.ne.s32.totalorder %s349, %s351
      %p358 = scmp.eq.s32.totalorder %s47, 1
      %p359 = por %p357, %p358
      %p360 = scmp.ne.s32.totalorder %s351, %s352
      %p361 = scmp.eq.s32.totalorder %s47, 0
      %p362 = por %p360, %p361
      %p363 = scmp.ne.s32.totalorder %s351, %s352
      %p364 = scmp.eq.s32.totalorder %s48, 1
      %p365 = por %p363, %p364
      %p367 = scmp.ne.s32.totalorder %s352, %s366
      %p368 = scmp.eq.s32.totalorder %s48, 0
      %p369 = por %p367, %p368
      %s371 = sadd.s32 %s370, 1
      %p374 = scmp.eq.s32.totalorder %s42, 1
      %p375 = scmp.ne.s32.totalorder %s370, %s372
      %p376 = scmp.eq.s32.totalorder %s42, 0
      %p377 = por %p375, %p376
      %p378 = scmp.ne.s32.totalorder %s370, %s372
      %p379 = scmp.eq.s32.totalorder %s47, 1
      %p380 = por %p378, %p379
      %p381 = scmp.ne.s32.totalorder %s372, %s373
      %p382 = scmp.eq.s32.totalorder %s47, 0
      %p383 = por %p381, %p382
      %p384 = scmp.ne.s32.totalorder %s372, %s373
      %p385 = scmp.eq.s32.totalorder %s48, 1
      %p386 = por %p384, %p385
      %p388 = scmp.ne.s32.totalorder %s373, %s387
      %p389 = scmp.eq.s32.totalorder %s48, 0
      %p390 = por %p388, %p389
      %s392 = sadd.s32 %s391, 1
      %p395 = scmp.eq.s32.totalorder %s42, 1
      %p396 = scmp.ne.s32.totalorder %s391, %s393
      %p397 = scmp.eq.s32.totalorder %s42, 0
      %p398 = por %p396, %p397
      %p399 = scmp.ne.s32.totalorder %s391, %s393
      %p400 = scmp.eq.s32.totalorder %s47, 1
      %p401 = por %p399, %p400
      %p402 = scmp.ne.s32.totalorder %s393, %s394
      %p403 = scmp.eq.s32.totalorder %s47, 0
      %p404 = por %p402, %p403
      %p405 = scmp.ne.s32.totalorder %s393, %s394
      %p406 = scmp.eq.s32.totalorder %s48, 1
      %p407 = por %p405, %p406
      %p409 = scmp.ne.s32.totalorder %s394, %s408
      %p410 = scmp.eq.s32.totalorder %s48, 0
      %p411 = por %p409, %p410
      %s412 = ssub.s32 %s42, %s49
      %p413 = scmp.eq.s32.totalorder %s412, 0
      %s415 = sadd.s32 %s414, 1
      %s416 = scalar_select %p413, %s414, %s415
      %p419 = pneg %p413
      %p420 = scmp.eq.s32.totalorder %s42, 1
      %p421 = por %p419, %p420
      %p422 = scmp.ne.s32.totalorder %s414, %s417
      %p423 = scmp.eq.s32.totalorder %s42, 0
      %p424 = por %p422, %p423
      %p425 = scmp.ne.s32.totalorder %s414, %s417
      %p426 = scmp.eq.s32.totalorder %s47, 1
      %p427 = por %p425, %p426
      %p428 = scmp.ne.s32.totalorder %s417, %s418
      %p429 = scmp.eq.s32.totalorder %s47, 0
      %p430 = por %p428, %p429
      %p431 = scmp.ne.s32.totalorder %s417, %s418
      %p432 = scmp.eq.s32.totalorder %s48, 1
      %p433 = por %p431, %p432
      %p435 = scmp.ne.s32.totalorder %s418, %s434
      %p436 = scmp.eq.s32.totalorder %s48, 0
      %p437 = por %p435, %p436
      %s438 = ssub.s32 %s42, %s49
      %p439 = scmp.eq.s32.totalorder %s438, 0
      %s441 = sadd.s32 %s440, 1
      %s442 = scalar_select %p439, %s440, %s441
      %p445 = pneg %p439
      %p446 = scmp.eq.s32.totalorder %s42, 1
      %p447 = por %p445, %p446
      %p448 = scmp.ne.s32.totalorder %s440, %s443
      %p449 = scmp.eq.s32.totalorder %s42, 0
      %p450 = por %p448, %p449
      %p451 = scmp.ne.s32.totalorder %s440, %s443
      %p452 = scmp.eq.s32.totalorder %s47, 1
      %p453 = por %p451, %p452
      %p454 = scmp.ne.s32.totalorder %s443, %s444
      %p455 = scmp.eq.s32.totalorder %s47, 0
      %p456 = por %p454, %p455
      %p457 = scmp.ne.s32.totalorder %s443, %s444
      %p458 = scmp.eq.s32.totalorder %s48, 1
      %p459 = por %p457, %p458
      %p461 = scmp.ne.s32.totalorder %s444, %s460
      %p462 = scmp.eq.s32.totalorder %s48, 0
      %p463 = por %p461, %p462
      %p464 = scmp.le.s32.totalorder 1, %s42
      %p465 = scmp.lt.s32.totalorder %s42, 3
      %p466 = pnand %p464, %p465
      %p467 = pneg %p466
      // Predicated region
      $region9: #{tpu_custom_call.1} parent=5 // pred_check
        _
      $region10: #{tpu_custom_call.1} parent=5 // pred_check_branch
        %469 = sbr.rel (%p466) target = $region12
      $region11: #{tpu_custom_call.1} parent=5 // pred_region
        %s470 = ssub.s32 %s42, 1
        // Predicated region
        $region13: #{tpu_custom_call.1} parent=11 // pred_check
          %p471 = pneg %p89
        $region14: #{tpu_custom_call.1} parent=11 // pred_check_branch
          %473 = sbr.rel (%p471) target = $region16
        $region15: #{tpu_custom_call.1} parent=11 // pred_region
          %s475 = ssub.s32 256, 256
          %476 = vsyncadd [#allocation6], %s475
          %s477 = sshll.u32 [#allocation5], 4
          %s478 = int_to_ptr.vmem [resolvable:$true] %s477
          %483 = dma.hbm_to_vmem [thread:$0]  %s1, 256, %s478, [#allocation6], 64, 64, 4
        $region16: #{tpu_custom_call.1} parent=11 // pred_fallthru
          _
        // Predicated region
        $region17: #{tpu_custom_call.1} parent=11 // pred_check
          %p484 = pneg %p110
        $region18: #{tpu_custom_call.1} parent=11 // pred_check_branch
          %486 = sbr.rel (%p484) target = $region20
        $region19: #{tpu_custom_call.1} parent=11 // pred_region
          %s488 = ssub.s32 16, 16
          %489 = vsyncadd [#allocation6], %s488
          %s491 = sshll.u32 [#allocation7], 4
          %s492 = int_to_ptr.vmem [resolvable:$true] %s491
          %494 = dma.hbm_to_vmem [thread:$0]  %s2, 16, %s492, [#allocation6]
        $region20: #{tpu_custom_call.1} parent=11 // pred_fallthru
          _
        // Predicated region
        $region21: #{tpu_custom_call.1} parent=11 // pred_check
          %p495 = pneg %p131
        $region22: #{tpu_custom_call.1} parent=11 // pred_check_branch
          %497 = sbr.rel (%p495) target = $region24
        $region23: #{tpu_custom_call.1} parent=11 // pred_region
          %s499 = ssub.s32 256, 256
          %500 = vsyncadd [#allocation9], %s499
          %s501 = sshll.u32 [#allocation8], 4
          %s502 = int_to_ptr.vmem [resolvable:$true] %s501
          %507 = dma.hbm_to_vmem [thread:$0]  %s3, 256, %s502, [#allocation9], 64, 64, 4
        $region24: #{tpu_custom_call.1} parent=11 // pred_fallthru
          _
        // Predicated region
        $region25: #{tpu_custom_call.1} parent=11 // pred_check
          %p508 = pneg %p152
        $region26: #{tpu_custom_call.1} parent=11 // pred_check_branch
          %510 = sbr.rel (%p508) target = $region28
        $region27: #{tpu_custom_call.1} parent=11 // pred_region
          %s512 = ssub.s32 16, 16
          %513 = vsyncadd [#allocation9], %s512
          %s515 = sshll.u32 [#allocation10], 4
          %s516 = int_to_ptr.vmem [resolvable:$true] %s515
          %518 = dma.hbm_to_vmem [thread:$0]  %s4, 16, %s516, [#allocation9]
        $region28: #{tpu_custom_call.1} parent=11 // pred_fallthru
          _
        // Predicated region
        $region29: #{tpu_custom_call.1} parent=11 // pred_check
          %p519 = pneg %p173
        $region30: #{tpu_custom_call.1} parent=11 // pred_check_branch
          %521 = sbr.rel (%p519) target = $region32
        $region31: #{tpu_custom_call.1} parent=11 // pred_region
          %s523 = ssub.s32 256, 256
          %524 = vsyncadd [#allocation12], %s523
          %s525 = sshll.u32 [#allocation11], 4
          %s526 = int_to_ptr.vmem [resolvable:$true] %s525
          %531 = dma.hbm_to_vmem [thread:$0]  %s5, 256, %s526, [#allocation12], 64, 64, 4
        $region32: #{tpu_custom_call.1} parent=11 // pred_fallthru
          _
        // Predicated region
        $region33: #{tpu_custom_call.1} parent=11 // pred_check
          %p532 = pneg %p194
        $region34: #{tpu_custom_call.1} parent=11 // pred_check_branch
          %534 = sbr.rel (%p532) target = $region36
        $region35: #{tpu_custom_call.1} parent=11 // pred_region
          %s536 = ssub.s32 16, 16
          %537 = vsyncadd [#allocation12], %s536
          %s539 = sshll.u32 [#allocation13], 4
          %s540 = int_to_ptr.vmem [resolvable:$true] %s539
          %542 = dma.hbm_to_vmem [thread:$0]  %s6, 16, %s540, [#allocation12]
        $region36: #{tpu_custom_call.1} parent=11 // pred_fallthru
          _
        // Predicated region
        $region37: #{tpu_custom_call.1} parent=11 // pred_check
          %p543 = pneg %p215
        $region38: #{tpu_custom_call.1} parent=11 // pred_check_branch
          %545 = sbr.rel (%p543) target = $region40
        $region39: #{tpu_custom_call.1} parent=11 // pred_region
          %s547 = ssub.s32 256, 256
          %548 = vsyncadd [#allocation15], %s547
          %s549 = sshll.u32 [#allocation14], 4
          %s550 = int_to_ptr.vmem [resolvable:$true] %s549
          %555 = dma.hbm_to_vmem [thread:$0]  %s7, 256, %s550, [#allocation15], 64, 64, 4
        $region40: #{tpu_custom_call.1} parent=11 // pred_fallthru
          _
        // Predicated region
        $region41: #{tpu_custom_call.1} parent=11 // pred_check
          %p556 = pneg %p236
        $region42: #{tpu_custom_call.1} parent=11 // pred_check_branch
          %558 = sbr.rel (%p556) target = $region44
        $region43: #{tpu_custom_call.1} parent=11 // pred_region
          %s560 = ssub.s32 16, 16
          %561 = vsyncadd [#allocation15], %s560
          %s563 = sshll.u32 [#allocation16], 4
          %s564 = int_to_ptr.vmem [resolvable:$true] %s563
          %566 = dma.hbm_to_vmem [thread:$0]  %s8, 16, %s564, [#allocation15]
        $region44: #{tpu_custom_call.1} parent=11 // pred_fallthru
          _
        // Predicated region
        $region45: #{tpu_custom_call.1} parent=11 // pred_check
          %p567 = pneg %p257
        $region46: #{tpu_custom_call.1} parent=11 // pred_check_branch
          %569 = sbr.rel (%p567) target = $region48
        $region47: #{tpu_custom_call.1} parent=11 // pred_region
          %s571 = ssub.s32 16, 16
          %572 = vsyncadd [#allocation18], %s571
          %s574 = sshll.u32 [#allocation17], 4
          %s575 = int_to_ptr.vmem [resolvable:$true] %s574
          %577 = dma.hbm_to_vmem [thread:$0]  %s9, 16, %s575, [#allocation18]
        $region48: #{tpu_custom_call.1} parent=11 // pred_fallthru
          _
        // Predicated region
        $region49: #{tpu_custom_call.1} parent=11 // pred_check
          %p578 = pneg %p278
        $region50: #{tpu_custom_call.1} parent=11 // pred_check_branch
          %580 = sbr.rel (%p578) target = $region52
        $region51: #{tpu_custom_call.1} parent=11 // pred_region
          %s582 = ssub.s32 16, 16
          %583 = vsyncadd [#allocation18], %s582
          %s585 = sshll.u32 [#allocation19], 4
          %s586 = int_to_ptr.vmem [resolvable:$true] %s585
          %588 = dma.hbm_to_vmem [thread:$0]  %s10, 16, %s586, [#allocation18]
        $region52: #{tpu_custom_call.1} parent=11 // pred_fallthru
          _
        // Predicated region
        $region53: #{tpu_custom_call.1} parent=11 // pred_check
          %p589 = pneg %p299
        $region54: #{tpu_custom_call.1} parent=11 // pred_check_branch
          %591 = sbr.rel (%p589) target = $region56
        $region55: #{tpu_custom_call.1} parent=11 // pred_region
          %s593 = ssub.s32 256, 256
          %594 = vsyncadd [#allocation21], %s593
          %s595 = sshll.u32 [#allocation20], 4
          %s596 = int_to_ptr.vmem [resolvable:$true] %s595
          %601 = dma.hbm_to_vmem [thread:$0]  %s11, 256, %s596, [#allocation21], 64, 64, 4
        $region56: #{tpu_custom_call.1} parent=11 // pred_fallthru
          _
        // Predicated region
        $region57: #{tpu_custom_call.1} parent=11 // pred_check
          %p602 = pneg %p320
        $region58: #{tpu_custom_call.1} parent=11 // pred_check_branch
          %604 = sbr.rel (%p602) target = $region60
        $region59: #{tpu_custom_call.1} parent=11 // pred_region
          %s606 = ssub.s32 16, 16
          %607 = vsyncadd [#allocation21], %s606
          %s609 = sshll.u32 [#allocation22], 4
          %s610 = int_to_ptr.vmem [resolvable:$true] %s609
          %612 = dma.hbm_to_vmem [thread:$0]  %s12, 16, %s610, [#allocation21]
        $region60: #{tpu_custom_call.1} parent=11 // pred_fallthru
          _
        // Predicated region
        $region61: #{tpu_custom_call.1} parent=11 // pred_check
          %p613 = pneg %p341
        $region62: #{tpu_custom_call.1} parent=11 // pred_check_branch
          %615 = sbr.rel (%p613) target = $region64
        $region63: #{tpu_custom_call.1} parent=11 // pred_region
          %s617 = ssub.s32 512, 512
          %618 = vsyncadd [#allocation24], %s617
          %s619 = sshll.u32 [#allocation23], 4
          %s620 = int_to_ptr.vmem [resolvable:$true] %s619
          %625 = dma.hbm_to_vmem [thread:$0]  %s13, 512, %s620, [#allocation24], 64, 64, 4
        $region64: #{tpu_custom_call.1} parent=11 // pred_fallthru
          _
        // Predicated region
        $region65: #{tpu_custom_call.1} parent=11 // pred_check
          %p626 = pneg %p362
        $region66: #{tpu_custom_call.1} parent=11 // pred_check_branch
          %628 = sbr.rel (%p626) target = $region68
        $region67: #{tpu_custom_call.1} parent=11 // pred_region
          %s630 = ssub.s32 16, 16
          %631 = vsyncadd [#allocation24], %s630
          %s633 = sshll.u32 [#allocation25], 4
          %s634 = int_to_ptr.vmem [resolvable:$true] %s633
          %636 = dma.hbm_to_vmem [thread:$0]  %s14, 16, %s634, [#allocation24]
        $region68: #{tpu_custom_call.1} parent=11 // pred_fallthru
          _
        // Predicated region
        $region69: #{tpu_custom_call.1} parent=11 // pred_check
          %p637 = pneg %p383
        $region70: #{tpu_custom_call.1} parent=11 // pred_check_branch
          %639 = sbr.rel (%p637) target = $region72
        $region71: #{tpu_custom_call.1} parent=11 // pred_region
          %s641 = ssub.s32 16, 16
          %642 = vsyncadd [#allocation27], %s641
          %s644 = sshll.u32 [#allocation26], 4
          %s645 = int_to_ptr.vmem [resolvable:$true] %s644
          %647 = dma.hbm_to_vmem [thread:$0]  %s15, 16, %s645, [#allocation27]
        $region72: #{tpu_custom_call.1} parent=11 // pred_fallthru
          _
        // Predicated region
        $region73: #{tpu_custom_call.1} parent=11 // pred_check
          %p648 = pneg %p404
        $region74: #{tpu_custom_call.1} parent=11 // pred_check_branch
          %650 = sbr.rel (%p648) target = $region76
        $region75: #{tpu_custom_call.1} parent=11 // pred_region
          %s652 = ssub.s32 16, 16
          %653 = vsyncadd [#allocation27], %s652
          %s655 = sshll.u32 [#allocation28], 4
          %s656 = int_to_ptr.vmem [resolvable:$true] %s655
          %658 = dma.hbm_to_vmem [thread:$0]  %s16, 16, %s656, [#allocation27]
        $region76: #{tpu_custom_call.1} parent=11 // pred_fallthru
          _
      $region12: #{tpu_custom_call.1} parent=5 // pred_fallthru
        _
      %p659 = scmp.lt.s32.totalorder %s42, 2
      // Predicated region
      $region77: #{tpu_custom_call.1} parent=5 // pred_check
        %p660 = pneg %p659
      $region78: #{tpu_custom_call.1} parent=5 // pred_check_branch
        %662 = sbr.rel (%p660) target = $region80
      $region79: #{tpu_custom_call.1} parent=5 // pred_region
        // Predicated region
        $region81: #{tpu_custom_call.1} parent=79 // pred_check
          %p663 = pneg %p62
        $region82: #{tpu_custom_call.1} parent=79 // pred_check_branch
          %665 = sbr.rel (%p663) target = $region84
        $region83: #{tpu_custom_call.1} parent=79 // pred_region
          %s666 = sand.u32 %s52, 1
          %s667 = scalar_lea.sflag [#allocation3], %s666
          %s668 = sand.u32 %s52, 1
          %s669 = smul.addr %s668, 8
          %s670 = scalar_lea.vmem [#allocation2], %s669
          %s672 = ssub.s32 128, 128
          %673 = vsyncadd %s667, %s672
          %s674 = smul.addr %s42, 128
          %s675 = scalar_lea.hbm %s0, %s674
          %s677 = sshll.u32 %s670, 4
          %s678 = int_to_ptr.vmem [resolvable:$true] %s677
          %680 = dma.hbm_to_vmem [thread:$0]  %s675, 128, %s678, %s667
        $region84: #{tpu_custom_call.1} parent=79 // pred_fallthru
          _
      $region80: #{tpu_custom_call.1} parent=5 // pred_fallthru
        _
      %p681 = scmp.le.s32.totalorder 1, %s42
      %p682 = scmp.lt.s32.totalorder %s42, 3
      %p683 = pnand %p681, %p682
      %p684 = pneg %p683
      // Predicated region
      $region85: #{tpu_custom_call.1} parent=5 // pred_check
        _
      $region86: #{tpu_custom_call.1} parent=5 // pred_check_branch
        %686 = sbr.rel (%p683) target = $region88
      $region87: #{tpu_custom_call.1} parent=5 // pred_region
        %s687 = ssub.s32 %s42, 1
        %s688 = sand.u32 %s55, 1
        %s689 = scalar_lea.sflag [#allocation3], %s688
        %s690 = sand.u32 %s55, 1
        %s691 = smul.addr %s690, 8
        %s692 = scalar_lea.vmem [#allocation2], %s691
        // Predicated region
        $region89: #{tpu_custom_call.1} parent=87 // pred_check
          %p693 = pneg %p68
        $region90: #{tpu_custom_call.1} parent=87 // pred_check_branch
          %695 = sbr.rel (%p693) target = $region92
        $region91: #{tpu_custom_call.1} parent=87 // pred_region
          %696 = dma.done %s689, 128
        $region92: #{tpu_custom_call.1} parent=87 // pred_fallthru
          _
        // Predicated region
        $region93: #{tpu_custom_call.1} parent=87 // pred_check
          %p697 = pneg %p89
        $region94: #{tpu_custom_call.1} parent=87 // pred_check_branch
          %699 = sbr.rel (%p697) target = $region96
        $region95: #{tpu_custom_call.1} parent=87 // pred_region
          %700 = dma.done [#allocation6], 256
        $region96: #{tpu_custom_call.1} parent=87 // pred_fallthru
          _
        // Predicated region
        $region97: #{tpu_custom_call.1} parent=87 // pred_check
          %p701 = pneg %p110
        $region98: #{tpu_custom_call.1} parent=87 // pred_check_branch
          %703 = sbr.rel (%p701) target = $region100
        $region99: #{tpu_custom_call.1} parent=87 // pred_region
          %704 = dma.done [#allocation6], 16
        $region100: #{tpu_custom_call.1} parent=87 // pred_fallthru
          _
        // Predicated region
        $region101: #{tpu_custom_call.1} parent=87 // pred_check
          %p705 = pneg %p131
        $region102: #{tpu_custom_call.1} parent=87 // pred_check_branch
          %707 = sbr.rel (%p705) target = $region104
        $region103: #{tpu_custom_call.1} parent=87 // pred_region
          %708 = dma.done [#allocation9], 256
        $region104: #{tpu_custom_call.1} parent=87 // pred_fallthru
          _
        // Predicated region
        $region105: #{tpu_custom_call.1} parent=87 // pred_check
          %p709 = pneg %p152
        $region106: #{tpu_custom_call.1} parent=87 // pred_check_branch
          %711 = sbr.rel (%p709) target = $region108
        $region107: #{tpu_custom_call.1} parent=87 // pred_region
          %712 = dma.done [#allocation9], 16
        $region108: #{tpu_custom_call.1} parent=87 // pred_fallthru
          _
        // Predicated region
        $region109: #{tpu_custom_call.1} parent=87 // pred_check
          %p713 = pneg %p173
        $region110: #{tpu_custom_call.1} parent=87 // pred_check_branch
          %715 = sbr.rel (%p713) target = $region112
        $region111: #{tpu_custom_call.1} parent=87 // pred_region
          %716 = dma.done [#allocation12], 256
        $region112: #{tpu_custom_call.1} parent=87 // pred_fallthru
          _
        // Predicated region
        $region113: #{tpu_custom_call.1} parent=87 // pred_check
          %p717 = pneg %p194
        $region114: #{tpu_custom_call.1} parent=87 // pred_check_branch
          %719 = sbr.rel (%p717) target = $region116
        $region115: #{tpu_custom_call.1} parent=87 // pred_region
          %720 = dma.done [#allocation12], 16
        $region116: #{tpu_custom_call.1} parent=87 // pred_fallthru
          _
        // Predicated region
        $region117: #{tpu_custom_call.1} parent=87 // pred_check
          %p721 = pneg %p215
        $region118: #{tpu_custom_call.1} parent=87 // pred_check_branch
          %723 = sbr.rel (%p721) target = $region120
        $region119: #{tpu_custom_call.1} parent=87 // pred_region
          %724 = dma.done [#allocation15], 256
        $region120: #{tpu_custom_call.1} parent=87 // pred_fallthru
          _
        // Predicated region
        $region121: #{tpu_custom_call.1} parent=87 // pred_check
          %p725 = pneg %p236
        $region122: #{tpu_custom_call.1} parent=87 // pred_check_branch
          %727 = sbr.rel (%p725) target = $region124
        $region123: #{tpu_custom_call.1} parent=87 // pred_region
          %728 = dma.done [#allocation15], 16
        $region124: #{tpu_custom_call.1} parent=87 // pred_fallthru
          _
        // Predicated region
        $region125: #{tpu_custom_call.1} parent=87 // pred_check
          %p729 = pneg %p257
        $region126: #{tpu_custom_call.1} parent=87 // pred_check_branch
          %731 = sbr.rel (%p729) target = $region128
        $region127: #{tpu_custom_call.1} parent=87 // pred_region
          %732 = dma.done [#allocation18], 16
        $region128: #{tpu_custom_call.1} parent=87 // pred_fallthru
          _
        // Predicated region
        $region129: #{tpu_custom_call.1} parent=87 // pred_check
          %p733 = pneg %p278
        $region130: #{tpu_custom_call.1} parent=87 // pred_check_branch
          %735 = sbr.rel (%p733) target = $region132
        $region131: #{tpu_custom_call.1} parent=87 // pred_region
          %736 = dma.done [#allocation18], 16
        $region132: #{tpu_custom_call.1} parent=87 // pred_fallthru
          _
        // Predicated region
        $region133: #{tpu_custom_call.1} parent=87 // pred_check
          %p737 = pneg %p299
        $region134: #{tpu_custom_call.1} parent=87 // pred_check_branch
          %739 = sbr.rel (%p737) target = $region136
        $region135: #{tpu_custom_call.1} parent=87 // pred_region
          %740 = dma.done [#allocation21], 256
        $region136: #{tpu_custom_call.1} parent=87 // pred_fallthru
          _
        // Predicated region
        $region137: #{tpu_custom_call.1} parent=87 // pred_check
          %p741 = pneg %p320
        $region138: #{tpu_custom_call.1} parent=87 // pred_check_branch
          %743 = sbr.rel (%p741) target = $region140
        $region139: #{tpu_custom_call.1} parent=87 // pred_region
          %744 = dma.done [#allocation21], 16
        $region140: #{tpu_custom_call.1} parent=87 // pred_fallthru
          _
        // Predicated region
        $region141: #{tpu_custom_call.1} parent=87 // pred_check
          %p745 = pneg %p341
        $region142: #{tpu_custom_call.1} parent=87 // pred_check_branch
          %747 = sbr.rel (%p745) target = $region144
        $region143: #{tpu_custom_call.1} parent=87 // pred_region
          %748 = dma.done [#allocation24], 512
        $region144: #{tpu_custom_call.1} parent=87 // pred_fallthru
          _
        // Predicated region
        $region145: #{tpu_custom_call.1} parent=87 // pred_check
          %p749 = pneg %p362
        $region146: #{tpu_custom_call.1} parent=87 // pred_check_branch
          %751 = sbr.rel (%p749) target = $region148
        $region147: #{tpu_custom_call.1} parent=87 // pred_region
          %752 = dma.done [#allocation24], 16
        $region148: #{tpu_custom_call.1} parent=87 // pred_fallthru
          _
        // Predicated region
        $region149: #{tpu_custom_call.1} parent=87 // pred_check
          %p753 = pneg %p383
        $region150: #{tpu_custom_call.1} parent=87 // pred_check_branch
          %755 = sbr.rel (%p753) target = $region152
        $region151: #{tpu_custom_call.1} parent=87 // pred_region
          %756 = dma.done [#allocation27], 16
        $region152: #{tpu_custom_call.1} parent=87 // pred_fallthru
          _
        // Predicated region
        $region153: #{tpu_custom_call.1} parent=87 // pred_check
          %p757 = pneg %p404
        $region154: #{tpu_custom_call.1} parent=87 // pred_check_branch
          %759 = sbr.rel (%p757) target = $region156
        $region155: #{tpu_custom_call.1} parent=87 // pred_region
          %760 = dma.done [#allocation27], 16
        $region156: #{tpu_custom_call.1} parent=87 // pred_fallthru
          _
        %s761 = sand.u32 %s55, 1
        %s762 = scalar_lea.sflag [#allocation3], %s761
        %s763 = sand.u32 %s55, 1
        %s764 = smul.addr %s763, 8
        %s765 = scalar_lea.vmem [#allocation2], %s764
        %p766 = pneg %p68
        %p767 = pneg %p65
        %p768 = pneg %p89
        %p769 = pneg %p86
        %p770 = pneg %p110
        %p771 = pneg %p107
        %p772 = pneg %p131
        %p773 = pneg %p128
        %p774 = pneg %p152
        %p775 = pneg %p149
        %p776 = pneg %p173
        %p777 = pneg %p170
        %p778 = pneg %p194
        %p779 = pneg %p191
        %p780 = pneg %p215
        %p781 = pneg %p212
        %p782 = pneg %p236
        %p783 = pneg %p233
        %p784 = pneg %p257
        %p785 = pneg %p254
        %p786 = pneg %p278
        %p787 = pneg %p275
        %p788 = pneg %p299
        %p789 = pneg %p296
        %p790 = pneg %p320
        %p791 = pneg %p317
        %p792 = pneg %p341
        %p793 = pneg %p338
        %p794 = pneg %p362
        %p795 = pneg %p359
        %p796 = pneg %p383
        %p797 = pneg %p380
        %p798 = pneg %p404
        %p799 = pneg %p401
        %p800 = pneg %p430
        %p801 = pneg %p427
        %s802 = sand.u32 %s417, 1
        %s803 = scalar_lea.sflag [#allocation4], %s802
        %s804 = sand.u32 %s417, 1
        %s805 = smul.addr %s804, 8
        %s806 = scalar_lea.vmem [#allocation29], %s805
        %p807 = pneg %p456
        %p808 = pneg %p453
        %s809 = sand.u32 %s443, 1
        %s810 = scalar_lea.sflag [#allocation31], %s809
        %s811 = sand.u32 %s443, 1
        %s812 = smul.addr %s811, 32
        %s813 = scalar_lea.vmem [#allocation30], %s812
        %v815 = vld [vmem:[%s692] sm:$0xff]
        %v816 = vpack.c.bf16 %v815, %v815
        %v817 = vld [vmem:[#allocation5] sm:$0xf]
        %v818 = vld [vmem:[#allocation5 + $0x4] sm:$0xf]
        %v819 = vld [vmem:[#allocation5 + $0x8] sm:$0xf]
        %v820 = vld [vmem:[#allocation5 + $0xc] sm:$0xf]
        %v821 = vld [vmem:[#allocation7] sm:$0x1]
        %v823 = vlaneseq
        %v824 = vshrl.u32 %v823, 7
        %v825 = vsub.s32 0, %v824
        %v826 = vrot.slane %v821, %v825
        %v832 = vunpack.c.l.b16 %v817
        %v833 = vunpack.c.l.b16 %v818
        %v834 = vunpack.c.l.b16 %v819
        %v835 = vunpack.c.l.b16 %v820
        %v836 = vpack.c.b16 %v833, %v832
        %v837 = vpack.c.b16 %v835, %v834
        %vm840 = vcmask 261120
        %v842 = vsel %vm840, %v816, 0
        %844 = vmatprep.subr.bf16.mxu0 0
        %845 = vmatpush1.bf16.msra.mxu0 %v836
        %846 = vmatprep.subr.bf16.mxu0 0
        %847 = vmatpush1.bf16.msra.mxu0 %v837
        %848 = vmatprep.subr.bf16.mxu0 0
        %849 = vmatpush1.bf16.msra.mxu0 0
        %850 = vmatprep.subr.bf16.mxu0 0
        %851 = vmatpush1.bf16.msra.mxu0 0
        %852 = vmatprep.subr.bf16.mxu0 0
        %853 = vmatpush1.bf16.msra.mxu0 0
        %854 = vmatprep.subr.bf16.mxu0 0
        %855 = vmatpush1.bf16.msra.mxu0 0
        %856 = vmatprep.subr.bf16.mxu0 0
        %857 = vmatpush1.bf16.msra.mxu0 0
        %858 = vmatprep.subr.bf16.mxu0 0
        %859 = vmatpush1.bf16.msra.mxu0 0
        %860 = vmatprep.subr.bf16.mxu0 0
        %861 = vmatpush1.bf16.msra.mxu0 0
        %862 = vmatprep.subr.bf16.mxu0 0
        %863 = vmatpush1.bf16.msra.mxu0 0
        %864 = vmatprep.subr.bf16.mxu0 0
        %865 = vmatpush1.bf16.msra.mxu0 0
        %866 = vmatprep.subr.bf16.mxu0 0
        %867 = vmatpush1.bf16.msra.mxu0 0
        %868 = vmatprep.subr.bf16.mxu0 0
        %869 = vmatpush1.bf16.msra.mxu0 0
        %870 = vmatprep.subr.bf16.mxu0 0
        %871 = vmatpush1.bf16.msra.mxu0 0
        %872 = vmatprep.subr.bf16.mxu0 0
        %873 = vmatpush1.bf16.msra.mxu0 0
        %874 = vmatprep.subr.bf16.mxu0 0
        %875 = vmatpush1.bf16.msra.mxu0 0
        %876 = vmatprep.mubr.bf16.mxu0 0
        %877 = vmatmul.mubr.bf16.gmra.mrb[0].mxu0 %v842
        %v878 = vpop.f32.mrb[0].mxu0
        %v879 = vadd.f32 %v826, %v878
        %v880 = vpop.f32.mrb[0].mxu0
        %v881 = vpop.f32.mrb[0].mxu0
        %v882 = vpop.f32.mrb[0].mxu0
        %883 = vdwg.mxu0
        %v884 = vpack.c.bf16 %v879, %v879
        %v885 = vld [vmem:[#allocation8] sm:$0xf]
        %v886 = vld [vmem:[#allocation8 + $0x4] sm:$0xf]
        %v887 = vld [vmem:[#allocation8 + $0x8] sm:$0xf]
        %v888 = vld [vmem:[#allocation8 + $0xc] sm:$0xf]
        %v889 = vld [vmem:[#allocation10] sm:$0x1]
        %v891 = vlaneseq
        %v892 = vshrl.u32 %v891, 7
        %v893 = vsub.s32 0, %v892
        %v894 = vrot.slane %v889, %v893
        %v900 = vunpack.c.l.b16 %v885
        %v901 = vunpack.c.l.b16 %v886
        %v902 = vunpack.c.l.b16 %v887
        %v903 = vunpack.c.l.b16 %v888
        %v904 = vpack.c.b16 %v901, %v900
        %v905 = vpack.c.b16 %v903, %v902
        %908 = vmatprep.subr.bf16.mxu0 0
        %909 = vmatpush1.bf16.msra.mxu0 %v904
        %910 = vmatprep.subr.bf16.mxu0 0
        %911 = vmatpush1.bf16.msra.mxu0 %v905
        %912 = vmatprep.subr.bf16.mxu0 0
        %913 = vmatpush1.bf16.msra.mxu0 0
        %914 = vmatprep.subr.bf16.mxu0 0
        %915 = vmatpush1.bf16.msra.mxu0 0
        %916 = vmatprep.subr.bf16.mxu0 0
        %917 = vmatpush1.bf16.msra.mxu0 0
        %918 = vmatprep.subr.bf16.mxu0 0
        %919 = vmatpush1.bf16.msra.mxu0 0
        %920 = vmatprep.subr.bf16.mxu0 0
        %921 = vmatpush1.bf16.msra.mxu0 0
        %922 = vmatprep.subr.bf16.mxu0 0
        %923 = vmatpush1.bf16.msra.mxu0 0
        %924 = vmatprep.subr.bf16.mxu0 0
        %925 = vmatpush1.bf16.msra.mxu0 0
        %926 = vmatprep.subr.bf16.mxu0 0
        %927 = vmatpush1.bf16.msra.mxu0 0
        %928 = vmatprep.subr.bf16.mxu0 0
        %929 = vmatpush1.bf16.msra.mxu0 0
        %930 = vmatprep.subr.bf16.mxu0 0
        %931 = vmatpush1.bf16.msra.mxu0 0
        %932 = vmatprep.subr.bf16.mxu0 0
        %933 = vmatpush1.bf16.msra.mxu0 0
        %934 = vmatprep.subr.bf16.mxu0 0
        %935 = vmatpush1.bf16.msra.mxu0 0
        %936 = vmatprep.subr.bf16.mxu0 0
        %937 = vmatpush1.bf16.msra.mxu0 0
        %938 = vmatprep.subr.bf16.mxu0 0
        %939 = vmatpush1.bf16.msra.mxu0 0
        %940 = vmatprep.mubr.bf16.mxu0 0
        %941 = vmatmul.mubr.bf16.gmra.mrb[0].mxu0 %v842
        %v942 = vpop.f32.mrb[0].mxu0
        %v943 = vadd.f32 %v894, %v942
        %v944 = vpop.f32.mrb[0].mxu0
        %v945 = vpop.f32.mrb[0].mxu0
        %v946 = vpop.f32.mrb[0].mxu0
        %947 = vdwg.mxu0
        %v948 = vpack.c.bf16 %v943, %v943
        %v949 = vld [vmem:[#allocation11] sm:$0xf]
        %v950 = vld [vmem:[#allocation11 + $0x4] sm:$0xf]
        %v951 = vld [vmem:[#allocation11 + $0x8] sm:$0xf]
        %v952 = vld [vmem:[#allocation11 + $0xc] sm:$0xf]
        %v953 = vld [vmem:[#allocation13] sm:$0x1]
        %v955 = vlaneseq
        %v956 = vshrl.u32 %v955, 7
        %v957 = vsub.s32 0, %v956
        %v958 = vrot.slane %v953, %v957
        %v964 = vunpack.c.l.b16 %v949
        %v965 = vunpack.c.l.b16 %v950
        %v966 = vunpack.c.l.b16 %v951
        %v967 = vunpack.c.l.b16 %v952
        %v968 = vpack.c.b16 %v965, %v964
        %v969 = vpack.c.b16 %v967, %v966
        %972 = vmatprep.subr.bf16.mxu0 0
        %973 = vmatpush1.bf16.msra.mxu0 %v968
        %974 = vmatprep.subr.bf16.mxu0 0
        %975 = vmatpush1.bf16.msra.mxu0 %v969
        %976 = vmatprep.subr.bf16.mxu0 0
        %977 = vmatpush1.bf16.msra.mxu0 0
        %978 = vmatprep.subr.bf16.mxu0 0
        %979 = vmatpush1.bf16.msra.mxu0 0
        %980 = vmatprep.subr.bf16.mxu0 0
        %981 = vmatpush1.bf16.msra.mxu0 0
        %982 = vmatprep.subr.bf16.mxu0 0
        %983 = vmatpush1.bf16.msra.mxu0 0
        %984 = vmatprep.subr.bf16.mxu0 0
        %985 = vmatpush1.bf16.msra.mxu0 0
        %986 = vmatprep.subr.bf16.mxu0 0
        %987 = vmatpush1.bf16.msra.mxu0 0
        %988 = vmatprep.subr.bf16.mxu0 0
        %989 = vmatpush1.bf16.msra.mxu0 0
        %990 = vmatprep.subr.bf16.mxu0 0
        %991 = vmatpush1.bf16.msra.mxu0 0
        %992 = vmatprep.subr.bf16.mxu0 0
        %993 = vmatpush1.bf16.msra.mxu0 0
        %994 = vmatprep.subr.bf16.mxu0 0
        %995 = vmatpush1.bf16.msra.mxu0 0
        %996 = vmatprep.subr.bf16.mxu0 0
        %997 = vmatpush1.bf16.msra.mxu0 0
        %998 = vmatprep.subr.bf16.mxu0 0
        %999 = vmatpush1.bf16.msra.mxu0 0
        %1000 = vmatprep.subr.bf16.mxu0 0
        %1001 = vmatpush1.bf16.msra.mxu0 0
        %1002 = vmatprep.subr.bf16.mxu0 0
        %1003 = vmatpush1.bf16.msra.mxu0 0
        %1004 = vmatprep.mubr.bf16.mxu0 0
        %1005 = vmatmul.mubr.bf16.gmra.mrb[0].mxu0 %v842
        %v1006 = vpop.f32.mrb[0].mxu0
        %v1007 = vadd.f32 %v958, %v1006
        %v1008 = vpop.f32.mrb[0].mxu0
        %v1009 = vpop.f32.mrb[0].mxu0
        %v1010 = vpop.f32.mrb[0].mxu0
        %1011 = vdwg.mxu0
        %v1012 = vpack.c.bf16 %v1007, %v1007
        %vm1013 = vcmask 64512
        %v1015 = vsel %vm1013, %v884, 0
        %v1018 = vsel %vm1013, %v948, 0
        %1020 = vmatprep.subr.bf16.mxu0 0
        %1021 = vmatpush1.bf16.xpose.msra.mxu0 %v1018
        %1022 = vmatprep.subr.bf16.mxu0 0
        %1023 = vmatpush1.bf16.xpose.msra.mxu0 0
        %1024 = vmatprep.subr.bf16.mxu0 0
        %1025 = vmatpush1.bf16.xpose.msra.mxu0 0
        %1026 = vmatprep.subr.bf16.mxu0 0
        %1027 = vmatpush1.bf16.xpose.msra.mxu0 0
        %1028 = vmatprep.subr.bf16.mxu0 0
        %1029 = vmatpush1.bf16.xpose.msra.mxu0 0
        %1030 = vmatprep.subr.bf16.mxu0 0
        %1031 = vmatpush1.bf16.xpose.msra.mxu0 0
        %1032 = vmatprep.subr.bf16.mxu0 0
        %1033 = vmatpush1.bf16.xpose.msra.mxu0 0
        %1034 = vmatprep.subr.bf16.mxu0 0
        %1035 = vmatpush1.bf16.xpose.msra.mxu0 0
        %1036 = vmatprep.subr.bf16.mxu0 0
        %1037 = vmatpush1.bf16.xpose.msra.mxu0 0
        %1038 = vmatprep.subr.bf16.mxu0 0
        %1039 = vmatpush1.bf16.xpose.msra.mxu0 0
        %1040 = vmatprep.subr.bf16.mxu0 0
        %1041 = vmatpush1.bf16.xpose.msra.mxu0 0
        %1042 = vmatprep.subr.bf16.mxu0 0
        %1043 = vmatpush1.bf16.xpose.msra.mxu0 0
        %1044 = vmatprep.subr.bf16.mxu0 0
        %1045 = vmatpush1.bf16.xpose.msra.mxu0 0
        %1046 = vmatprep.subr.bf16.mxu0 0
        %1047 = vmatpush1.bf16.xpose.msra.mxu0 0
        %1048 = vmatprep.subr.bf16.mxu0 0
        %1049 = vmatpush1.bf16.xpose.msra.mxu0 0
        %1050 = vmatprep.subr.bf16.mxu0 0
        %1051 = vmatpush1.bf16.xpose.msra.mxu0 0
        %1052 = vmatprep.mubr.bf16.mxu0 0
        %1053 = vmatmul.mubr.bf16.gmra.mrb[0].mxu0 %v1015
        %v1054 = vpop.f32.mrb[0].mxu0
        %v1055 = vadd.f32 0.0, %v1054
        %v1056 = vpop.f32.mrb[0].mxu0
        %v1057 = vpop.f32.mrb[0].mxu0
        %v1058 = vpop.f32.mrb[0].mxu0
        %1059 = vdwg.mxu0
        %v1060 = vmul.f32 %v1055, 0.35355338
        %v1061 = vsel %vm1013, %v1060, -inf
        %1062 = vmax.xlane.f32.xlu0 %v1061
        %v1063 = vpop.xlane.xlu0 %1062
        %v1064 = vsub.f32 %v1060, %v1063
        %v1065 = vmul.f32 %v1064, 1.442695
        %v1066 = vpow.pop %v1065
        %v1067 = vsel %vm1013, %v1066, 0.0
        %1068 = vadd.xlane.f32.xlu0 %v1067
        %v1069 = vpop.xlane.xlu0 %1068
        %v1070 = vrcp.pop %v1069
        %v1071 = vmul.f32 %v1066, %v1070
        %1072 = vst.msk [vmem:[%s813] sm:$0xff] %vm1013, %v1071
        %v1073 = vpack.c.bf16 %v1071, %v1071
        %v1075 = vsel %vm1013, %v1073, 0
        %vm1077 = vcmask 1043456
        %v1079 = vsel %vm1077, %v1012, 0
        %1081 = vmatprep.subr.bf16.mxu0 0
        %1082 = vmatpush1.bf16.msra.mxu0 %v1079
        %1083 = vmatprep.subr.bf16.mxu0 0
        %1084 = vmatpush1.bf16.msra.mxu0 0
        %1085 = vmatprep.subr.bf16.mxu0 0
        %1086 = vmatpush1.bf16.msra.mxu0 0
        %1087 = vmatprep.subr.bf16.mxu0 0
        %1088 = vmatpush1.bf16.msra.mxu0 0
        %1089 = vmatprep.subr.bf16.mxu0 0
        %1090 = vmatpush1.bf16.msra.mxu0 0
        %1091 = vmatprep.subr.bf16.mxu0 0
        %1092 = vmatpush1.bf16.msra.mxu0 0
        %1093 = vmatprep.subr.bf16.mxu0 0
        %1094 = vmatpush1.bf16.msra.mxu0 0
        %1095 = vmatprep.subr.bf16.mxu0 0
        %1096 = vmatpush1.bf16.msra.mxu0 0
        %1097 = vmatprep.subr.bf16.mxu0 0
        %1098 = vmatpush1.bf16.msra.mxu0 0
        %1099 = vmatprep.subr.bf16.mxu0 0
        %1100 = vmatpush1.bf16.msra.mxu0 0
        %1101 = vmatprep.subr.bf16.mxu0 0
        %1102 = vmatpush1.bf16.msra.mxu0 0
        %1103 = vmatprep.subr.bf16.mxu0 0
        %1104 = vmatpush1.bf16.msra.mxu0 0
        %1105 = vmatprep.subr.bf16.mxu0 0
        %1106 = vmatpush1.bf16.msra.mxu0 0
        %1107 = vmatprep.subr.bf16.mxu0 0
        %1108 = vmatpush1.bf16.msra.mxu0 0
        %1109 = vmatprep.subr.bf16.mxu0 0
        %1110 = vmatpush1.bf16.msra.mxu0 0
        %1111 = vmatprep.subr.bf16.mxu0 0
        %1112 = vmatpush1.bf16.msra.mxu0 0
        %1113 = vmatprep.mubr.bf16.mxu0 0
        %1114 = vmatmul.mubr.bf16.gmra.mrb[0].mxu0 %v1075
        %v1115 = vpop.f32.mrb[0].mxu0
        %v1116 = vadd.f32 0.0, %v1115
        %v1117 = vpop.f32.mrb[0].mxu0
        %v1118 = vpop.f32.mrb[0].mxu0
        %v1119 = vpop.f32.mrb[0].mxu0
        %1120 = vdwg.mxu0
        %1122 = vrot.lane.b32.xlu0 %v884, 120
        %v1123 = vpop.permute.xlu0 %1122
        %1125 = vrot.lane.b32.xlu0 %v948, 120
        %v1126 = vpop.permute.xlu0 %1125
        %v1128 = vsel %vm1013, %v1123, 0
        %v1131 = vsel %vm1013, %v1126, 0
        %1133 = vmatprep.subr.bf16.mxu0 0
        %1134 = vmatpush1.bf16.xpose.msra.mxu0 %v1131
        %1135 = vmatprep.subr.bf16.mxu0 0
        %1136 = vmatpush1.bf16.xpose.msra.mxu0 0
        %1137 = vmatprep.subr.bf16.mxu0 0
        %1138 = vmatpush1.bf16.xpose.msra.mxu0 0
        %1139 = vmatprep.subr.bf16.mxu0 0
        %1140 = vmatpush1.bf16.xpose.msra.mxu0 0
        %1141 = vmatprep.subr.bf16.mxu0 0
        %1142 = vmatpush1.bf16.xpose.msra.mxu0 0
        %1143 = vmatprep.subr.bf16.mxu0 0
        %1144 = vmatpush1.bf16.xpose.msra.mxu0 0
        %1145 = vmatprep.subr.bf16.mxu0 0
        %1146 = vmatpush1.bf16.xpose.msra.mxu0 0
        %1147 = vmatprep.subr.bf16.mxu0 0
        %1148 = vmatpush1.bf16.xpose.msra.mxu0 0
        %1149 = vmatprep.subr.bf16.mxu0 0
        %1150 = vmatpush1.bf16.xpose.msra.mxu0 0
        %1151 = vmatprep.subr.bf16.mxu0 0
        %1152 = vmatpush1.bf16.xpose.msra.mxu0 0
        %1153 = vmatprep.subr.bf16.mxu0 0
        %1154 = vmatpush1.bf16.xpose.msra.mxu0 0
        %1155 = vmatprep.subr.bf16.mxu0 0
        %1156 = vmatpush1.bf16.xpose.msra.mxu0 0
        %1157 = vmatprep.subr.bf16.mxu0 0
        %1158 = vmatpush1.bf16.xpose.msra.mxu0 0
        %1159 = vmatprep.subr.bf16.mxu0 0
        %1160 = vmatpush1.bf16.xpose.msra.mxu0 0
        %1161 = vmatprep.subr.bf16.mxu0 0
        %1162 = vmatpush1.bf16.xpose.msra.mxu0 0
        %1163 = vmatprep.subr.bf16.mxu0 0
        %1164 = vmatpush1.bf16.xpose.msra.mxu0 0
        %1165 = vmatprep.mubr.bf16.mxu0 0
        %1166 = vmatmul.mubr.bf16.gmra.mrb[0].mxu0 %v1128
        %v1167 = vpop.f32.mrb[0].mxu0
        %v1168 = vadd.f32 0.0, %v1167
        %v1169 = vpop.f32.mrb[0].mxu0
        %v1170 = vpop.f32.mrb[0].mxu0
        %v1171 = vpop.f32.mrb[0].mxu0
        %1172 = vdwg.mxu0
        %v1173 = vmul.f32 %v1168, 0.35355338
        %v1174 = vsel %vm1013, %v1173, -inf
        %1175 = vmax.xlane.f32.xlu0 %v1174
        %v1176 = vpop.xlane.xlu0 %1175
        %v1177 = vsub.f32 %v1173, %v1176
        %v1178 = vmul.f32 %v1177, 1.442695
        %v1179 = vpow.pop %v1178
        %v1180 = vsel %vm1013, %v1179, 0.0
        %1181 = vadd.xlane.f32.xlu0 %v1180
        %v1182 = vpop.xlane.xlu0 %1181
        %v1183 = vrcp.pop %v1182
        %v1184 = vmul.f32 %v1179, %v1183
        %s1185 = scalar_lea.vmem %s813, 8 [#allocation30]
        %1186 = vst.msk [vmem:[%s1185] sm:$0xff] %vm1013, %v1184
        %v1187 = vpack.c.bf16 %v1184, %v1184
        %1189 = vrot.lane.b32.xlu0 %v1012, 120
        %v1190 = vpop.permute.xlu0 %1189
        %v1192 = vsel %vm1013, %v1187, 0
        %v1195 = vsel %vm1077, %v1190, 0
        %1197 = vmatprep.subr.bf16.mxu0 0
        %1198 = vmatpush1.bf16.msra.mxu0 %v1195
        %1199 = vmatprep.subr.bf16.mxu0 0
        %1200 = vmatpush1.bf16.msra.mxu0 0
        %1201 = vmatprep.subr.bf16.mxu0 0
        %1202 = vmatpush1.bf16.msra.mxu0 0
        %1203 = vmatprep.subr.bf16.mxu0 0
        %1204 = vmatpush1.bf16.msra.mxu0 0
        %1205 = vmatprep.subr.bf16.mxu0 0
        %1206 = vmatpush1.bf16.msra.mxu0 0
        %1207 = vmatprep.subr.bf16.mxu0 0
        %1208 = vmatpush1.bf16.msra.mxu0 0
        %1209 = vmatprep.subr.bf16.mxu0 0
        %1210 = vmatpush1.bf16.msra.mxu0 0
        %1211 = vmatprep.subr.bf16.mxu0 0
        %1212 = vmatpush1.bf16.msra.mxu0 0
        %1213 = vmatprep.subr.bf16.mxu0 0
        %1214 = vmatpush1.bf16.msra.mxu0 0
        %1215 = vmatprep.subr.bf16.mxu0 0
        %1216 = vmatpush1.bf16.msra.mxu0 0
        %1217 = vmatprep.subr.bf16.mxu0 0
        %1218 = vmatpush1.bf16.msra.mxu0 0
        %1219 = vmatprep.subr.bf16.mxu0 0
        %1220 = vmatpush1.bf16.msra.mxu0 0
        %1221 = vmatprep.subr.bf16.mxu0 0
        %1222 = vmatpush1.bf16.msra.mxu0 0
        %1223 = vmatprep.subr.bf16.mxu0 0
        %1224 = vmatpush1.bf16.msra.mxu0 0
        %1225 = vmatprep.subr.bf16.mxu0 0
        %1226 = vmatpush1.bf16.msra.mxu0 0
        %1227 = vmatprep.subr.bf16.mxu0 0
        %1228 = vmatpush1.bf16.msra.mxu0 0
        %1229 = vmatprep.mubr.bf16.mxu0 0
        %1230 = vmatmul.mubr.bf16.gmra.mrb[0].mxu0 %v1192
        %v1231 = vpop.f32.mrb[0].mxu0
        %v1232 = vadd.f32 0.0, %v1231
        %v1233 = vpop.f32.mrb[0].mxu0
        %v1234 = vpop.f32.mrb[0].mxu0
        %v1235 = vpop.f32.mrb[0].mxu0
        %1236 = vdwg.mxu0
        %1237 = vrot.lane.b32.xlu0 %v884, 112
        %v1238 = vpop.permute.xlu0 %1237
        %1239 = vrot.lane.b32.xlu0 %v948, 112
        %v1240 = vpop.permute.xlu0 %1239
        %v1242 = vsel %vm1013, %v1238, 0
        %v1245 = vsel %vm1013, %v1240, 0
        %1247 = vmatprep.subr.bf16.mxu0 0
        %1248 = vmatpush1.bf16.xpose.msra.mxu0 %v1245
        %1249 = vmatprep.subr.bf16.mxu0 0
        %1250 = vmatpush1.bf16.xpose.msra.mxu0 0
        %1251 = vmatprep.subr.bf16.mxu0 0
        %1252 = vmatpush1.bf16.xpose.msra.mxu0 0
        %1253 = vmatprep.subr.bf16.mxu0 0
        %1254 = vmatpush1.bf16.xpose.msra.mxu0 0
        %1255 = vmatprep.subr.bf16.mxu0 0
        %1256 = vmatpush1.bf16.xpose.msra.mxu0 0
        %1257 = vmatprep.subr.bf16.mxu0 0
        %1258 = vmatpush1.bf16.xpose.msra.mxu0 0
        %1259 = vmatprep.subr.bf16.mxu0 0
        %1260 = vmatpush1.bf16.xpose.msra.mxu0 0
        %1261 = vmatprep.subr.bf16.mxu0 0
        %1262 = vmatpush1.bf16.xpose.msra.mxu0 0
        %1263 = vmatprep.subr.bf16.mxu0 0
        %1264 = vmatpush1.bf16.xpose.msra.mxu0 0
        %1265 = vmatprep.subr.bf16.mxu0 0
        %1266 = vmatpush1.bf16.xpose.msra.mxu0 0
        %1267 = vmatprep.subr.bf16.mxu0 0
        %1268 = vmatpush1.bf16.xpose.msra.mxu0 0
        %1269 = vmatprep.subr.bf16.mxu0 0
        %1270 = vmatpush1.bf16.xpose.msra.mxu0 0
        %1271 = vmatprep.subr.bf16.mxu0 0
        %1272 = vmatpush1.bf16.xpose.msra.mxu0 0
        %1273 = vmatprep.subr.bf16.mxu0 0
        %1274 = vmatpush1.bf16.xpose.msra.mxu0 0
        %1275 = vmatprep.subr.bf16.mxu0 0
        %1276 = vmatpush1.bf16.xpose.msra.mxu0 0
        %1277 = vmatprep.subr.bf16.mxu0 0
        %1278 = vmatpush1.bf16.xpose.msra.mxu0 0
        %1279 = vmatprep.mubr.bf16.mxu0 0
        %1280 = vmatmul.mubr.bf16.gmra.mrb[0].mxu0 %v1242
        %v1281 = vpop.f32.mrb[0].mxu0
        %v1282 = vadd.f32 0.0, %v1281
        %v1283 = vpop.f32.mrb[0].mxu0
        %v1284 = vpop.f32.mrb[0].mxu0
        %v1285 = vpop.f32.mrb[0].mxu0
        %1286 = vdwg.mxu0
        %v1287 = vmul.f32 %v1282, 0.35355338
        %v1288 = vsel %vm1013, %v1287, -inf
        %1289 = vmax.xlane.f32.xlu0 %v1288
        %v1290 = vpop.xlane.xlu0 %1289
        %v1291 = vsub.f32 %v1287, %v1290
        %v1292 = vmul.f32 %v1291, 1.442695
        %v1293 = vpow.pop %v1292
        %v1294 = vsel %vm1013, %v1293, 0.0
        %1295 = vadd.xlane.f32.xlu0 %v1294
        %v1296 = vpop.xlane.xlu0 %1295
        %v1297 = vrcp.pop %v1296
        %v1298 = vmul.f32 %v1293, %v1297
        %s1299 = scalar_lea.vmem %s813, 16 [#allocation30]
        %1300 = vst.msk [vmem:[%s1299] sm:$0xff] %vm1013, %v1298
        %v1301 = vpack.c.bf16 %v1298, %v1298
        %1302 = vrot.lane.b32.xlu0 %v1012, 112
        %v1303 = vpop.permute.xlu0 %1302
        %v1305 = vsel %vm1013, %v1301, 0
        %v1308 = vsel %vm1077, %v1303, 0
        %1310 = vmatprep.subr.bf16.mxu0 0
        %1311 = vmatpush1.bf16.msra.mxu0 %v1308
        %1312 = vmatprep.subr.bf16.mxu0 0
        %1313 = vmatpush1.bf16.msra.mxu0 0
        %1314 = vmatprep.subr.bf16.mxu0 0
        %1315 = vmatpush1.bf16.msra.mxu0 0
        %1316 = vmatprep.subr.bf16.mxu0 0
        %1317 = vmatpush1.bf16.msra.mxu0 0
        %1318 = vmatprep.subr.bf16.mxu0 0
        %1319 = vmatpush1.bf16.msra.mxu0 0
        %1320 = vmatprep.subr.bf16.mxu0 0
        %1321 = vmatpush1.bf16.msra.mxu0 0
        %1322 = vmatprep.subr.bf16.mxu0 0
        %1323 = vmatpush1.bf16.msra.mxu0 0
        %1324 = vmatprep.subr.bf16.mxu0 0
        %1325 = vmatpush1.bf16.msra.mxu0 0
        %1326 = vmatprep.subr.bf16.mxu0 0
        %1327 = vmatpush1.bf16.msra.mxu0 0
        %1328 = vmatprep.subr.bf16.mxu0 0
        %1329 = vmatpush1.bf16.msra.mxu0 0
        %1330 = vmatprep.subr.bf16.mxu0 0
        %1331 = vmatpush1.bf16.msra.mxu0 0
        %1332 = vmatprep.subr.bf16.mxu0 0
        %1333 = vmatpush1.bf16.msra.mxu0 0
        %1334 = vmatprep.subr.bf16.mxu0 0
        %1335 = vmatpush1.bf16.msra.mxu0 0
        %1336 = vmatprep.subr.bf16.mxu0 0
        %1337 = vmatpush1.bf16.msra.mxu0 0
        %1338 = vmatprep.subr.bf16.mxu0 0
        %1339 = vmatpush1.bf16.msra.mxu0 0
        %1340 = vmatprep.subr.bf16.mxu0 0
        %1341 = vmatpush1.bf16.msra.mxu0 0
        %1342 = vmatprep.mubr.bf16.mxu0 0
        %1343 = vmatmul.mubr.bf16.gmra.mrb[0].mxu0 %v1305
        %v1344 = vpop.f32.mrb[0].mxu0
        %v1345 = vadd.f32 0.0, %v1344
        %v1346 = vpop.f32.mrb[0].mxu0
        %v1347 = vpop.f32.mrb[0].mxu0
        %v1348 = vpop.f32.mrb[0].mxu0
        %1349 = vdwg.mxu0
        %1350 = vrot.lane.b32.xlu0 %v884, 104
        %v1351 = vpop.permute.xlu0 %1350
        %1352 = vrot.lane.b32.xlu0 %v948, 104
        %v1353 = vpop.permute.xlu0 %1352
        %v1355 = vsel %vm1013, %v1351, 0
        %v1358 = vsel %vm1013, %v1353, 0
        %1360 = vmatprep.subr.bf16.mxu0 0
        %1361 = vmatpush1.bf16.xpose.msra.mxu0 %v1358
        %1362 = vmatprep.subr.bf16.mxu0 0
        %1363 = vmatpush1.bf16.xpose.msra.mxu0 0
        %1364 = vmatprep.subr.bf16.mxu0 0
        %1365 = vmatpush1.bf16.xpose.msra.mxu0 0
        %1366 = vmatprep.subr.bf16.mxu0 0
        %1367 = vmatpush1.bf16.xpose.msra.mxu0 0
        %1368 = vmatprep.subr.bf16.mxu0 0
        %1369 = vmatpush1.bf16.xpose.msra.mxu0 0
        %1370 = vmatprep.subr.bf16.mxu0 0
        %1371 = vmatpush1.bf16.xpose.msra.mxu0 0
        %1372 = vmatprep.subr.bf16.mxu0 0
        %1373 = vmatpush1.bf16.xpose.msra.mxu0 0
        %1374 = vmatprep.subr.bf16.mxu0 0
        %1375 = vmatpush1.bf16.xpose.msra.mxu0 0
        %1376 = vmatprep.subr.bf16.mxu0 0
        %1377 = vmatpush1.bf16.xpose.msra.mxu0 0
        %1378 = vmatprep.subr.bf16.mxu0 0
        %1379 = vmatpush1.bf16.xpose.msra.mxu0 0
        %1380 = vmatprep.subr.bf16.mxu0 0
        %1381 = vmatpush1.bf16.xpose.msra.mxu0 0
        %1382 = vmatprep.subr.bf16.mxu0 0
        %1383 = vmatpush1.bf16.xpose.msra.mxu0 0
        %1384 = vmatprep.subr.bf16.mxu0 0
        %1385 = vmatpush1.bf16.xpose.msra.mxu0 0
        %1386 = vmatprep.subr.bf16.mxu0 0
        %1387 = vmatpush1.bf16.xpose.msra.mxu0 0
        %1388 = vmatprep.subr.bf16.mxu0 0
        %1389 = vmatpush1.bf16.xpose.msra.mxu0 0
        %1390 = vmatprep.subr.bf16.mxu0 0
        %1391 = vmatpush1.bf16.xpose.msra.mxu0 0
        %1392 = vmatprep.mubr.bf16.mxu0 0
        %1393 = vmatmul.mubr.bf16.gmra.mrb[0].mxu0 %v1355
        %v1394 = vpop.f32.mrb[0].mxu0
        %v1395 = vadd.f32 0.0, %v1394
        %v1396 = vpop.f32.mrb[0].mxu0
        %v1397 = vpop.f32.mrb[0].mxu0
        %v1398 = vpop.f32.mrb[0].mxu0
        %1399 = vdwg.mxu0
        %v1400 = vmul.f32 %v1395, 0.35355338
        %v1401 = vsel %vm1013, %v1400, -inf
        %1402 = vmax.xlane.f32.xlu0 %v1401
        %v1403 = vpop.xlane.xlu0 %1402
        %v1404 = vsub.f32 %v1400, %v1403
        %v1405 = vmul.f32 %v1404, 1.442695
        %v1406 = vpow.pop %v1405
        %v1407 = vsel %vm1013, %v1406, 0.0
        %1408 = vadd.xlane.f32.xlu0 %v1407
        %v1409 = vpop.xlane.xlu0 %1408
        %v1410 = vrcp.pop %v1409
        %v1411 = vmul.f32 %v1406, %v1410
        %s1412 = scalar_lea.vmem %s813, 24 [#allocation30]
        %1413 = vst.msk [vmem:[%s1412] sm:$0xff] %vm1013, %v1411
        %v1414 = vpack.c.bf16 %v1411, %v1411
        %1415 = vrot.lane.b32.xlu0 %v1012, 104
        %v1416 = vpop.permute.xlu0 %1415
        %v1418 = vsel %vm1013, %v1414, 0
        %v1421 = vsel %vm1077, %v1416, 0
        %1423 = vmatprep.subr.bf16.mxu0 0
        %1424 = vmatpush1.bf16.msra.mxu0 %v1421
        %1425 = vmatprep.subr.bf16.mxu0 0
        %1426 = vmatpush1.bf16.msra.mxu0 0
        %1427 = vmatprep.subr.bf16.mxu0 0
        %1428 = vmatpush1.bf16.msra.mxu0 0
        %1429 = vmatprep.subr.bf16.mxu0 0
        %1430 = vmatpush1.bf16.msra.mxu0 0
        %1431 = vmatprep.subr.bf16.mxu0 0
        %1432 = vmatpush1.bf16.msra.mxu0 0
        %1433 = vmatprep.subr.bf16.mxu0 0
        %1434 = vmatpush1.bf16.msra.mxu0 0
        %1435 = vmatprep.subr.bf16.mxu0 0
        %1436 = vmatpush1.bf16.msra.mxu0 0
        %1437 = vmatprep.subr.bf16.mxu0 0
        %1438 = vmatpush1.bf16.msra.mxu0 0
        %1439 = vmatprep.subr.bf16.mxu0 0
        %1440 = vmatpush1.bf16.msra.mxu0 0
        %1441 = vmatprep.subr.bf16.mxu0 0
        %1442 = vmatpush1.bf16.msra.mxu0 0
        %1443 = vmatprep.subr.bf16.mxu0 0
        %1444 = vmatpush1.bf16.msra.mxu0 0
        %1445 = vmatprep.subr.bf16.mxu0 0
        %1446 = vmatpush1.bf16.msra.mxu0 0
        %1447 = vmatprep.subr.bf16.mxu0 0
        %1448 = vmatpush1.bf16.msra.mxu0 0
        %1449 = vmatprep.subr.bf16.mxu0 0
        %1450 = vmatpush1.bf16.msra.mxu0 0
        %1451 = vmatprep.subr.bf16.mxu0 0
        %1452 = vmatpush1.bf16.msra.mxu0 0
        %1453 = vmatprep.subr.bf16.mxu0 0
        %1454 = vmatpush1.bf16.msra.mxu0 0
        %1455 = vmatprep.mubr.bf16.mxu0 0
        %1456 = vmatmul.mubr.bf16.gmra.mrb[0].mxu0 %v1418
        %v1457 = vpop.f32.mrb[0].mxu0
        %v1458 = vadd.f32 0.0, %v1457
        %v1459 = vpop.f32.mrb[0].mxu0
        %v1460 = vpop.f32.mrb[0].mxu0
        %v1461 = vpop.f32.mrb[0].mxu0
        %1462 = vdwg.mxu0
        %1464 = vrot.lane.b32.xlu0 %v1232, 8
        %v1465 = vpop.permute.xlu0 %1464
        %1468 = vrot.lane.b32.xlu0 %v1345, 16
        %v1469 = vpop.permute.xlu0 %1468
        %1472 = vrot.lane.b32.xlu0 %v1458, 24
        %v1473 = vpop.permute.xlu0 %1472
        %v1475 = vsel %vm1013, %v1116, %v1465
        %vm1476 = vcmask 130048
        %v1477 = vsel %vm1476, %v1475, %v1469
        %vm1478 = vcmask 195584
        %v1479 = vsel %vm1478, %v1477, %v1473
        %v1480 = vpack.c.bf16 %v1479, %v1479
        %v1481 = vld [vmem:[#allocation14] sm:$0xf]
        %v1482 = vld [vmem:[#allocation14 + $0x4] sm:$0xf]
        %v1483 = vld [vmem:[#allocation14 + $0x8] sm:$0xf]
        %v1484 = vld [vmem:[#allocation14 + $0xc] sm:$0xf]
        %v1485 = vld [vmem:[#allocation16] sm:$0x1]
        %v1487 = vlaneseq
        %v1488 = vshrl.u32 %v1487, 7
        %v1489 = vsub.s32 0, %v1488
        %v1490 = vrot.slane %v1485, %v1489
        %v1496 = vunpack.c.l.b16 %v1481
        %v1497 = vunpack.c.l.b16 %v1482
        %v1498 = vunpack.c.l.b16 %v1483
        %v1499 = vunpack.c.l.b16 %v1484
        %v1500 = vpack.c.b16 %v1497, %v1496
        %v1501 = vpack.c.b16 %v1499, %v1498
        %v1505 = vsel %vm840, %v1480, 0
        %1507 = vmatprep.subr.bf16.mxu0 0
        %1508 = vmatpush1.bf16.msra.mxu0 %v1500
        %1509 = vmatprep.subr.bf16.mxu0 0
        %1510 = vmatpush1.bf16.msra.mxu0 %v1501
        %1511 = vmatprep.subr.bf16.mxu0 0
        %1512 = vmatpush1.bf16.msra.mxu0 0
        %1513 = vmatprep.subr.bf16.mxu0 0
        %1514 = vmatpush1.bf16.msra.mxu0 0
        %1515 = vmatprep.subr.bf16.mxu0 0
        %1516 = vmatpush1.bf16.msra.mxu0 0
        %1517 = vmatprep.subr.bf16.mxu0 0
        %1518 = vmatpush1.bf16.msra.mxu0 0
        %1519 = vmatprep.subr.bf16.mxu0 0
        %1520 = vmatpush1.bf16.msra.mxu0 0
        %1521 = vmatprep.subr.bf16.mxu0 0
        %1522 = vmatpush1.bf16.msra.mxu0 0
        %1523 = vmatprep.subr.bf16.mxu0 0
        %1524 = vmatpush1.bf16.msra.mxu0 0
        %1525 = vmatprep.subr.bf16.mxu0 0
        %1526 = vmatpush1.bf16.msra.mxu0 0
        %1527 = vmatprep.subr.bf16.mxu0 0
        %1528 = vmatpush1.bf16.msra.mxu0 0
        %1529 = vmatprep.subr.bf16.mxu0 0
        %1530 = vmatpush1.bf16.msra.mxu0 0
        %1531 = vmatprep.subr.bf16.mxu0 0
        %1532 = vmatpush1.bf16.msra.mxu0 0
        %1533 = vmatprep.subr.bf16.mxu0 0
        %1534 = vmatpush1.bf16.msra.mxu0 0
        %1535 = vmatprep.subr.bf16.mxu0 0
        %1536 = vmatpush1.bf16.msra.mxu0 0
        %1537 = vmatprep.subr.bf16.mxu0 0
        %1538 = vmatpush1.bf16.msra.mxu0 0
        %1539 = vmatprep.mubr.bf16.mxu0 0
        %1540 = vmatmul.mubr.bf16.gmra.mrb[0].mxu0 %v1505
        %v1541 = vpop.f32.mrb[0].mxu0
        %v1542 = vadd.f32 %v1490, %v1541
        %v1543 = vpop.f32.mrb[0].mxu0
        %v1544 = vpop.f32.mrb[0].mxu0
        %v1545 = vpop.f32.mrb[0].mxu0
        %1546 = vdwg.mxu0
        %v1547 = vadd.f32 %v1542, %v815
        %v1548 = vld [vmem:[#allocation17] sm:$0x1]
        %v1549 = vld [vmem:[#allocation19] sm:$0x1]
        %v1550 = vsel %vm840, %v1547, 0.0
        %1551 = vadd.xlane.f32.xlu0 %v1550
        %v1552 = vpop.xlane.xlu0 %1551
        %v1553 = vrcp.pop 32.0
        %v1554 = vmul.f32 %v1552, %v1553
        %v1555 = vsub.f32 %v1547, %v1554
        %v1556 = vmul.f32 %v1555, %v1555
        %v1557 = vsel %vm840, %v1556, 0.0
        %1558 = vadd.xlane.f32.xlu0 %v1557
        %v1559 = vpop.xlane.xlu0 %1558
        %v1560 = vmul.f32 %v1559, %v1553
        %v1561 = vadd.f32 %v1560, 1e-06
        %v1562 = vrsqrt.pop %v1561
        %v1563 = vmul.f32 %v1555, %v1562
        %v1565 = vlaneseq
        %v1566 = vshrl.u32 %v1565, 7
        %v1567 = vsub.s32 0, %v1566
        %v1568 = vrot.slane %v1548, %v1567
        %v1570 = vmul.f32 %v1563, %v1568
        %v1572 = vlaneseq
        %v1573 = vshrl.u32 %v1572, 7
        %v1574 = vsub.s32 0, %v1573
        %v1575 = vrot.slane %v1549, %v1574
        %v1577 = vadd.f32 %v1570, %v1575
        %v1578 = vpack.c.bf16 %v1577, %v1577
        %v1579 = vld [vmem:[#allocation20] sm:$0xf]
        %v1580 = vld [vmem:[#allocation20 + $0x4] sm:$0xf]
        %v1581 = vld [vmem:[#allocation20 + $0x8] sm:$0xf]
        %v1582 = vld [vmem:[#allocation20 + $0xc] sm:$0xf]
        %v1583 = vld [vmem:[#allocation22] sm:$0x1]
        %v1585 = vlaneseq
        %v1586 = vshrl.u32 %v1585, 7
        %v1587 = vsub.s32 0, %v1586
        %v1588 = vrot.slane %v1583, %v1587
        %v1594 = vunpack.c.l.b16 %v1579
        %v1595 = vunpack.c.l.b16 %v1580
        %v1596 = vunpack.c.l.b16 %v1581
        %v1597 = vunpack.c.l.b16 %v1582
        %v1598 = vpack.c.b16 %v1595, %v1594
        %v1599 = vpack.c.b16 %v1597, %v1596
        %v1603 = vsel %vm840, %v1578, 0
        %1605 = vmatprep.subr.bf16.mxu0 0
        %1606 = vmatpush1.bf16.msra.mxu0 %v1598
        %1607 = vmatprep.subr.bf16.mxu0 0
        %1608 = vmatpush1.bf16.msra.mxu0 %v1599
        %1609 = vmatprep.subr.bf16.mxu0 0
        %1610 = vmatpush1.bf16.msra.mxu0 0
        %1611 = vmatprep.subr.bf16.mxu0 0
        %1612 = vmatpush1.bf16.msra.mxu0 0
        %1613 = vmatprep.subr.bf16.mxu0 0
        %1614 = vmatpush1.bf16.msra.mxu0 0
        %1615 = vmatprep.subr.bf16.mxu0 0
        %1616 = vmatpush1.bf16.msra.mxu0 0
        %1617 = vmatprep.subr.bf16.mxu0 0
        %1618 = vmatpush1.bf16.msra.mxu0 0
        %1619 = vmatprep.subr.bf16.mxu0 0
        %1620 = vmatpush1.bf16.msra.mxu0 0
        %1621 = vmatprep.subr.bf16.mxu0 0
        %1622 = vmatpush1.bf16.msra.mxu0 0
        %1623 = vmatprep.subr.bf16.mxu0 0
        %1624 = vmatpush1.bf16.msra.mxu0 0
        %1625 = vmatprep.subr.bf16.mxu0 0
        %1626 = vmatpush1.bf16.msra.mxu0 0
        %1627 = vmatprep.subr.bf16.mxu0 0
        %1628 = vmatpush1.bf16.msra.mxu0 0
        %1629 = vmatprep.subr.bf16.mxu0 0
        %1630 = vmatpush1.bf16.msra.mxu0 0
        %1631 = vmatprep.subr.bf16.mxu0 0
        %1632 = vmatpush1.bf16.msra.mxu0 0
        %1633 = vmatprep.subr.bf16.mxu0 0
        %1634 = vmatpush1.bf16.msra.mxu0 0
        %1635 = vmatprep.subr.bf16.mxu0 0
        %1636 = vmatpush1.bf16.msra.mxu0 0
        %1637 = vmatprep.mubr.bf16.mxu0 0
        %1638 = vmatmul.mubr.bf16.gmra.mrb[0].mxu0 %v1603
        %v1639 = vpop.f32.mrb[0].mxu0
        %v1640 = vadd.f32 %v1588, %v1639
        %v1641 = vpop.f32.mrb[0].mxu0
        %v1642 = vpop.f32.mrb[0].mxu0
        %v1643 = vpop.f32.mrb[0].mxu0
        %1644 = vdwg.mxu0
        %v1645 = vmax.f32 %v1640, 0.0
        %v1646 = vpack.c.bf16 %v1645, %v1645
        %v1647 = vld [vmem:[#allocation23] sm:$0xf]
        %v1648 = vld [vmem:[#allocation23 + $0x4] sm:$0xf]
        %v1649 = vld [vmem:[#allocation23 + $0x8] sm:$0xf]
        %v1650 = vld [vmem:[#allocation23 + $0xc] sm:$0xf]
        %v1651 = vld [vmem:[#allocation23 + $0x10] sm:$0xf]
        %v1652 = vld [vmem:[#allocation23 + $0x14] sm:$0xf]
        %v1653 = vld [vmem:[#allocation23 + $0x18] sm:$0xf]
        %v1654 = vld [vmem:[#allocation23 + $0x1c] sm:$0xf]
        %v1655 = vld [vmem:[#allocation25] sm:$0x1]
        %v1657 = vlaneseq
        %v1658 = vshrl.u32 %v1657, 7
        %v1659 = vsub.s32 0, %v1658
        %v1660 = vrot.slane %v1655, %v1659
        %v1670 = vunpack.c.l.b16 %v1647
        %v1671 = vunpack.c.l.b16 %v1648
        %v1672 = vunpack.c.l.b16 %v1649
        %v1673 = vunpack.c.l.b16 %v1650
        %v1674 = vunpack.c.l.b16 %v1651
        %v1675 = vunpack.c.l.b16 %v1652
        %v1676 = vunpack.c.l.b16 %v1653
        %v1677 = vunpack.c.l.b16 %v1654
        %v1678 = vpack.c.b16 %v1671, %v1670
        %v1679 = vpack.c.b16 %v1673, %v1672
        %v1680 = vpack.c.b16 %v1675, %v1674
        %v1681 = vpack.c.b16 %v1677, %v1676
        %vm1686 = vcmask 523264
        %v1688 = vsel %vm1686, %v1646, 0
        %1690 = vmatprep.subr.bf16.mxu0 0
        %1691 = vmatpush1.bf16.msra.mxu0 %v1678
        %1692 = vmatprep.subr.bf16.mxu0 0
        %1693 = vmatpush1.bf16.msra.mxu0 %v1679
        %1694 = vmatprep.subr.bf16.mxu0 0
        %1695 = vmatpush1.bf16.msra.mxu0 %v1680
        %1696 = vmatprep.subr.bf16.mxu0 0
        %1697 = vmatpush1.bf16.msra.mxu0 %v1681
        %1698 = vmatprep.subr.bf16.mxu0 0
        %1699 = vmatpush1.bf16.msra.mxu0 0
        %1700 = vmatprep.subr.bf16.mxu0 0
        %1701 = vmatpush1.bf16.msra.mxu0 0
        %1702 = vmatprep.subr.bf16.mxu0 0
        %1703 = vmatpush1.bf16.msra.mxu0 0
        %1704 = vmatprep.subr.bf16.mxu0 0
        %1705 = vmatpush1.bf16.msra.mxu0 0
        %1706 = vmatprep.subr.bf16.mxu0 0
        %1707 = vmatpush1.bf16.msra.mxu0 0
        %1708 = vmatprep.subr.bf16.mxu0 0
        %1709 = vmatpush1.bf16.msra.mxu0 0
        %1710 = vmatprep.subr.bf16.mxu0 0
        %1711 = vmatpush1.bf16.msra.mxu0 0
        %1712 = vmatprep.subr.bf16.mxu0 0
        %1713 = vmatpush1.bf16.msra.mxu0 0
        %1714 = vmatprep.subr.bf16.mxu0 0
        %1715 = vmatpush1.bf16.msra.mxu0 0
        %1716 = vmatprep.subr.bf16.mxu0 0
        %1717 = vmatpush1.bf16.msra.mxu0 0
        %1718 = vmatprep.subr.bf16.mxu0 0
        %1719 = vmatpush1.bf16.msra.mxu0 0
        %1720 = vmatprep.subr.bf16.mxu0 0
        %1721 = vmatpush1.bf16.msra.mxu0 0
        %1722 = vmatprep.mubr.bf16.mxu0 0
        %1723 = vmatmul.mubr.bf16.gmra.mrb[0].mxu0 %v1688
        %v1724 = vpop.f32.mrb[0].mxu0
        %v1725 = vadd.f32 %v1660, %v1724
        %v1726 = vpop.f32.mrb[0].mxu0
        %v1727 = vpop.f32.mrb[0].mxu0
        %v1728 = vpop.f32.mrb[0].mxu0
        %1729 = vdwg.mxu0
        %v1730 = vadd.f32 %v1725, %v1577
        %v1731 = vld [vmem:[#allocation26] sm:$0x1]
        %v1732 = vld [vmem:[#allocation28] sm:$0x1]
        %v1733 = vsel %vm840, %v1730, 0.0
        %1734 = vadd.xlane.f32.xlu0 %v1733
        %v1735 = vpop.xlane.xlu0 %1734
        %v1736 = vmul.f32 %v1735, %v1553
        %v1737 = vsub.f32 %v1730, %v1736
        %v1738 = vmul.f32 %v1737, %v1737
        %v1739 = vsel %vm840, %v1738, 0.0
        %1740 = vadd.xlane.f32.xlu0 %v1739
        %v1741 = vpop.xlane.xlu0 %1740
        %v1742 = vmul.f32 %v1741, %v1553
        %v1743 = vadd.f32 %v1742, 1e-06
        %v1744 = vrsqrt.pop %v1743
        %v1745 = vmul.f32 %v1737, %v1744
        %v1747 = vlaneseq
        %v1748 = vshrl.u32 %v1747, 7
        %v1749 = vsub.s32 0, %v1748
        %v1750 = vrot.slane %v1731, %v1749
        %v1752 = vmul.f32 %v1745, %v1750
        %v1754 = vlaneseq
        %v1755 = vshrl.u32 %v1754, 7
        %v1756 = vsub.s32 0, %v1755
        %v1757 = vrot.slane %v1732, %v1756
        %v1759 = vadd.f32 %v1752, %v1757
        %1760 = vst.msk [vmem:[%s806] sm:$0xff] %vm840, %v1759
        %s1761 = sand.u32 %s417, 1
        %s1762 = scalar_lea.sflag [#allocation4], %s1761
        %s1763 = sand.u32 %s417, 1
        %s1764 = smul.addr %s1763, 8
        %s1765 = scalar_lea.vmem [#allocation29], %s1764
        %s1766 = sand.u32 %s443, 1
        %s1767 = scalar_lea.sflag [#allocation31], %s1766
        %s1768 = sand.u32 %s443, 1
        %s1769 = smul.addr %s1768, 32
        %s1770 = scalar_lea.vmem [#allocation30], %s1769
        // Predicated region
        $region157: #{tpu_custom_call.1} parent=87 // pred_check
          %p1771 = pneg %p427
        $region158: #{tpu_custom_call.1} parent=87 // pred_check_branch
          %1773 = sbr.rel (%p1771) target = $region160
        $region159: #{tpu_custom_call.1} parent=87 // pred_region
          %s1775 = ssub.s32 128, 128
          %1776 = vsyncadd %s1762, %s1775
          %s1777 = smul.addr %s47, 128
          %s1778 = scalar_lea.hbm %s17, %s1777
          %s1780 = sshll.u32 %s1765, 4
          %s1781 = int_to_ptr.vmem [resolvable:$true] %s1780
          %1783 = dma.vmem_to_hbm [thread:$0]  %s1781, 128, %s1778, %s1762
        $region160: #{tpu_custom_call.1} parent=87 // pred_fallthru
          _
        // Predicated region
        $region161: #{tpu_custom_call.1} parent=87 // pred_check
          %p1784 = pneg %p453
        $region162: #{tpu_custom_call.1} parent=87 // pred_check_branch
          %1786 = sbr.rel (%p1784) target = $region164
        $region163: #{tpu_custom_call.1} parent=87 // pred_region
          %s1788 = ssub.s32 512, 512
          %1789 = vsyncadd %s1767, %s1788
          %s1790 = smul.addr %s47, 4
          %s1791 = smul.addr %s1790, 128
          %s1792 = scalar_lea.hbm %s18, %s1791
          %s1793 = sshll.u32 %s1770, 4
          %s1794 = int_to_ptr.vmem [resolvable:$true] %s1793
          %1799 = dma.vmem_to_hbm [thread:$0]  %s1794, 512, %s1792, %s1767, 128, 128, 8
        $region164: #{tpu_custom_call.1} parent=87 // pred_fallthru
          _
      $region88: #{tpu_custom_call.1} parent=5 // pred_fallthru
        _
      %p1800 = scmp.le.s32.totalorder 2, %s42
      // Predicated region
      $region165: #{tpu_custom_call.1} parent=5 // pred_check
        %p1801 = pneg %p1800
      $region166: #{tpu_custom_call.1} parent=5 // pred_check_branch
        %1803 = sbr.rel (%p1801) target = $region168
      $region167: #{tpu_custom_call.1} parent=5 // pred_region
        %s1804 = ssub.s32 %s42, 2
        // Predicated region
        $region169: #{tpu_custom_call.1} parent=167 // pred_check
          %p1805 = pneg %p433
        $region170: #{tpu_custom_call.1} parent=167 // pred_check_branch
          %1807 = sbr.rel (%p1805) target = $region172
        $region171: #{tpu_custom_call.1} parent=167 // pred_region
          %s1808 = sand.u32 %s418, 1
          %s1809 = scalar_lea.sflag [#allocation4], %s1808
          %s1810 = sand.u32 %s418, 1
          %s1811 = smul.addr %s1810, 8
          %s1812 = scalar_lea.vmem [#allocation29], %s1811
          %1813 = dma.done %s1809, 128
        $region172: #{tpu_custom_call.1} parent=167 // pred_fallthru
          _
        // Predicated region
        $region173: #{tpu_custom_call.1} parent=167 // pred_check
          %p1814 = pneg %p459
        $region174: #{tpu_custom_call.1} parent=167 // pred_check_branch
          %1816 = sbr.rel (%p1814) target = $region176
        $region175: #{tpu_custom_call.1} parent=167 // pred_region
          %s1817 = sand.u32 %s444, 1
          %s1818 = scalar_lea.sflag [#allocation31], %s1817
          %s1819 = sand.u32 %s444, 1
          %s1820 = smul.addr %s1819, 32
          %s1821 = scalar_lea.vmem [#allocation30], %s1820
          %1822 = dma.done %s1818, 512
        $region176: #{tpu_custom_call.1} parent=167 // pred_fallthru
          _
      $region168: #{tpu_custom_call.1} parent=5 // pred_fallthru
        _
    $region6: #{tpu_custom_call.1} parent=1 // loop_footer
      %s46 = sadd.s32 1, %s42
    $region7: #{tpu_custom_call.1} parent=1 // loop_footer_branch
      %41 = sbr.rel target = $region3
    $region8: #{tpu_custom_call.1} parent=1 // loop_exit
      _
    %1823 = vsyncpa [#allocation3], 1
    %s1824 = scalar_lea.sflag [#allocation3], 1
    %1825 = vsyncpa %s1824, 1
    %1826 = vsyncpa [#allocation6], 1
    %1827 = vsyncpa [#allocation9], 1
    %1828 = vsyncpa [#allocation12], 1
    %1829 = vsyncpa [#allocation15], 1
    %1830 = vsyncpa [#allocation18], 1
    %1831 = vsyncpa [#allocation21], 1
    %1832 = vsyncpa [#allocation24], 1
    %1833 = vsyncpa [#allocation27], 1
    %1834 = vsyncpa [#allocation4], 1
    %s1835 = scalar_lea.sflag [#allocation4], 1
    %1836 = vsyncpa %s1835, 1
    %1837 = vsyncpa [#allocation31], 1
    %s1838 = scalar_lea.sflag [#allocation31], 1
    %1839 = vsyncpa %s1838, 1

// kernel: tpu_custom_call.1
$region0: #{tpu_custom_call.1}
  #allocation0 [shape = 'u32[]', space=smem, size = 0x4, offset = 0x4, fixed_abs, tag = 'smem constant byte address 0x4 - core index']
  #allocation1 [shape = 'u32[144,128]{1,0:T(1,128)}', space=vmem, size = 0x12000, scoped, tag = 'internal scratch']
  %s0 = inlined_call_operand.hbm [shape: f32[2,8,32], index: 0, kind: input, shape index: {}]
  %s1 = inlined_call_operand.hbm [shape: bf16[32,32], index: 1, kind: input, shape index: {}]
  %s2 = inlined_call_operand.hbm [shape: f32[1,32], index: 2, kind: input, shape index: {}]
  %s3 = inlined_call_operand.hbm [shape: bf16[32,32], index: 3, kind: input, shape index: {}]
  %s4 = inlined_call_operand.hbm [shape: f32[1,32], index: 4, kind: input, shape index: {}]
  %s5 = inlined_call_operand.hbm [shape: bf16[32,32], index: 5, kind: input, shape index: {}]
  %s6 = inlined_call_operand.hbm [shape: f32[1,32], index: 6, kind: input, shape index: {}]
  %s7 = inlined_call_operand.hbm [shape: bf16[32,32], index: 7, kind: input, shape index: {}]
  %s8 = inlined_call_operand.hbm [shape: f32[1,32], index: 8, kind: input, shape index: {}]
  %s9 = inlined_call_operand.hbm [shape: f32[1,32], index: 9, kind: input, shape index: {}]
  %s10 = inlined_call_operand.hbm [shape: f32[1,32], index: 10, kind: input, shape index: {}]
  %s11 = inlined_call_operand.hbm [shape: bf16[32,64], index: 11, kind: input, shape index: {}]
  %s12 = inlined_call_operand.hbm [shape: f32[1,64], index: 12, kind: input, shape index: {}]
  %s13 = inlined_call_operand.hbm [shape: bf16[64,32], index: 13, kind: input, shape index: {}]
  %s14 = inlined_call_operand.hbm [shape: f32[1,32], index: 14, kind: input, shape index: {}]
  %s15 = inlined_call_operand.hbm [shape: f32[1,32], index: 15, kind: input, shape index: {}]
  %s16 = inlined_call_operand.hbm [shape: f32[1,32], index: 16, kind: input, shape index: {}]
  %s17 = inlined_call_operand.hbm [shape: f32[2,8,32], index: 17, kind: output, shape index: {0}]
  %s18 = inlined_call_operand.hbm [shape: f32[2,4,8,8], index: 18, kind: output, shape index: {1}]
  %19 = xla_tuple %s17, %s18
  %s20 = sld [smem:[#allocation0]]
  $region177: #{tpu_custom_call.1} parent=0
    _
  %s22 = ssub.s32 1, %s20
  %s23 = scalar_select 0, %s22, %s20
  $region1: #{tpu_custom_call.1} parent=0
    #allocation2 [shape = 'u8[8192]{0}', space=vmem, size = 0x2000, scoped, tag = 'input window, operand 0']
    #allocation3 [shape = 's32[2]{0}', space=sflag, size = 0x8, scoped, tag = 'scoped memory for tpu_custom_call.1']
    #allocation4 [shape = 's32[2]{0}', space=sflag, size = 0x8, scoped, tag = 'scoped memory for tpu_custom_call.1']
    #allocation5 [shape = 'u8[8192]{0}', space=vmem, size = 0x2000, scoped, tag = 'input window, operand 1, single buffered']
    #allocation6 [shape = 's32[1]{0}', space=sflag, size = 0x4, scoped, tag = 'scoped memory for tpu_custom_call.1']
    #allocation7 [shape = 'u8[512]{0}', space=vmem, size = 0x400, scoped, tag = 'input window, operand 2, single buffered']
    #allocation8 [shape = 'u8[8192]{0}', space=vmem, size = 0x2000, scoped, tag = 'input window, operand 3, single buffered']
    #allocation9 [shape = 's32[1]{0}', space=sflag, size = 0x4, scoped, tag = 'scoped memory for tpu_custom_call.1']
    #allocation10 [shape = 'u8[512]{0}', space=vmem, size = 0x400, scoped, tag = 'input window, operand 4, single buffered']
    #allocation11 [shape = 'u8[8192]{0}', space=vmem, size = 0x2000, scoped, tag = 'input window, operand 5, single buffered']
    #allocation12 [shape = 's32[1]{0}', space=sflag, size = 0x4, scoped, tag = 'scoped memory for tpu_custom_call.1']
    #allocation13 [shape = 'u8[512]{0}', space=vmem, size = 0x400, scoped, tag = 'input window, operand 6, single buffered']
    #allocation14 [shape = 'u8[8192]{0}', space=vmem, size = 0x2000, scoped, tag = 'input window, operand 7, single buffered']
    #allocation15 [shape = 's32[1]{0}', space=sflag, size = 0x4, scoped, tag = 'scoped memory for tpu_custom_call.1']
    #allocation16 [shape = 'u8[512]{0}', space=vmem, size = 0x400, scoped, tag = 'input window, operand 8, single buffered']
    #allocation17 [shape = 'u8[512]{0}', space=vmem, size = 0x400, scoped, tag = 'input window, operand 9, single buffered']
    #allocation18 [shape = 's32[1]{0}', space=sflag, size = 0x4, scoped, tag = 'scoped memory for tpu_custom_call.1']
    #allocation19 [shape = 'u8[512]{0}', space=vmem, size = 0x400, scoped, tag = 'input window, operand 10, single buffered']
    #allocation20 [shape = 'u8[8192]{0}', space=vmem, size = 0x2000, scoped, tag = 'input window, operand 11, single buffered']
    #allocation21 [shape = 's32[1]{0}', space=sflag, size = 0x4, scoped, tag = 'scoped memory for tpu_custom_call.1']
    #allocation22 [shape = 'u8[512]{0}', space=vmem, size = 0x400, scoped, tag = 'input window, operand 12, single buffered']
    #allocation23 [shape = 'u8[16384]{0}', space=vmem, size = 0x4000, scoped, tag = 'input window, operand 13, single buffered']
    #allocation24 [shape = 's32[1]{0}', space=sflag, size = 0x4, scoped, tag = 'scoped memory for tpu_custom_call.1']
    #allocation25 [shape = 'u8[512]{0}', space=vmem, size = 0x400, scoped, tag = 'input window, operand 14, single buffered']
    #allocation26 [shape = 'u8[512]{0}', space=vmem, size = 0x400, scoped, tag = 'input window, operand 15, single buffered']
    #allocation27 [shape = 's32[1]{0}', space=sflag, size = 0x4, scoped, tag = 'scoped memory for tpu_custom_call.1']
    #allocation28 [shape = 'u8[512]{0}', space=vmem, size = 0x400, scoped, tag = 'input window, operand 16, single buffered']
    #allocation29 [shape = 'u8[8192]{0}', space=vmem, size = 0x2000, scoped, tag = 'output window, operand 0']
    #allocation30 [shape = 'u8[32768]{0}', space=vmem, size = 0x8000, scoped, tag = 'output window, operand 1']
    #allocation31 [shape = 's32[2]{0}', space=sflag, size = 0x8, scoped, tag = 'scoped memory for tpu_custom_call.1']
    %24 = vsyncpa [#allocation3], 0
    %s25 = scalar_lea.sflag [#allocation3], 1
    %26 = vsyncpa %s25, 0
    %27 = vsyncpa [#allocation6], 0
    %28 = vsyncpa [#allocation9], 0
    %29 = vsyncpa [#allocation12], 0
    %30 = vsyncpa [#allocation15], 0
    %31 = vsyncpa [#allocation18], 0
    %32 = vsyncpa [#allocation21], 0
    %33 = vsyncpa [#allocation24], 0
    %34 = vsyncpa [#allocation27], 0
    %35 = vsyncpa [#allocation4], 0
    %s36 = scalar_lea.sflag [#allocation4], 1
    %37 = vsyncpa %s36, 0
    %38 = vsyncpa [#allocation31], 0
    %s39 = scalar_lea.sflag [#allocation31], 1
    %40 = vsyncpa %s39, 0
    loop: start=0, step=1, limit=4
    $region2: #{tpu_custom_call.1} parent=1 // loop_pre_header
      _
    $region3: #{tpu_custom_call.1} parent=1 // loop_header
      %s42 = sphi 0, %s46
      %p43 = scmp.ge.s32.totalorder %s42, 4
      %s52 = sphi 0, %s54
      %s55 = sphi 0, %s52
      %s56 = sphi 0, %s55
      %s72 = sphi 0, %s56
      %s76 = sphi 0, %s76
      %s78 = sphi 0, %s76
      %s79 = sphi 0, %s78
      %s93 = sphi 0, %s79
      %s97 = sphi 0, %s97
      %s99 = sphi 0, %s97
      %s100 = sphi 0, %s99
      %s114 = sphi 0, %s100
      %s118 = sphi 0, %s118
      %s120 = sphi 0, %s118
      %s121 = sphi 0, %s120
      %s135 = sphi 0, %s121
      %s139 = sphi 0, %s139
      %s141 = sphi 0, %s139
      %s142 = sphi 0, %s141
      %s156 = sphi 0, %s142
      %s160 = sphi 0, %s160
      %s162 = sphi 0, %s160
      %s163 = sphi 0, %s162
      %s177 = sphi 0, %s163
      %s181 = sphi 0, %s181
      %s183 = sphi 0, %s181
      %s184 = sphi 0, %s183
      %s198 = sphi 0, %s184
      %s202 = sphi 0, %s202
      %s204 = sphi 0, %s202
      %s205 = sphi 0, %s204
      %s219 = sphi 0, %s205
      %s223 = sphi 0, %s223
      %s225 = sphi 0, %s223
      %s226 = sphi 0, %s225
      %s240 = sphi 0, %s226
      %s244 = sphi 0, %s244
      %s246 = sphi 0, %s244
      %s247 = sphi 0, %s246
      %s261 = sphi 0, %s247
      %s265 = sphi 0, %s265
      %s267 = sphi 0, %s265
      %s268 = sphi 0, %s267
      %s282 = sphi 0, %s268
      %s286 = sphi 0, %s286
      %s288 = sphi 0, %s286
      %s289 = sphi 0, %s288
      %s303 = sphi 0, %s289
      %s307 = sphi 0, %s307
      %s309 = sphi 0, %s307
      %s310 = sphi 0, %s309
      %s324 = sphi 0, %s310
      %s328 = sphi 0, %s328
      %s330 = sphi 0, %s328
      %s331 = sphi 0, %s330
      %s345 = sphi 0, %s331
      %s349 = sphi 0, %s349
      %s351 = sphi 0, %s349
      %s352 = sphi 0, %s351
      %s366 = sphi 0, %s352
      %s370 = sphi 0, %s370
      %s372 = sphi 0, %s370
      %s373 = sphi 0, %s372
      %s387 = sphi 0, %s373
      %s391 = sphi 0, %s391
      %s393 = sphi 0, %s391
      %s394 = sphi 0, %s393
      %s408 = sphi 0, %s394
      %s414 = sphi 0, %s416
      %s417 = sphi 0, %s414
      %s418 = sphi 0, %s417
      %s434 = sphi 0, %s418
      %s440 = sphi 0, %s442
      %s443 = sphi 0, %s440
      %s444 = sphi 0, %s443
      %s460 = sphi 0, %s444
    $region4: #{tpu_custom_call.1} parent=1 // loop_header_branch
      %45 = sbr.rel (%p43) target = $region8
    $region5: #{tpu_custom_call.1} parent=1 // loop_body
      %s47 = ssub.s32 %s42, 1
      %s48 = ssub.s32 %s42, 2
      %s49 = sadd.s32 %s42, 1
      %s50 = ssub.s32 %s42, %s49
      %p51 = scmp.eq.s32.totalorder %s50, 0
      %s53 = sadd.s32 %s52, 1
      %s54 = scalar_select %p51, %s52, %s53
      %p57 = pneg %p51
      %p58 = scmp.eq.s32.totalorder %s42, 1
      %p59 = por %p57, %p58
      %p60 = scmp.ne.s32.totalorder %s52, %s55
      %p61 = scmp.eq.s32.totalorder %s42, 0
      %p62 = por %p60, %p61
      %p63 = scmp.ne.s32.totalorder %s52, %s55
      %p64 = scmp.eq.s32.totalorder %s47, 1
      %p65 = por %p63, %p64
      %p66 = scmp.ne.s32.totalorder %s55, %s56
      %p67 = scmp.eq.s32.totalorder %s47, 0
      %p68 = por %p66, %p67
      %p69 = scmp.ne.s32.totalorder %s55, %s56
      %p70 = scmp.eq.s32.totalorder %s48, 1
      %p71 = por %p69, %p70
      %p73 = scmp.ne.s32.totalorder %s56, %s72
      %p74 = scmp.eq.s32.totalorder %s48, 0
      %p75 = por %p73, %p74
      %s77 = sadd.s32 %s76, 1
      %p80 = scmp.eq.s32.totalorder %s42, 1
      %p81 = scmp.ne.s32.totalorder %s76, %s78
      %p82 = scmp.eq.s32.totalorder %s42, 0
      %p83 = por %p81, %p82
      %p84 = scmp.ne.s32.totalorder %s76, %s78
      %p85 = scmp.eq.s32.totalorder %s47, 1
      %p86 = por %p84, %p85
      %p87 = scmp.ne.s32.totalorder %s78, %s79
      %p88 = scmp.eq.s32.totalorder %s47, 0
      %p89 = por %p87, %p88
      %p90 = scmp.ne.s32.totalorder %s78, %s79
      %p91 = scmp.eq.s32.totalorder %s48, 1
      %p92 = por %p90, %p91
      %p94 = scmp.ne.s32.totalorder %s79, %s93
      %p95 = scmp.eq.s32.totalorder %s48, 0
      %p96 = por %p94, %p95
      %s98 = sadd.s32 %s97, 1
      %p101 = scmp.eq.s32.totalorder %s42, 1
      %p102 = scmp.ne.s32.totalorder %s97, %s99
      %p103 = scmp.eq.s32.totalorder %s42, 0
      %p104 = por %p102, %p103
      %p105 = scmp.ne.s32.totalorder %s97, %s99
      %p106 = scmp.eq.s32.totalorder %s47, 1
      %p107 = por %p105, %p106
      %p108 = scmp.ne.s32.totalorder %s99, %s100
      %p109 = scmp.eq.s32.totalorder %s47, 0
      %p110 = por %p108, %p109
      %p111 = scmp.ne.s32.totalorder %s99, %s100
      %p112 = scmp.eq.s32.totalorder %s48, 1
      %p113 = por %p111, %p112
      %p115 = scmp.ne.s32.totalorder %s100, %s114
      %p116 = scmp.eq.s32.totalorder %s48, 0
      %p117 = por %p115, %p116
      %s119 = sadd.s32 %s118, 1
      %p122 = scmp.eq.s32.totalorder %s42, 1
      %p123 = scmp.ne.s32.totalorder %s118, %s120
      %p124 = scmp.eq.s32.totalorder %s42, 0
      %p125 = por %p123, %p124
      %p126 = scmp.ne.s32.totalorder %s118, %s120
      %p127 = scmp.eq.s32.totalorder %s47, 1
      %p128 = por %p126, %p127
      %p129 = scmp.ne.s32.totalorder %s120, %s121
      %p130 = scmp.eq.s32.totalorder %s47, 0
      %p131 = por %p129, %p130
      %p132 = scmp.ne.s32.totalorder %s120, %s121
      %p133 = scmp.eq.s32.totalorder %s48, 1
      %p134 = por %p132, %p133
      %p136 = scmp.ne.s32.totalorder %s121, %s135
      %p137 = scmp.eq.s32.totalorder %s48, 0
      %p138 = por %p136, %p137
      %s140 = sadd.s32 %s139, 1
      %p143 = scmp.eq.s32.totalorder %s42, 1
      %p144 = scmp.ne.s32.totalorder %s139, %s141
      %p145 = scmp.eq.s32.totalorder %s42, 0
      %p146 = por %p144, %p145
      %p147 = scmp.ne.s32.totalorder %s139, %s141
      %p148 = scmp.eq.s32.totalorder %s47, 1
      %p149 = por %p147, %p148
      %p150 = scmp.ne.s32.totalorder %s141, %s142
      %p151 = scmp.eq.s32.totalorder %s47, 0
      %p152 = por %p150, %p151
      %p153 = scmp.ne.s32.totalorder %s141, %s142
      %p154 = scmp.eq.s32.totalorder %s48, 1
      %p155 = por %p153, %p154
      %p157 = scmp.ne.s32.totalorder %s142, %s156
      %p158 = scmp.eq.s32.totalorder %s48, 0
      %p159 = por %p157, %p158
      %s161 = sadd.s32 %s160, 1
      %p164 = scmp.eq.s32.totalorder %s42, 1
      %p165 = scmp.ne.s32.totalorder %s160, %s162
      %p166 = scmp.eq.s32.totalorder %s42, 0
      %p167 = por %p165, %p166
      %p168 = scmp.ne.s32.totalorder %s160, %s162
      %p169 = scmp.eq.s32.totalorder %s47, 1
      %p170 = por %p168, %p169
      %p171 = scmp.ne.s32.totalorder %s162, %s163
      %p172 = scmp.eq.s32.totalorder %s47, 0
      %p173 = por %p171, %p172
      %p174 = scmp.ne.s32.totalorder %s162, %s163
      %p175 = scmp.eq.s32.totalorder %s48, 1
      %p176 = por %p174, %p175
      %p178 = scmp.ne.s32.totalorder %s163, %s177
      %p179 = scmp.eq.s32.totalorder %s48, 0
      %p180 = por %p178, %p179
      %s182 = sadd.s32 %s181, 1
      %p185 = scmp.eq.s32.totalorder %s42, 1
      %p186 = scmp.ne.s32.totalorder %s181, %s183
      %p187 = scmp.eq.s32.totalorder %s42, 0
      %p188 = por %p186, %p187
      %p189 = scmp.ne.s32.totalorder %s181, %s183
      %p190 = scmp.eq.s32.totalorder %s47, 1
      %p191 = por %p189, %p190
      %p192 = scmp.ne.s32.totalorder %s183, %s184
      %p193 = scmp.eq.s32.totalorder %s47, 0
      %p194 = por %p192, %p193
      %p195 = scmp.ne.s32.totalorder %s183, %s184
      %p196 = scmp.eq.s32.totalorder %s48, 1
      %p197 = por %p195, %p196
      %p199 = scmp.ne.s32.totalorder %s184, %s198
      %p200 = scmp.eq.s32.totalorder %s48, 0
      %p201 = por %p199, %p200
      %s203 = sadd.s32 %s202, 1
      %p206 = scmp.eq.s32.totalorder %s42, 1
      %p207 = scmp.ne.s32.totalorder %s202, %s204
      %p208 = scmp.eq.s32.totalorder %s42, 0
      %p209 = por %p207, %p208
      %p210 = scmp.ne.s32.totalorder %s202, %s204
      %p211 = scmp.eq.s32.totalorder %s47, 1
      %p212 = por %p210, %p211
      %p213 = scmp.ne.s32.totalorder %s204, %s205
      %p214 = scmp.eq.s32.totalorder %s47, 0
      %p215 = por %p213, %p214
      %p216 = scmp.ne.s32.totalorder %s204, %s205
      %p217 = scmp.eq.s32.totalorder %s48, 1
      %p218 = por %p216, %p217
      %p220 = scmp.ne.s32.totalorder %s205, %s219
      %p221 = scmp.eq.s32.totalorder %s48, 0
      %p222 = por %p220, %p221
      %s224 = sadd.s32 %s223, 1
      %p227 = scmp.eq.s32.totalorder %s42, 1
      %p228 = scmp.ne.s32.totalorder %s223, %s225
      %p229 = scmp.eq.s32.totalorder %s42, 0
      %p230 = por %p228, %p229
      %p231 = scmp.ne.s32.totalorder %s223, %s225
      %p232 = scmp.eq.s32.totalorder %s47, 1
      %p233 = por %p231, %p232
      %p234 = scmp.ne.s32.totalorder %s225, %s226
      %p235 = scmp.eq.s32.totalorder %s47, 0
      %p236 = por %p234, %p235
      %p237 = scmp.ne.s32.totalorder %s225, %s226
      %p238 = scmp.eq.s32.totalorder %s48, 1
      %p239 = por %p237, %p238
      %p241 = scmp.ne.s32.totalorder %s226, %s240
      %p242 = scmp.eq.s32.totalorder %s48, 0
      %p243 = por %p241, %p242
      %s245 = sadd.s32 %s244, 1
      %p248 = scmp.eq.s32.totalorder %s42, 1
      %p249 = scmp.ne.s32.totalorder %s244, %s246
      %p250 = scmp.eq.s32.totalorder %s42, 0
      %p251 = por %p249, %p250
      %p252 = scmp.ne.s32.totalorder %s244, %s246
      %p253 = scmp.eq.s32.totalorder %s47, 1
      %p254 = por %p252, %p253
      %p255 = scmp.ne.s32.totalorder %s246, %s247
      %p256 = scmp.eq.s32.totalorder %s47, 0
      %p257 = por %p255, %p256
      %p258 = scmp.ne.s32.totalorder %s246, %s247
      %p259 = scmp.eq.s32.totalorder %s48, 1
      %p260 = por %p258, %p259
      %p262 = scmp.ne.s32.totalorder %s247, %s261
      %p263 = scmp.eq.s32.totalorder %s48, 0
      %p264 = por %p262, %p263
      %s266 = sadd.s32 %s265, 1
      %p269 = scmp.eq.s32.totalorder %s42, 1
      %p270 = scmp.ne.s32.totalorder %s265, %s267
      %p271 = scmp.eq.s32.totalorder %s42, 0
      %p272 = por %p270, %p271
      %p273 = scmp.ne.s32.totalorder %s265, %s267
      %p274 = scmp.eq.s32.totalorder %s47, 1
      %p275 = por %p273, %p274
      %p276 = scmp.ne.s32.totalorder %s267, %s268
      %p277 = scmp.eq.s32.totalorder %s47, 0
      %p278 = por %p276, %p277
      %p279 = scmp.ne.s32.totalorder %s267, %s268
      %p280 = scmp.eq.s32.totalorder %s48, 1
      %p281 = por %p279, %p280
      %p283 = scmp.ne.s32.totalorder %s268, %s282
      %p284 = scmp.eq.s32.totalorder %s48, 0
      %p285 = por %p283, %p284
      %s287 = sadd.s32 %s286, 1
      %p290 = scmp.eq.s32.totalorder %s42, 1
      %p291 = scmp.ne.s32.totalorder %s286, %s288
      %p292 = scmp.eq.s32.totalorder %s42, 0
      %p293 = por %p291, %p292
      %p294 = scmp.ne.s32.totalorder %s286, %s288
      %p295 = scmp.eq.s32.totalorder %s47, 1
      %p296 = por %p294, %p295
      %p297 = scmp.ne.s32.totalorder %s288, %s289
      %p298 = scmp.eq.s32.totalorder %s47, 0
      %p299 = por %p297, %p298
      %p300 = scmp.ne.s32.totalorder %s288, %s289
      %p301 = scmp.eq.s32.totalorder %s48, 1
      %p302 = por %p300, %p301
      %p304 = scmp.ne.s32.totalorder %s289, %s303
      %p305 = scmp.eq.s32.totalorder %s48, 0
      %p306 = por %p304, %p305
      %s308 = sadd.s32 %s307, 1
      %p311 = scmp.eq.s32.totalorder %s42, 1
      %p312 = scmp.ne.s32.totalorder %s307, %s309
      %p313 = scmp.eq.s32.totalorder %s42, 0
      %p314 = por %p312, %p313
      %p315 = scmp.ne.s32.totalorder %s307, %s309
      %p316 = scmp.eq.s32.totalorder %s47, 1
      %p317 = por %p315, %p316
      %p318 = scmp.ne.s32.totalorder %s309, %s310
      %p319 = scmp.eq.s32.totalorder %s47, 0
      %p320 = por %p318, %p319
      %p321 = scmp.ne.s32.totalorder %s309, %s310
      %p322 = scmp.eq.s32.totalorder %s48, 1
      %p323 = por %p321, %p322
      %p325 = scmp.ne.s32.totalorder %s310, %s324
      %p326 = scmp.eq.s32.totalorder %s48, 0
      %p327 = por %p325, %p326
      %s329 = sadd.s32 %s328, 1
      %p332 = scmp.eq.s32.totalorder %s42, 1
      %p333 = scmp.ne.s32.totalorder %s328, %s330
      %p334 = scmp.eq.s32.totalorder %s42, 0
      %p335 = por %p333, %p334
      %p336 = scmp.ne.s32.totalorder %s328, %s330
      %p337 = scmp.eq.s32.totalorder %s47, 1
      %p338 = por %p336, %p337
      %p339 = scmp.ne.s32.totalorder %s330, %s331
      %p340 = scmp.eq.s32.totalorder %s47, 0
      %p341 = por %p339, %p340
      %p342 = scmp.ne.s32.totalorder %s330, %s331
      %p343 = scmp.eq.s32.totalorder %s48, 1
      %p344 = por %p342, %p343
      %p346 = scmp.ne.s32.totalorder %s331, %s345
      %p347 = scmp.eq.s32.totalorder %s48, 0
      %p348 = por %p346, %p347
      %s350 = sadd.s32 %s349, 1
      %p353 = scmp.eq.s32.totalorder %s42, 1
      %p354 = scmp.ne.s32.totalorder %s349, %s351
      %p355 = scmp.eq.s32.totalorder %s42, 0
      %p356 = por %p354, %p355
      %p357 = scmp.ne.s32.totalorder %s349, %s351
      %p358 = scmp.eq.s32.totalorder %s47, 1
      %p359 = por %p357, %p358
      %p360 = scmp.ne.s32.totalorder %s351, %s352
      %p361 = scmp.eq.s32.totalorder %s47, 0
      %p362 = por %p360, %p361
      %p363 = scmp.ne.s32.totalorder %s351, %s352
      %p364 = scmp.eq.s32.totalorder %s48, 1
      %p365 = por %p363, %p364
      %p367 = scmp.ne.s32.totalorder %s352, %s366
      %p368 = scmp.eq.s32.totalorder %s48, 0
      %p369 = por %p367, %p368
      %s371 = sadd.s32 %s370, 1
      %p374 = scmp.eq.s32.totalorder %s42, 1
      %p375 = scmp.ne.s32.totalorder %s370, %s372
      %p376 = scmp.eq.s32.totalorder %s42, 0
      %p377 = por %p375, %p376
      %p378 = scmp.ne.s32.totalorder %s370, %s372
      %p379 = scmp.eq.s32.totalorder %s47, 1
      %p380 = por %p378, %p379
      %p381 = scmp.ne.s32.totalorder %s372, %s373
      %p382 = scmp.eq.s32.totalorder %s47, 0
      %p383 = por %p381, %p382
      %p384 = scmp.ne.s32.totalorder %s372, %s373
      %p385 = scmp.eq.s32.totalorder %s48, 1
      %p386 = por %p384, %p385
      %p388 = scmp.ne.s32.totalorder %s373, %s387
      %p389 = scmp.eq.s32.totalorder %s48, 0
      %p390 = por %p388, %p389
      %s392 = sadd.s32 %s391, 1
      %p395 = scmp.eq.s32.totalorder %s42, 1
      %p396 = scmp.ne.s32.totalorder %s391, %s393
      %p397 = scmp.eq.s32.totalorder %s42, 0
      %p398 = por %p396, %p397
      %p399 = scmp.ne.s32.totalorder %s391, %s393
      %p400 = scmp.eq.s32.totalorder %s47, 1
      %p401 = por %p399, %p400
      %p402 = scmp.ne.s32.totalorder %s393, %s394
      %p403 = scmp.eq.s32.totalorder %s47, 0
      %p404 = por %p402, %p403
      %p405 = scmp.ne.s32.totalorder %s393, %s394
      %p406 = scmp.eq.s32.totalorder %s48, 1
      %p407 = por %p405, %p406
      %p409 = scmp.ne.s32.totalorder %s394, %s408
      %p410 = scmp.eq.s32.totalorder %s48, 0
      %p411 = por %p409, %p410
      %s412 = ssub.s32 %s42, %s49
      %p413 = scmp.eq.s32.totalorder %s412, 0
      %s415 = sadd.s32 %s414, 1
      %s416 = scalar_select %p413, %s414, %s415
      %p419 = pneg %p413
      %p420 = scmp.eq.s32.totalorder %s42, 1
      %p421 = por %p419, %p420
      %p422 = scmp.ne.s32.totalorder %s414, %s417
      %p423 = scmp.eq.s32.totalorder %s42, 0
      %p424 = por %p422, %p423
      %p425 = scmp.ne.s32.totalorder %s414, %s417
      %p426 = scmp.eq.s32.totalorder %s47, 1
      %p427 = por %p425, %p426
      %p428 = scmp.ne.s32.totalorder %s417, %s418
      %p429 = scmp.eq.s32.totalorder %s47, 0
      %p430 = por %p428, %p429
      %p431 = scmp.ne.s32.totalorder %s417, %s418
      %p432 = scmp.eq.s32.totalorder %s48, 1
      %p433 = por %p431, %p432
      %p435 = scmp.ne.s32.totalorder %s418, %s434
      %p436 = scmp.eq.s32.totalorder %s48, 0
      %p437 = por %p435, %p436
      %s438 = ssub.s32 %s42, %s49
      %p439 = scmp.eq.s32.totalorder %s438, 0
      %s441 = sadd.s32 %s440, 1
      %s442 = scalar_select %p439, %s440, %s441
      %p445 = pneg %p439
      %p446 = scmp.eq.s32.totalorder %s42, 1
      %p447 = por %p445, %p446
      %p448 = scmp.ne.s32.totalorder %s440, %s443
      %p449 = scmp.eq.s32.totalorder %s42, 0
      %p450 = por %p448, %p449
      %p451 = scmp.ne.s32.totalorder %s440, %s443
      %p452 = scmp.eq.s32.totalorder %s47, 1
      %p453 = por %p451, %p452
      %p454 = scmp.ne.s32.totalorder %s443, %s444
      %p455 = scmp.eq.s32.totalorder %s47, 0
      %p456 = por %p454, %p455
      %p457 = scmp.ne.s32.totalorder %s443, %s444
      %p458 = scmp.eq.s32.totalorder %s48, 1
      %p459 = por %p457, %p458
      %p461 = scmp.ne.s32.totalorder %s444, %s460
      %p462 = scmp.eq.s32.totalorder %s48, 0
      %p463 = por %p461, %p462
      %p464 = scmp.le.s32.totalorder 1, %s42
      %p465 = scmp.lt.s32.totalorder %s42, 3
      %p466 = pnand %p464, %p465
      %p467 = pneg %p466
      // Predicated region
      $region9: #{tpu_custom_call.1} parent=5 // pred_check
        _
      $region10: #{tpu_custom_call.1} parent=5 // pred_check_branch
        %469 = sbr.rel (%p466) target = $region12
      $region11: #{tpu_custom_call.1} parent=5 // pred_region
        %s470 = ssub.s32 %s42, 1
        // Predicated region
        $region13: #{tpu_custom_call.1} parent=11 // pred_check
          %p471 = pneg %p89
        $region14: #{tpu_custom_call.1} parent=11 // pred_check_branch
          %473 = sbr.rel (%p471) target = $region16
        $region15: #{tpu_custom_call.1} parent=11 // pred_region
          %s475 = ssub.s32 256, 256
          %476 = vsyncadd [#allocation6], %s475
          %s477 = sshll.u32 [#allocation5], 4
          %s478 = int_to_ptr.vmem [resolvable:$true] %s477
          %483 = dma.hbm_to_vmem [thread:$0]  %s1, 256, %s478, [#allocation6], 64, 64, 4
        $region16: #{tpu_custom_call.1} parent=11 // pred_fallthru
          _
        // Predicated region
        $region17: #{tpu_custom_call.1} parent=11 // pred_check
          %p484 = pneg %p110
        $region18: #{tpu_custom_call.1} parent=11 // pred_check_branch
          %486 = sbr.rel (%p484) target = $region20
        $region19: #{tpu_custom_call.1} parent=11 // pred_region
          %s488 = ssub.s32 16, 16
          %489 = vsyncadd [#allocation6], %s488
          %s491 = sshll.u32 [#allocation7], 4
          %s492 = int_to_ptr.vmem [resolvable:$true] %s491
          %494 = dma.hbm_to_vmem [thread:$0]  %s2, 16, %s492, [#allocation6]
        $region20: #{tpu_custom_call.1} parent=11 // pred_fallthru
          _
        // Predicated region
        $region21: #{tpu_custom_call.1} parent=11 // pred_check
          %p495 = pneg %p131
        $region22: #{tpu_custom_call.1} parent=11 // pred_check_branch
          %497 = sbr.rel (%p495) target = $region24
        $region23: #{tpu_custom_call.1} parent=11 // pred_region
          %s499 = ssub.s32 256, 256
          %500 = vsyncadd [#allocation9], %s499
          %s501 = sshll.u32 [#allocation8], 4
          %s502 = int_to_ptr.vmem [resolvable:$true] %s501
          %507 = dma.hbm_to_vmem [thread:$0]  %s3, 256, %s502, [#allocation9], 64, 64, 4
        $region24: #{tpu_custom_call.1} parent=11 // pred_fallthru
          _
        // Predicated region
        $region25: #{tpu_custom_call.1} parent=11 // pred_check
          %p508 = pneg %p152
        $region26: #{tpu_custom_call.1} parent=11 // pred_check_branch
          %510 = sbr.rel (%p508) target = $region28
        $region27: #{tpu_custom_call.1} parent=11 // pred_region
          %s512 = ssub.s32 16, 16
          %513 = vsyncadd [#allocation9], %s512
          %s515 = sshll.u32 [#allocation10], 4
          %s516 = int_to_ptr.vmem [resolvable:$true] %s515
          %518 = dma.hbm_to_vmem [thread:$0]  %s4, 16, %s516, [#allocation9]
        $region28: #{tpu_custom_call.1} parent=11 // pred_fallthru
          _
        // Predicated region
        $region29: #{tpu_custom_call.1} parent=11 // pred_check
          %p519 = pneg %p173
        $region30: #{tpu_custom_call.1} parent=11 // pred_check_branch
          %521 = sbr.rel (%p519) target = $region32
        $region31: #{tpu_custom_call.1} parent=11 // pred_region
          %s523 = ssub.s32 256, 256
          %524 = vsyncadd [#allocation12], %s523
          %s525 = sshll.u32 [#allocation11], 4
          %s526 = int_to_ptr.vmem [resolvable:$true] %s525
          %531 = dma.hbm_to_vmem [thread:$0]  %s5, 256, %s526, [#allocation12], 64, 64, 4
        $region32: #{tpu_custom_call.1} parent=11 // pred_fallthru
          _
        // Predicated region
        $region33: #{tpu_custom_call.1} parent=11 // pred_check
          %p532 = pneg %p194
        $region34: #{tpu_custom_call.1} parent=11 // pred_check_branch
          %534 = sbr.rel (%p532) target = $region36
        $region35: #{tpu_custom_call.1} parent=11 // pred_region
          %s536 = ssub.s32 16, 16
          %537 = vsyncadd [#allocation12], %s536
          %s539 = sshll.u32 [#allocation13], 4
          %s540 = int_to_ptr.vmem [resolvable:$true] %s539
          %542 = dma.hbm_to_vmem [thread:$0]  %s6, 16, %s540, [#allocation12]
        $region36: #{tpu_custom_call.1} parent=11 // pred_fallthru
          _
        // Predicated region
        $region37: #{tpu_custom_call.1} parent=11 // pred_check
          %p543 = pneg %p215
        $region38: #{tpu_custom_call.1} parent=11 // pred_check_branch
          %545 = sbr.rel (%p543) target = $region40
        $region39: #{tpu_custom_call.1} parent=11 // pred_region
          %s547 = ssub.s32 256, 256
          %548 = vsyncadd [#allocation15], %s547
          %s549 = sshll.u32 [#allocation14], 4
          %s550 = int_to_ptr.vmem [resolvable:$true] %s549
          %555 = dma.hbm_to_vmem [thread:$0]  %s7, 256, %s550, [#allocation15], 64, 64, 4
        $region40: #{tpu_custom_call.1} parent=11 // pred_fallthru
          _
        // Predicated region
        $region41: #{tpu_custom_call.1} parent=11 // pred_check
          %p556 = pneg %p236
        $region42: #{tpu_custom_call.1} parent=11 // pred_check_branch
          %558 = sbr.rel (%p556) target = $region44
        $region43: #{tpu_custom_call.1} parent=11 // pred_region
          %s560 = ssub.s32 16, 16
          %561 = vsyncadd [#allocation15], %s560
          %s563 = sshll.u32 [#allocation16], 4
          %s564 = int_to_ptr.vmem [resolvable:$true] %s563
          %566 = dma.hbm_to_vmem [thread:$0]  %s8, 16, %s564, [#allocation15]
        $region44: #{tpu_custom_call.1} parent=11 // pred_fallthru
          _
        // Predicated region
        $region45: #{tpu_custom_call.1} parent=11 // pred_check
          %p567 = pneg %p257
        $region46: #{tpu_custom_call.1} parent=11 // pred_check_branch
          %569 = sbr.rel (%p567) target = $region48
        $region47: #{tpu_custom_call.1} parent=11 // pred_region
          %s571 = ssub.s32 16, 16
          %572 = vsyncadd [#allocation18], %s571
          %s574 = sshll.u32 [#allocation17], 4
          %s575 = int_to_ptr.vmem [resolvable:$true] %s574
          %577 = dma.hbm_to_vmem [thread:$0]  %s9, 16, %s575, [#allocation18]
        $region48: #{tpu_custom_call.1} parent=11 // pred_fallthru
          _
        // Predicated region
        $region49: #{tpu_custom_call.1} parent=11 // pred_check
          %p578 = pneg %p278
        $region50: #{tpu_custom_call.1} parent=11 // pred_check_branch
          %580 = sbr.rel (%p578) target = $region52
        $region51: #{tpu_custom_call.1} parent=11 // pred_region
          %s582 = ssub.s32 16, 16
          %583 = vsyncadd [#allocation18], %s582
          %s585 = sshll.u32 [#allocation19], 4
          %s586 = int_to_ptr.vmem [resolvable:$true] %s585
          %588 = dma.hbm_to_vmem [thread:$0]  %s10, 16, %s586, [#allocation18]
        $region52: #{tpu_custom_call.1} parent=11 // pred_fallthru
          _
        // Predicated region
        $region53: #{tpu_custom_call.1} parent=11 // pred_check
          %p589 = pneg %p299
        $region54: #{tpu_custom_call.1} parent=11 // pred_check_branch
          %591 = sbr.rel (%p589) target = $region56
        $region55: #{tpu_custom_call.1} parent=11 // pred_region
          %s593 = ssub.s32 256, 256
          %594 = vsyncadd [#allocation21], %s593
          %s595 = sshll.u32 [#allocation20], 4
          %s596 = int_to_ptr.vmem [resolvable:$true] %s595
          %601 = dma.hbm_to_vmem [thread:$0]  %s11, 256, %s596, [#allocation21], 64, 64, 4
        $region56: #{tpu_custom_call.1} parent=11 // pred_fallthru
          _
        // Predicated region
        $region57: #{tpu_custom_call.1} parent=11 // pred_check
          %p602 = pneg %p320
        $region58: #{tpu_custom_call.1} parent=11 // pred_check_branch
          %604 = sbr.rel (%p602) target = $region60
        $region59: #{tpu_custom_call.1} parent=11 // pred_region
          %s606 = ssub.s32 16, 16
          %607 = vsyncadd [#allocation21], %s606
          %s609 = sshll.u32 [#allocation22], 4
          %s610 = int_to_ptr.vmem [resolvable:$true] %s609
          %612 = dma.hbm_to_vmem [thread:$0]  %s12, 16, %s610, [#allocation21]
        $region60: #{tpu_custom_call.1} parent=11 // pred_fallthru
          _
        // Predicated region
        $region61: #{tpu_custom_call.1} parent=11 // pred_check
          %p613 = pneg %p341
        $region62: #{tpu_custom_call.1} parent=11 // pred_check_branch
          %615 = sbr.rel (%p613) target = $region64
        $region63: #{tpu_custom_call.1} parent=11 // pred_region
          %s617 = ssub.s32 512, 512
          %618 = vsyncadd [#allocation24], %s617
          %s619 = sshll.u32 [#allocation23], 4
          %s620 = int_to_ptr.vmem [resolvable:$true] %s619
          %625 = dma.hbm_to_vmem [thread:$0]  %s13, 512, %s620, [#allocation24], 64, 64, 4
        $region64: #{tpu_custom_call.1} parent=11 // pred_fallthru
          _
        // Predicated region
        $region65: #{tpu_custom_call.1} parent=11 // pred_check
          %p626 = pneg %p362
        $region66: #{tpu_custom_call.1} parent=11 // pred_check_branch
          %628 = sbr.rel (%p626) target = $region68
        $region67: #{tpu_custom_call.1} parent=11 // pred_region
          %s630 = ssub.s32 16, 16
          %631 = vsyncadd [#allocation24], %s630
          %s633 = sshll.u32 [#allocation25], 4
          %s634 = int_to_ptr.vmem [resolvable:$true] %s633
          %636 = dma.hbm_to_vmem [thread:$0]  %s14, 16, %s634, [#allocation24]
        $region68: #{tpu_custom_call.1} parent=11 // pred_fallthru
          _
        // Predicated region
        $region69: #{tpu_custom_call.1} parent=11 // pred_check
          %p637 = pneg %p383
        $region70: #{tpu_custom_call.1} parent=11 // pred_check_branch
          %639 = sbr.rel (%p637) target = $region72
        $region71: #{tpu_custom_call.1} parent=11 // pred_region
          %s641 = ssub.s32 16, 16
          %642 = vsyncadd [#allocation27], %s641
          %s644 = sshll.u32 [#allocation26], 4
          %s645 = int_to_ptr.vmem [resolvable:$true] %s644
          %647 = dma.hbm_to_vmem [thread:$0]  %s15, 16, %s645, [#allocation27]
        $region72: #{tpu_custom_call.1} parent=11 // pred_fallthru
          _
        // Predicated region
        $region73: #{tpu_custom_call.1} parent=11 // pred_check
          %p648 = pneg %p404
        $region74: #{tpu_custom_call.1} parent=11 // pred_check_branch
          %650 = sbr.rel (%p648) target = $region76
        $region75: #{tpu_custom_call.1} parent=11 // pred_region
          %s652 = ssub.s32 16, 16
          %653 = vsyncadd [#allocation27], %s652
          %s655 = sshll.u32 [#allocation28], 4
          %s656 = int_to_ptr.vmem [resolvable:$true] %s655
          %658 = dma.hbm_to_vmem [thread:$0]  %s16, 16, %s656, [#allocation27]
        $region76: #{tpu_custom_call.1} parent=11 // pred_fallthru
          _
      $region12: #{tpu_custom_call.1} parent=5 // pred_fallthru
        _
      %p659 = scmp.lt.s32.totalorder %s42, 2
      // Predicated region
      $region77: #{tpu_custom_call.1} parent=5 // pred_check
        %p660 = pneg %p659
      $region78: #{tpu_custom_call.1} parent=5 // pred_check_branch
        %662 = sbr.rel (%p660) target = $region80
      $region79: #{tpu_custom_call.1} parent=5 // pred_region
        // Predicated region
        $region81: #{tpu_custom_call.1} parent=79 // pred_check
          %p663 = pneg %p62
        $region82: #{tpu_custom_call.1} parent=79 // pred_check_branch
          %665 = sbr.rel (%p663) target = $region84
        $region83: #{tpu_custom_call.1} parent=79 // pred_region
          %s666 = sand.u32 %s52, 1
          %s667 = scalar_lea.sflag [#allocation3], %s666
          %s668 = sand.u32 %s52, 1
          %s669 = smul.addr %s668, 8
          %s670 = scalar_lea.vmem [#allocation2], %s669
          %s672 = ssub.s32 128, 128
          %673 = vsyncadd %s667, %s672
          %s674 = smul.addr %s42, 128
          %s675 = scalar_lea.hbm %s0, %s674
          %s677 = sshll.u32 %s670, 4
          %s678 = int_to_ptr.vmem [resolvable:$true] %s677
          %680 = dma.hbm_to_vmem [thread:$0]  %s675, 128, %s678, %s667
        $region84: #{tpu_custom_call.1} parent=79 // pred_fallthru
          _
      $region80: #{tpu_custom_call.1} parent=5 // pred_fallthru
        _
      %p681 = scmp.le.s32.totalorder 1, %s42
      %p682 = scmp.lt.s32.totalorder %s42, 3
      %p683 = pnand %p681, %p682
      %p684 = pneg %p683
      // Predicated region
      $region85: #{tpu_custom_call.1} parent=5 // pred_check
        _
      $region86: #{tpu_custom_call.1} parent=5 // pred_check_branch
        %686 = sbr.rel (%p683) target = $region88
      $region87: #{tpu_custom_call.1} parent=5 // pred_region
        %s687 = ssub.s32 %s42, 1
        %s688 = sand.u32 %s55, 1
        %s689 = scalar_lea.sflag [#allocation3], %s688
        %s690 = sand.u32 %s55, 1
        %s691 = smul.addr %s690, 8
        %s692 = scalar_lea.vmem [#allocation2], %s691
        // Predicated region
        $region89: #{tpu_custom_call.1} parent=87 // pred_check
          %p693 = pneg %p68
        $region90: #{tpu_custom_call.1} parent=87 // pred_check_branch
          %695 = sbr.rel (%p693) target = $region92
        $region91: #{tpu_custom_call.1} parent=87 // pred_region
          %696 = dma.done %s689, 128
        $region92: #{tpu_custom_call.1} parent=87 // pred_fallthru
          _
        // Predicated region
        $region93: #{tpu_custom_call.1} parent=87 // pred_check
          %p697 = pneg %p89
        $region94: #{tpu_custom_call.1} parent=87 // pred_check_branch
          %699 = sbr.rel (%p697) target = $region96
        $region95: #{tpu_custom_call.1} parent=87 // pred_region
          %700 = dma.done [#allocation6], 256
        $region96: #{tpu_custom_call.1} parent=87 // pred_fallthru
          _
        // Predicated region
        $region97: #{tpu_custom_call.1} parent=87 // pred_check
          %p701 = pneg %p110
        $region98: #{tpu_custom_call.1} parent=87 // pred_check_branch
          %703 = sbr.rel (%p701) target = $region100
        $region99: #{tpu_custom_call.1} parent=87 // pred_region
          %704 = dma.done [#allocation6], 16
        $region100: #{tpu_custom_call.1} parent=87 // pred_fallthru
          _
        // Predicated region
        $region101: #{tpu_custom_call.1} parent=87 // pred_check
          %p705 = pneg %p131
        $region102: #{tpu_custom_call.1} parent=87 // pred_check_branch
          %707 = sbr.rel (%p705) target = $region104
        $region103: #{tpu_custom_call.1} parent=87 // pred_region
          %708 = dma.done [#allocation9], 256
        $region104: #{tpu_custom_call.1} parent=87 // pred_fallthru
          _
        // Predicated region
        $region105: #{tpu_custom_call.1} parent=87 // pred_check
          %p709 = pneg %p152
        $region106: #{tpu_custom_call.1} parent=87 // pred_check_branch
          %711 = sbr.rel (%p709) target = $region108
        $region107: #{tpu_custom_call.1} parent=87 // pred_region
          %712 = dma.done [#allocation9], 16
        $region108: #{tpu_custom_call.1} parent=87 // pred_fallthru
          _
        // Predicated region
        $region109: #{tpu_custom_call.1} parent=87 // pred_check
          %p713 = pneg %p173
        $region110: #{tpu_custom_call.1} parent=87 // pred_check_branch
          %715 = sbr.rel (%p713) target = $region112
        $region111: #{tpu_custom_call.1} parent=87 // pred_region
          %716 = dma.done [#allocation12], 256
        $region112: #{tpu_custom_call.1} parent=87 // pred_fallthru
          _
        // Predicated region
        $region113: #{tpu_custom_call.1} parent=87 // pred_check
          %p717 = pneg %p194
        $region114: #{tpu_custom_call.1} parent=87 // pred_check_branch
          %719 = sbr.rel (%p717) target = $region116
        $region115: #{tpu_custom_call.1} parent=87 // pred_region
          %720 = dma.done [#allocation12], 16
        $region116: #{tpu_custom_call.1} parent=87 // pred_fallthru
          _
        // Predicated region
        $region117: #{tpu_custom_call.1} parent=87 // pred_check
          %p721 = pneg %p215
        $region118: #{tpu_custom_call.1} parent=87 // pred_check_branch
          %723 = sbr.rel (%p721) target = $region120
        $region119: #{tpu_custom_call.1} parent=87 // pred_region
          %724 = dma.done [#allocation15], 256
        $region120: #{tpu_custom_call.1} parent=87 // pred_fallthru
          _
        // Predicated region
        $region121: #{tpu_custom_call.1} parent=87 // pred_check
          %p725 = pneg %p236
        $region122: #{tpu_custom_call.1} parent=87 // pred_check_branch
          %727 = sbr.rel (%p725) target = $region124
        $region123: #{tpu_custom_call.1} parent=87 // pred_region
          %728 = dma.done [#allocation15], 16
        $region124: #{tpu_custom_call.1} parent=87 // pred_fallthru
          _
        // Predicated region
        $region125: #{tpu_custom_call.1} parent=87 // pred_check
          %p729 = pneg %p257
        $region126: #{tpu_custom_call.1} parent=87 // pred_check_branch
          %731 = sbr.rel (%p729) target = $region128
        $region127: #{tpu_custom_call.1} parent=87 // pred_region
          %732 = dma.done [#allocation18], 16
        $region128: #{tpu_custom_call.1} parent=87 // pred_fallthru
          _
        // Predicated region
        $region129: #{tpu_custom_call.1} parent=87 // pred_check
          %p733 = pneg %p278
        $region130: #{tpu_custom_call.1} parent=87 // pred_check_branch
          %735 = sbr.rel (%p733) target = $region132
        $region131: #{tpu_custom_call.1} parent=87 // pred_region
          %736 = dma.done [#allocation18], 16
        $region132: #{tpu_custom_call.1} parent=87 // pred_fallthru
          _
        // Predicated region
        $region133: #{tpu_custom_call.1} parent=87 // pred_check
          %p737 = pneg %p299
        $region134: #{tpu_custom_call.1} parent=87 // pred_check_branch
          %739 = sbr.rel (%p737) target = $region136
        $region135: #{tpu_custom_call.1} parent=87 // pred_region
          %740 = dma.done [#allocation21], 256
        $region136: #{tpu_custom_call.1} parent=87 // pred_fallthru
          _
        // Predicated region
        $region137: #{tpu_custom_call.1} parent=87 // pred_check
          %p741 = pneg %p320
        $region138: #{tpu_custom_call.1} parent=87 // pred_check_branch
          %743 = sbr.rel (%p741) target = $region140
        $region139: #{tpu_custom_call.1} parent=87 // pred_region
          %744 = dma.done [#allocation21], 16
        $region140: #{tpu_custom_call.1} parent=87 // pred_fallthru
          _
        // Predicated region
        $region141: #{tpu_custom_call.1} parent=87 // pred_check
          %p745 = pneg %p341
        $region142: #{tpu_custom_call.1} parent=87 // pred_check_branch
          %747 = sbr.rel (%p745) target = $region144
        $region143: #{tpu_custom_call.1} parent=87 // pred_region
          %748 = dma.done [#allocation24], 512
        $region144: #{tpu_custom_call.1} parent=87 // pred_fallthru
          _
        // Predicated region
        $region145: #{tpu_custom_call.1} parent=87 // pred_check
          %p749 = pneg %p362
        $region146: #{tpu_custom_call.1} parent=87 // pred_check_branch
          %751 = sbr.rel (%p749) target = $region148
        $region147: #{tpu_custom_call.1} parent=87 // pred_region
          %752 = dma.done [#allocation24], 16
        $region148: #{tpu_custom_call.1} parent=87 // pred_fallthru
          _
        // Predicated region
        $region149: #{tpu_custom_call.1} parent=87 // pred_check
          %p753 = pneg %p383
        $region150: #{tpu_custom_call.1} parent=87 // pred_check_branch
          %755 = sbr.rel (%p753) target = $region152
        $region151: #{tpu_custom_call.1} parent=87 // pred_region
          %756 = dma.done [#allocation27], 16
        $region152: #{tpu_custom_call.1} parent=87 // pred_fallthru
          _
        // Predicated region
        $region153: #{tpu_custom_call.1} parent=87 // pred_check
          %p757 = pneg %p404
        $region154: #{tpu_custom_call.1} parent=87 // pred_check_branch
          %759 = sbr.rel (%p757) target = $region156
        $region155: #{tpu_custom_call.1} parent=87 // pred_region
          %760 = dma.done [#allocation27], 16
        $region156: #{tpu_custom_call.1} parent=87 // pred_fallthru
          _
        %s761 = sand.u32 %s55, 1
        %s762 = scalar_lea.sflag [#allocation3], %s761
        %s763 = sand.u32 %s55, 1
        %s764 = smul.addr %s763, 8
        %s765 = scalar_lea.vmem [#allocation2], %s764
        %p766 = pneg %p68
        %p767 = pneg %p65
        %p768 = pneg %p89
        %p769 = pneg %p86
        %p770 = pneg %p110
        %p771 = pneg %p107
        %p772 = pneg %p131
        %p773 = pneg %p128
        %p774 = pneg %p152
        %p775 = pneg %p149
        %p776 = pneg %p173
        %p777 = pneg %p170
        %p778 = pneg %p194
        %p779 = pneg %p191
        %p780 = pneg %p215
        %p781 = pneg %p212
        %p782 = pneg %p236
        %p783 = pneg %p233
        %p784 = pneg %p257
        %p785 = pneg %p254
        %p786 = pneg %p278
        %p787 = pneg %p275
        %p788 = pneg %p299
        %p789 = pneg %p296
        %p790 = pneg %p320
        %p791 = pneg %p317
        %p792 = pneg %p341
        %p793 = pneg %p338
        %p794 = pneg %p362
        %p795 = pneg %p359
        %p796 = pneg %p383
        %p797 = pneg %p380
        %p798 = pneg %p404
        %p799 = pneg %p401
        %p800 = pneg %p430
        %p801 = pneg %p427
        %s802 = sand.u32 %s417, 1
        %s803 = scalar_lea.sflag [#allocation4], %s802
        %s804 = sand.u32 %s417, 1
        %s805 = smul.addr %s804, 8
        %s806 = scalar_lea.vmem [#allocation29], %s805
        %p807 = pneg %p456
        %p808 = pneg %p453
        %s809 = sand.u32 %s443, 1
        %s810 = scalar_lea.sflag [#allocation31], %s809
        %s811 = sand.u32 %s443, 1
        %s812 = smul.addr %s811, 32
        %s813 = scalar_lea.vmem [#allocation30], %s812
        %v815 = vld [vmem:[%s692] sm:$0xff]
        %v816 = vpack.c.bf16 %v815, %v815
        %v817 = vld [vmem:[#allocation5] sm:$0xf]
        %v818 = vld [vmem:[#allocation5 + $0x4] sm:$0xf]
        %v819 = vld [vmem:[#allocation5 + $0x8] sm:$0xf]
        %v820 = vld [vmem:[#allocation5 + $0xc] sm:$0xf]
        %v821 = vld [vmem:[#allocation7] sm:$0x1]
        %v823 = vlaneseq
        %v824 = vshrl.u32 %v823, 7
        %v825 = vsub.s32 0, %v824
        %v826 = vrot.slane %v821, %v825
        %v832 = vunpack.c.l.b16 %v817
        %v833 = vunpack.c.l.b16 %v818
        %v834 = vunpack.c.l.b16 %v819
        %v835 = vunpack.c.l.b16 %v820
        %v836 = vpack.c.b16 %v833, %v832
        %v837 = vpack.c.b16 %v835, %v834
        %vm840 = vcmask 261120
        %v842 = vsel %vm840, %v816, 0
        %844 = vmatprep.subr.bf16.mxu0 0
        %845 = vmatpush1.bf16.msra.mxu0 %v836
        %846 = vmatprep.subr.bf16.mxu0 0
        %847 = vmatpush1.bf16.msra.mxu0 %v837
        %848 = vmatprep.subr.bf16.mxu0 0
        %849 = vmatpush1.bf16.msra.mxu0 0
        %850 = vmatprep.subr.bf16.mxu0 0
        %851 = vmatpush1.bf16.msra.mxu0 0
        %852 = vmatprep.subr.bf16.mxu0 0
        %853 = vmatpush1.bf16.msra.mxu0 0
        %854 = vmatprep.subr.bf16.mxu0 0
        %855 = vmatpush1.bf16.msra.mxu0 0
        %856 = vmatprep.subr.bf16.mxu0 0
        %857 = vmatpush1.bf16.msra.mxu0 0
        %858 = vmatprep.subr.bf16.mxu0 0
        %859 = vmatpush1.bf16.msra.mxu0 0
        %860 = vmatprep.subr.bf16.mxu0 0
        %861 = vmatpush1.bf16.msra.mxu0 0
        %862 = vmatprep.subr.bf16.mxu0 0
        %863 = vmatpush1.bf16.msra.mxu0 0
        %864 = vmatprep.subr.bf16.mxu0 0
        %865 = vmatpush1.bf16.msra.mxu0 0
        %866 = vmatprep.subr.bf16.mxu0 0
        %867 = vmatpush1.bf16.msra.mxu0 0
        %868 = vmatprep.subr.bf16.mxu0 0
        %869 = vmatpush1.bf16.msra.mxu0 0
        %870 = vmatprep.subr.bf16.mxu0 0
        %871 = vmatpush1.bf16.msra.mxu0 0
        %872 = vmatprep.subr.bf16.mxu0 0
        %873 = vmatpush1.bf16.msra.mxu0 0
        %874 = vmatprep.subr.bf16.mxu0 0
        %875 = vmatpush1.bf16.msra.mxu0 0
        %876 = vmatprep.mubr.bf16.mxu0 0
        %877 = vmatmul.mubr.bf16.gmra.mrb[0].mxu0 %v842
        %v878 = vpop.f32.mrb[0].mxu0
        %v879 = vadd.f32 %v826, %v878
        %v880 = vpop.f32.mrb[0].mxu0
        %v881 = vpop.f32.mrb[0].mxu0
        %v882 = vpop.f32.mrb[0].mxu0
        %883 = vdwg.mxu0
        %v884 = vpack.c.bf16 %v879, %v879
        %v885 = vld [vmem:[#allocation8] sm:$0xf]
        %v886 = vld [vmem:[#allocation8 + $0x4] sm:$0xf]
        %v887 = vld [vmem:[#allocation8 + $0x8] sm:$0xf]
        %v888 = vld [vmem:[#allocation8 + $0xc] sm:$0xf]
        %v889 = vld [vmem:[#allocation10] sm:$0x1]
        %v891 = vlaneseq
        %v892 = vshrl.u32 %v891, 7
        %v893 = vsub.s32 0, %v892
        %v894 = vrot.slane %v889, %v893
        %v900 = vunpack.c.l.b16 %v885
        %v901 = vunpack.c.l.b16 %v886
        %v902 = vunpack.c.l.b16 %v887
        %v903 = vunpack.c.l.b16 %v888
        %v904 = vpack.c.b16 %v901, %v900
        %v905 = vpack.c.b16 %v903, %v902
        %908 = vmatprep.subr.bf16.mxu0 0
        %909 = vmatpush1.bf16.msra.mxu0 %v904
        %910 = vmatprep.subr.bf16.mxu0 0
        %911 = vmatpush1.bf16.msra.mxu0 %v905
        %912 = vmatprep.subr.bf16.mxu0 0
        %913 = vmatpush1.bf16.msra.mxu0 0
        %914 = vmatprep.subr.bf16.mxu0 0
        %915 = vmatpush1.bf16.msra.mxu0 0
        %916 = vmatprep.subr.bf16.mxu0 0
        %917 = vmatpush1.bf16.msra.mxu0 0
        %918 = vmatprep.subr.bf16.mxu0 0
        %919 = vmatpush1.bf16.msra.mxu0 0
        %920 = vmatprep.subr.bf16.mxu0 0
        %921 = vmatpush1.bf16.msra.mxu0 0
        %922 = vmatprep.subr.bf16.mxu0 0
        %923 = vmatpush1.bf16.msra.mxu0 0
        %924 = vmatprep.subr.bf16.mxu0 0
        %925 = vmatpush1.bf16.msra.mxu0 0
        %926 = vmatprep.subr.bf16.mxu0 0
        %927 = vmatpush1.bf16.msra.mxu0 0
        %928 = vmatprep.subr.bf16.mxu0 0
        %929 = vmatpush1.bf16.msra.mxu0 0
        %930 = vmatprep.subr.bf16.mxu0 0
        %931 = vmatpush1.bf16.msra.mxu0 0
        %932 = vmatprep.subr.bf16.mxu0 0
        %933 = vmatpush1.bf16.msra.mxu0 0
        %934 = vmatprep.subr.bf16.mxu0 0
        %935 = vmatpush1.bf16.msra.mxu0 0
        %936 = vmatprep.subr.bf16.mxu0 0
        %937 = vmatpush1.bf16.msra.mxu0 0
        %938 = vmatprep.subr.bf16.mxu0 0
        %939 = vmatpush1.bf16.msra.mxu0 0
        %940 = vmatprep.mubr.bf16.mxu0 0
        %941 = vmatmul.mubr.bf16.gmra.mrb[0].mxu0 %v842
        %v942 = vpop.f32.mrb[0].mxu0
        %v943 = vadd.f32 %v894, %v942
        %v944 = vpop.f32.mrb[0].mxu0
        %v945 = vpop.f32.mrb[0].mxu0
        %v946 = vpop.f32.mrb[0].mxu0
        %947 = vdwg.mxu0
        %v948 = vpack.c.bf16 %v943, %v943
        %v949 = vld [vmem:[#allocation11] sm:$0xf]
        %v950 = vld [vmem:[#allocation11 + $0x4] sm:$0xf]
        %v951 = vld [vmem:[#allocation11 + $0x8] sm:$0xf]
        %v952 = vld [vmem:[#allocation11 + $0xc] sm:$0xf]
        %v953 = vld [vmem:[#allocation13] sm:$0x1]
        %v955 = vlaneseq
        %v956 = vshrl.u32 %v955, 7
        %v957 = vsub.s32 0, %v956
        %v958 = vrot.slane %v953, %v957
        %v964 = vunpack.c.l.b16 %v949
        %v965 = vunpack.c.l.b16 %v950
        %v966 = vunpack.c.l.b16 %v951
        %v967 = vunpack.c.l.b16 %v952
        %v968 = vpack.c.b16 %v965, %v964
        %v969 = vpack.c.b16 %v967, %v966
        %972 = vmatprep.subr.bf16.mxu0 0
        %973 = vmatpush1.bf16.msra.mxu0 %v968
        %974 = vmatprep.subr.bf16.mxu0 0
        %975 = vmatpush1.bf16.msra.mxu0 %v969
        %976 = vmatprep.subr.bf16.mxu0 0
        %977 = vmatpush1.bf16.msra.mxu0 0
        %978 = vmatprep.subr.bf16.mxu0 0
        %979 = vmatpush1.bf16.msra.mxu0 0
        %980 = vmatprep.subr.bf16.mxu0 0
        %981 = vmatpush1.bf16.msra.mxu0 0
        %982 = vmatprep.subr.bf16.mxu0 0
        %983 = vmatpush1.bf16.msra.mxu0 0
        %984 = vmatprep.subr.bf16.mxu0 0
        %985 = vmatpush1.bf16.msra.mxu0 0
        %986 = vmatprep.subr.bf16.mxu0 0
        %987 = vmatpush1.bf16.msra.mxu0 0
        %988 = vmatprep.subr.bf16.mxu0 0
        %989 = vmatpush1.bf16.msra.mxu0 0
        %990 = vmatprep.subr.bf16.mxu0 0
        %991 = vmatpush1.bf16.msra.mxu0 0
        %992 = vmatprep.subr.bf16.mxu0 0
        %993 = vmatpush1.bf16.msra.mxu0 0
        %994 = vmatprep.subr.bf16.mxu0 0
        %995 = vmatpush1.bf16.msra.mxu0 0
        %996 = vmatprep.subr.bf16.mxu0 0
        %997 = vmatpush1.bf16.msra.mxu0 0
        %998 = vmatprep.subr.bf16.mxu0 0
        %999 = vmatpush1.bf16.msra.mxu0 0
        %1000 = vmatprep.subr.bf16.mxu0 0
        %1001 = vmatpush1.bf16.msra.mxu0 0
        %1002 = vmatprep.subr.bf16.mxu0 0
        %1003 = vmatpush1.bf16.msra.mxu0 0
        %1004 = vmatprep.mubr.bf16.mxu0 0
        %1005 = vmatmul.mubr.bf16.gmra.mrb[0].mxu0 %v842
        %v1006 = vpop.f32.mrb[0].mxu0
        %v1007 = vadd.f32 %v958, %v1006
        %v1008 = vpop.f32.mrb[0].mxu0
        %v1009 = vpop.f32.mrb[0].mxu0
        %v1010 = vpop.f32.mrb[0].mxu0
        %1011 = vdwg.mxu0
        %v1012 = vpack.c.bf16 %v1007, %v1007
        %vm1013 = vcmask 64512
        %v1015 = vsel %vm1013, %v884, 0
        %v1018 = vsel %vm1013, %v948, 0
        %1020 = vmatprep.subr.bf16.mxu0 0
        %1021 = vmatpush1.bf16.xpose.msra.mxu0 %v1018
        %1022 = vmatprep.subr.bf16.mxu0 0
        %1023 = vmatpush1.bf16.xpose.msra.mxu0 0
        %1024 = vmatprep.subr.bf16.mxu0 0
        %1025 = vmatpush1.bf16.xpose.msra.mxu0 0
        %1026 = vmatprep.subr.bf16.mxu0 0
        %1027 = vmatpush1.bf16.xpose.msra.mxu0 0
        %1028 = vmatprep.subr.bf16.mxu0 0
        %1029 = vmatpush1.bf16.xpose.msra.mxu0 0
        %1030 = vmatprep.subr.bf16.mxu0 0
        %1031 = vmatpush1.bf16.xpose.msra.mxu0 0
        %1032 = vmatprep.subr.bf16.mxu0 0
        %1033 = vmatpush1.bf16.xpose.msra.mxu0 0
        %1034 = vmatprep.subr.bf16.mxu0 0
        %1035 = vmatpush1.bf16.xpose.msra.mxu0 0
        %1036 = vmatprep.subr.bf16.mxu0 0
        %1037 = vmatpush1.bf16.xpose.msra.mxu0 0
        %1038 = vmatprep.subr.bf16.mxu0 0
        %1039 = vmatpush1.bf16.xpose.msra.mxu0 0
        %1040 = vmatprep.subr.bf16.mxu0 0
        %1041 = vmatpush1.bf16.xpose.msra.mxu0 0
        %1042 = vmatprep.subr.bf16.mxu0 0
        %1043 = vmatpush1.bf16.xpose.msra.mxu0 0
        %1044 = vmatprep.subr.bf16.mxu0 0
        %1045 = vmatpush1.bf16.xpose.msra.mxu0 0
        %1046 = vmatprep.subr.bf16.mxu0 0
        %1047 = vmatpush1.bf16.xpose.msra.mxu0 0
        %1048 = vmatprep.subr.bf16.mxu0 0
        %1049 = vmatpush1.bf16.xpose.msra.mxu0 0
        %1050 = vmatprep.subr.bf16.mxu0 0
        %1051 = vmatpush1.bf16.xpose.msra.mxu0 0
        %1052 = vmatprep.mubr.bf16.mxu0 0
        %1053 = vmatmul.mubr.bf16.gmra.mrb[0].mxu0 %v1015
        %v1054 = vpop.f32.mrb[0].mxu0
        %v1055 = vadd.f32 0.0, %v1054
        %v1056 = vpop.f32.mrb[0].mxu0
        %v1057 = vpop.f32.mrb[0].mxu0
        %v1058 = vpop.f32.mrb[0].mxu0
        %1059 = vdwg.mxu0
        %v1060 = vmul.f32 %v1055, 0.35355338
        %v1061 = vsel %vm1013, %v1060, -inf
        %1062 = vmax.xlane.f32.xlu0 %v1061
        %v1063 = vpop.xlane.xlu0 %1062
        %v1064 = vsub.f32 %v1060, %v1063
        %v1065 = vmul.f32 %v1064, 1.442695
        %v1066 = vpow.pop %v1065
        %v1067 = vsel %vm1013, %v1066, 0.0
        %1068 = vadd.xlane.f32.xlu0 %v1067
        %v1069 = vpop.xlane.xlu0 %1068
        %v1070 = vrcp.pop %v1069
        %v1071 = vmul.f32 %v1066, %v1070
        %1072 = vst.msk [vmem:[%s813] sm:$0xff] %vm1013, %v1071
        %v1073 = vpack.c.bf16 %v1071, %v1071
        %v1075 = vsel %vm1013, %v1073, 0
        %vm1077 = vcmask 1043456
        %v1079 = vsel %vm1077, %v1012, 0
        %1081 = vmatprep.subr.bf16.mxu0 0
        %1082 = vmatpush1.bf16.msra.mxu0 %v1079
        %1083 = vmatprep.subr.bf16.mxu0 0
        %1084 = vmatpush1.bf16.msra.mxu0 0
        %1085 = vmatprep.subr.bf16.mxu0 0
        %1086 = vmatpush1.bf16.msra.mxu0 0
        %1087 = vmatprep.subr.bf16.mxu0 0
        %1088 = vmatpush1.bf16.msra.mxu0 0
        %1089 = vmatprep.subr.bf16.mxu0 0
        %1090 = vmatpush1.bf16.msra.mxu0 0
        %1091 = vmatprep.subr.bf16.mxu0 0
        %1092 = vmatpush1.bf16.msra.mxu0 0
        %1093 = vmatprep.subr.bf16.mxu0 0
        %1094 = vmatpush1.bf16.msra.mxu0 0
        %1095 = vmatprep.subr.bf16.mxu0 0
        %1096 = vmatpush1.bf16.msra.mxu0 0
        %1097 = vmatprep.subr.bf16.mxu0 0
        %1098 = vmatpush1.bf16.msra.mxu0 0
        %1099 = vmatprep.subr.bf16.mxu0 0
        %1100 = vmatpush1.bf16.msra.mxu0 0
        %1101 = vmatprep.subr.bf16.mxu0 0
        %1102 = vmatpush1.bf16.msra.mxu0 0
        %1103 = vmatprep.subr.bf16.mxu0 0
        %1104 = vmatpush1.bf16.msra.mxu0 0
        %1105 = vmatprep.subr.bf16.mxu0 0
        %1106 = vmatpush1.bf16.msra.mxu0 0
        %1107 = vmatprep.subr.bf16.mxu0 0
        %1108 = vmatpush1.bf16.msra.mxu0 0
        %1109 = vmatprep.subr.bf16.mxu0 0
        %1110 = vmatpush1.bf16.msra.mxu0 0
        %1111 = vmatprep.subr.bf16.mxu0 0
        %1112 = vmatpush1.bf16.msra.mxu0 0
        %1113 = vmatprep.mubr.bf16.mxu0 0
        %1114 = vmatmul.mubr.bf16.gmra.mrb[0].mxu0 %v1075
        %v1115 = vpop.f32.mrb[0].mxu0
        %v1116 = vadd.f32 0.0, %v1115
        %v1117 = vpop.f32.mrb[0].mxu0
        %v1118 = vpop.f32.mrb[0].mxu0
        %v1119 = vpop.f32.mrb[0].mxu0
        %1120 = vdwg.mxu0
        %1122 = vrot.lane.b32.xlu0 %v884, 120
        %v1123 = vpop.permute.xlu0 %1122
        %1125 = vrot.lane.b32.xlu0 %v948, 120
        %v1126 = vpop.permute.xlu0 %1125
        %v1128 = vsel %vm1013, %v1123, 0
        %v1131 = vsel %vm1013, %v1126, 0
        %1133 = vmatprep.subr.bf16.mxu0 0
        %1134 = vmatpush1.bf16.xpose.msra.mxu0 %v1131
        %1135 = vmatprep.subr.bf16.mxu0 0
        %1136 = vmatpush1.bf16.xpose.msra.mxu0 0
        %1137 = vmatprep.subr.bf16.mxu0 0
        %1138 = vmatpush1.bf16.xpose.msra.mxu0 0
        %1139 = vmatprep.subr.bf16.mxu0 0
        %1140 = vmatpush1.bf16.xpose.msra.mxu0 0
        %1141 = vmatprep.subr.bf16.mxu0 0
        %1142 = vmatpush1.bf16.xpose.msra.mxu0 0
        %1143 = vmatprep.subr.bf16.mxu0 0
        %1144 = vmatpush1.bf16.xpose.msra.mxu0 0
        %1145 = vmatprep.subr.bf16.mxu0 0
        %1146 = vmatpush1.bf16.xpose.msra.mxu0 0
        %1147 = vmatprep.subr.bf16.mxu0 0
        %1148 = vmatpush1.bf16.xpose.msra.mxu0 0
        %1149 = vmatprep.subr.bf16.mxu0 0
        %1150 = vmatpush1.bf16.xpose.msra.mxu0 0
        %1151 = vmatprep.subr.bf16.mxu0 0
        %1152 = vmatpush1.bf16.xpose.msra.mxu0 0
        %1153 = vmatprep.subr.bf16.mxu0 0
        %1154 = vmatpush1.bf16.xpose.msra.mxu0 0
        %1155 = vmatprep.subr.bf16.mxu0 0
        %1156 = vmatpush1.bf16.xpose.msra.mxu0 0
        %1157 = vmatprep.subr.bf16.mxu0 0
        %1158 = vmatpush1.bf16.xpose.msra.mxu0 0
        %1159 = vmatprep.subr.bf16.mxu0 0
        %1160 = vmatpush1.bf16.xpose.msra.mxu0 0
        %1161 = vmatprep.subr.bf16.mxu0 0
        %1162 = vmatpush1.bf16.xpose.msra.mxu0 0
        %1163 = vmatprep.subr.bf16.mxu0 0
        %1164 = vmatpush1.bf16.xpose.msra.mxu0 0
        %1165 = vmatprep.mubr.bf16.mxu0 0
        %1166 = vmatmul.mubr.bf16.gmra.mrb[0].mxu0 %v1128
        %v1167 = vpop.f32.mrb[0].mxu0
        %v1168 = vadd.f32 0.0, %v1167
        %v1169 = vpop.f32.mrb[0].mxu0
        %v1170 = vpop.f32.mrb[0].mxu0
        %v1171 = vpop.f32.mrb[0].mxu0
        %1172 = vdwg.mxu0
        %v1173 = vmul.f32 %v1168, 0.35355338
        %v1174 = vsel %vm1013, %v1173, -inf
        %1175 = vmax.xlane.f32.xlu0 %v1174
        %v1176 = vpop.xlane.xlu0 %1175
        %v1177 = vsub.f32 %v1173, %v1176
        %v1178 = vmul.f32 %v1177, 1.442695
        %v1179 = vpow.pop %v1178
        %v1180 = vsel %vm1013, %v1179, 0.0
        %1181 = vadd.xlane.f32.xlu0 %v1180
        %v1182 = vpop.xlane.xlu0 %1181
        %v1183 = vrcp.pop %v1182
        %v1184 = vmul.f32 %v1179, %v1183
        %s1185 = scalar_lea.vmem %s813, 8 [#allocation30]
        %1186 = vst.msk [vmem:[%s1185] sm:$0xff] %vm1013, %v1184
        %v1187 = vpack.c.bf16 %v1184, %v1184
        %1189 = vrot.lane.b32.xlu0 %v1012, 120
        %v1190 = vpop.permute.xlu0 %1189
        %v1192 = vsel %vm1013, %v1187, 0
        %v1195 = vsel %vm1077, %v1190, 0
        %1197 = vmatprep.subr.bf16.mxu0 0
        %1198 = vmatpush1.bf16.msra.mxu0 %v1195
        %1199 = vmatprep.subr.bf16.mxu0 0
        %1200 = vmatpush1.bf16.msra.mxu0 0
        %1201 = vmatprep.subr.bf16.mxu0 0
        %1202 = vmatpush1.bf16.msra.mxu0 0
        %1203 = vmatprep.subr.bf16.mxu0 0
        %1204 = vmatpush1.bf16.msra.mxu0 0
        %1205 = vmatprep.subr.bf16.mxu0 0
        %1206 = vmatpush1.bf16.msra.mxu0 0
        %1207 = vmatprep.subr.bf16.mxu0 0
        %1208 = vmatpush1.bf16.msra.mxu0 0
        %1209 = vmatprep.subr.bf16.mxu0 0
        %1210 = vmatpush1.bf16.msra.mxu0 0
        %1211 = vmatprep.subr.bf16.mxu0 0
        %1212 = vmatpush1.bf16.msra.mxu0 0
        %1213 = vmatprep.subr.bf16.mxu0 0
        %1214 = vmatpush1.bf16.msra.mxu0 0
        %1215 = vmatprep.subr.bf16.mxu0 0
        %1216 = vmatpush1.bf16.msra.mxu0 0
        %1217 = vmatprep.subr.bf16.mxu0 0
        %1218 = vmatpush1.bf16.msra.mxu0 0
        %1219 = vmatprep.subr.bf16.mxu0 0
        %1220 = vmatpush1.bf16.msra.mxu0 0
        %1221 = vmatprep.subr.bf16.mxu0 0
        %1222 = vmatpush1.bf16.msra.mxu0 0
        %1223 = vmatprep.subr.bf16.mxu0 0
        %1224 = vmatpush1.bf16.msra.mxu0 0
        %1225 = vmatprep.subr.bf16.mxu0 0
        %1226 = vmatpush1.bf16.msra.mxu0 0
        %1227 = vmatprep.subr.bf16.mxu0 0
        %1228 = vmatpush1.bf16.msra.mxu0 0
        %1229 = vmatprep.mubr.bf16.mxu0 0
        %1230 = vmatmul.mubr.bf16.gmra.mrb[0].mxu0 %v1192
        %v1231 = vpop.f32.mrb[0].mxu0
        %v1232 = vadd.f32 0.0, %v1231
        %v1233 = vpop.f32.mrb[0].mxu0
        %v1234 = vpop.f32.mrb[0].mxu0
        %v1235 = vpop.f32.mrb[0].mxu0
        %1236 = vdwg.mxu0
        %1237 = vrot.lane.b32.xlu0 %v884, 112
        %v1238 = vpop.permute.xlu0 %1237
        %1239 = vrot.lane.b32.xlu0 %v948, 112
        %v1240 = vpop.permute.xlu0 %1239
        %v1242 = vsel %vm1013, %v1238, 0
        %v1245 = vsel %vm1013, %v1240, 0
        %1247 = vmatprep.subr.bf16.mxu0 0
        %1248 = vmatpush1.bf16.xpose.msra.mxu0 %v1245
        %1249 = vmatprep.subr.bf16.mxu0 0
        %1250 = vmatpush1.bf16.xpose.msra.mxu0 0
        %1251 = vmatprep.subr.bf16.mxu0 0
        %1252 = vmatpush1.bf16.xpose.msra.mxu0 0
        %1253 = vmatprep.subr.bf16.mxu0 0
        %1254 = vmatpush1.bf16.xpose.msra.mxu0 0
        %1255 = vmatprep.subr.bf16.mxu0 0
        %1256 = vmatpush1.bf16.xpose.msra.mxu0 0
        %1257 = vmatprep.subr.bf16.mxu0 0
        %1258 = vmatpush1.bf16.xpose.msra.mxu0 0
        %1259 = vmatprep.subr.bf16.mxu0 0
        %1260 = vmatpush1.bf16.xpose.msra.mxu0 0
        %1261 = vmatprep.subr.bf16.mxu0 0
        %1262 = vmatpush1.bf16.xpose.msra.mxu0 0
        %1263 = vmatprep.subr.bf16.mxu0 0
        %1264 = vmatpush1.bf16.xpose.msra.mxu0 0
        %1265 = vmatprep.subr.bf16.mxu0 0
        %1266 = vmatpush1.bf16.xpose.msra.mxu0 0
        %1267 = vmatprep.subr.bf16.mxu0 0
        %1268 = vmatpush1.bf16.xpose.msra.mxu0 0
        %1269 = vmatprep.subr.bf16.mxu0 0
        %1270 = vmatpush1.bf16.xpose.msra.mxu0 0
        %1271 = vmatprep.subr.bf16.mxu0 0
        %1272 = vmatpush1.bf16.xpose.msra.mxu0 0
        %1273 = vmatprep.subr.bf16.mxu0 0
        %1274 = vmatpush1.bf16.xpose.msra.mxu0 0
        %1275 = vmatprep.subr.bf16.mxu0 0
        %1276 = vmatpush1.bf16.xpose.msra.mxu0 0
        %1277 = vmatprep.subr.bf16.mxu0 0
        %1278 = vmatpush1.bf16.xpose.msra.mxu0 0
        %1279 = vmatprep.mubr.bf16.mxu0 0
        %1280 = vmatmul.mubr.bf16.gmra.mrb[0].mxu0 %v1242
        %v1281 = vpop.f32.mrb[0].mxu0
        %v1282 = vadd.f32 0.0, %v1281
        %v1283 = vpop.f32.mrb[0].mxu0
        %v1284 = vpop.f32.mrb[0].mxu0
        %v1285 = vpop.f32.mrb[0].mxu0
        %1286 = vdwg.mxu0
        %v1287 = vmul.f32 %v1282, 0.35355338
        %v1288 = vsel %vm1013, %v1287, -inf
        %1289 = vmax.xlane.f32.xlu0 %v1288
        %v1290 = vpop.xlane.xlu0 %1289
        %v1291 = vsub.f32 %v1287, %v1290
        %v1292 = vmul.f32 %v1291, 1.442695
        %v1293 = vpow.pop %v1292
        %v1294 = vsel %vm1013, %v1293, 0.0
        %1295 = vadd.xlane.f32.xlu0 %v1294
        %v1296 = vpop.xlane.xlu0 %1295
        %v1297 = vrcp.pop %v1296
        %v1298 = vmul.f32 %v1293, %v1297
        %s1299 = scalar_lea.vmem %s813, 16 [#allocation30]
        %1300 = vst.msk [vmem:[%s1299] sm:$0xff] %vm1013, %v1298
        %v1301 = vpack.c.bf16 %v1298, %v1298
        %1302 = vrot.lane.b32.xlu0 %v1012, 112
        %v1303 = vpop.permute.xlu0 %1302
        %v1305 = vsel %vm1013, %v1301, 0
        %v1308 = vsel %vm1077, %v1303, 0
        %1310 = vmatprep.subr.bf16.mxu0 0
        %1311 = vmatpush1.bf16.msra.mxu0 %v1308
        %1312 = vmatprep.subr.bf16.mxu0 0
        %1313 = vmatpush1.bf16.msra.mxu0 0
        %1314 = vmatprep.subr.bf16.mxu0 0
        %1315 = vmatpush1.bf16.msra.mxu0 0
        %1316 = vmatprep.subr.bf16.mxu0 0
        %1317 = vmatpush1.bf16.msra.mxu0 0
        %1318 = vmatprep.subr.bf16.mxu0 0
        %1319 = vmatpush1.bf16.msra.mxu0 0
        %1320 = vmatprep.subr.bf16.mxu0 0
        %1321 = vmatpush1.bf16.msra.mxu0 0
        %1322 = vmatprep.subr.bf16.mxu0 0
        %1323 = vmatpush1.bf16.msra.mxu0 0
        %1324 = vmatprep.subr.bf16.mxu0 0
        %1325 = vmatpush1.bf16.msra.mxu0 0
        %1326 = vmatprep.subr.bf16.mxu0 0
        %1327 = vmatpush1.bf16.msra.mxu0 0
        %1328 = vmatprep.subr.bf16.mxu0 0
        %1329 = vmatpush1.bf16.msra.mxu0 0
        %1330 = vmatprep.subr.bf16.mxu0 0
        %1331 = vmatpush1.bf16.msra.mxu0 0
        %1332 = vmatprep.subr.bf16.mxu0 0
        %1333 = vmatpush1.bf16.msra.mxu0 0
        %1334 = vmatprep.subr.bf16.mxu0 0
        %1335 = vmatpush1.bf16.msra.mxu0 0
        %1336 = vmatprep.subr.bf16.mxu0 0
        %1337 = vmatpush1.bf16.msra.mxu0 0
        %1338 = vmatprep.subr.bf16.mxu0 0
        %1339 = vmatpush1.bf16.msra.mxu0 0
        %1340 = vmatprep.subr.bf16.mxu0 0
        %1341 = vmatpush1.bf16.msra.mxu0 0
        %1342 = vmatprep.mubr.bf16.mxu0 0
        %1343 = vmatmul.mubr.bf16.gmra.mrb[0].mxu0 %v1305
        %v1344 = vpop.f32.mrb[0].mxu0
        %v1345 = vadd.f32 0.0, %v1344
        %v1346 = vpop.f32.mrb[0].mxu0
        %v1347 = vpop.f32.mrb[0].mxu0
        %v1348 = vpop.f32.mrb[0].mxu0
        %1349 = vdwg.mxu0
        %1350 = vrot.lane.b32.xlu0 %v884, 104
        %v1351 = vpop.permute.xlu0 %1350
        %1352 = vrot.lane.b32.xlu0 %v948, 104
        %v1353 = vpop.permute.xlu0 %1352
        %v1355 = vsel %vm1013, %v1351, 0
        %v1358 = vsel %vm1013, %v1353, 0
        %1360 = vmatprep.subr.bf16.mxu0 0
        %1361 = vmatpush1.bf16.xpose.msra.mxu0 %v1358
        %1362 = vmatprep.subr.bf16.mxu0 0
        %1363 = vmatpush1.bf16.xpose.msra.mxu0 0
        %1364 = vmatprep.subr.bf16.mxu0 0
        %1365 = vmatpush1.bf16.xpose.msra.mxu0 0
        %1366 = vmatprep.subr.bf16.mxu0 0
        %1367 = vmatpush1.bf16.xpose.msra.mxu0 0
        %1368 = vmatprep.subr.bf16.mxu0 0
        %1369 = vmatpush1.bf16.xpose.msra.mxu0 0
        %1370 = vmatprep.subr.bf16.mxu0 0
        %1371 = vmatpush1.bf16.xpose.msra.mxu0 0
        %1372 = vmatprep.subr.bf16.mxu0 0
        %1373 = vmatpush1.bf16.xpose.msra.mxu0 0
        %1374 = vmatprep.subr.bf16.mxu0 0
        %1375 = vmatpush1.bf16.xpose.msra.mxu0 0
        %1376 = vmatprep.subr.bf16.mxu0 0
        %1377 = vmatpush1.bf16.xpose.msra.mxu0 0
        %1378 = vmatprep.subr.bf16.mxu0 0
        %1379 = vmatpush1.bf16.xpose.msra.mxu0 0
        %1380 = vmatprep.subr.bf16.mxu0 0
        %1381 = vmatpush1.bf16.xpose.msra.mxu0 0
        %1382 = vmatprep.subr.bf16.mxu0 0
        %1383 = vmatpush1.bf16.xpose.msra.mxu0 0
        %1384 = vmatprep.subr.bf16.mxu0 0
        %1385 = vmatpush1.bf16.xpose.msra.mxu0 0
        %1386 = vmatprep.subr.bf16.mxu0 0
        %1387 = vmatpush1.bf16.xpose.msra.mxu0 0
        %1388 = vmatprep.subr.bf16.mxu0 0
        %1389 = vmatpush1.bf16.xpose.msra.mxu0 0
        %1390 = vmatprep.subr.bf16.mxu0 0
        %1391 = vmatpush1.bf16.xpose.msra.mxu0 0
        %1392 = vmatprep.mubr.bf16.mxu0 0
        %1393 = vmatmul.mubr.bf16.gmra.mrb[0].mxu0 %v1355
        %v1394 = vpop.f32.mrb[0].mxu0
        %v1395 = vadd.f32 0.0, %v1394
        %v1396 = vpop.f32.mrb[0].mxu0
        %v1397 = vpop.f32.mrb[0].mxu0
        %v1398 = vpop.f32.mrb[0].mxu0
        %1399 = vdwg.mxu0
        %v1400 = vmul.f32 %v1395, 0.35355338
        %v1401 = vsel %vm1013, %v1400, -inf
        %1402 = vmax.xlane.f32.xlu0 %v1401
        %v1403 = vpop.xlane.xlu0 %1402
        %v1404 = vsub.f32 %v1400, %v1403
        %v1405 = vmul.f32 %v1404, 1.442695
        %v1406 = vpow.pop %v1405
        %v1407 = vsel %vm1013, %v1406, 0.0
        %1408 = vadd.xlane.f32.xlu0 %v1407
        %v1409 = vpop.xlane.xlu0 %1408
        %v1410 = vrcp.pop %v1409
        %v1411 = vmul.f32 %v1406, %v1410
        %s1412 = scalar_lea.vmem %s813, 24 [#allocation30]
        %1413 = vst.msk [vmem:[%s1412] sm:$0xff] %vm1013, %v1411
        %v1414 = vpack.c.bf16 %v1411, %v1411
        %1415 = vrot.lane.b32.xlu0 %v1012, 104
        %v1416 = vpop.permute.xlu0 %1415
        %v1418 = vsel %vm1013, %v1414, 0
        %v1421 = vsel %vm1077, %v1416, 0
        %1423 = vmatprep.subr.bf16.mxu0 0
        %1424 = vmatpush1.bf16.msra.mxu0 %v1421
        %1425 = vmatprep.subr.bf16.mxu0 0
        %1426 = vmatpush1.bf16.msra.mxu0 0
        %1427 = vmatprep.subr.bf16.mxu0 0
        %1428 = vmatpush1.bf16.msra.mxu0 0
        %1429 = vmatprep.subr.bf16.mxu0 0
        %1430 = vmatpush1.bf16.msra.mxu0 0
        %1431 = vmatprep.subr.bf16.mxu0 0
        %1432 = vmatpush1.bf16.msra.mxu0 0
        %1433 = vmatprep.subr.bf16.mxu0 0
        %1434 = vmatpush1.bf16.msra.mxu0 0
        %1435 = vmatprep.subr.bf16.mxu0 0
        %1436 = vmatpush1.bf16.msra.mxu0 0
        %1437 = vmatprep.subr.bf16.mxu0 0
        %1438 = vmatpush1.bf16.msra.mxu0 0
        %1439 = vmatprep.subr.bf16.mxu0 0
        %1440 = vmatpush1.bf16.msra.mxu0 0
        %1441 = vmatprep.subr.bf16.mxu0 0
        %1442 = vmatpush1.bf16.msra.mxu0 0
        %1443 = vmatprep.subr.bf16.mxu0 0
        %1444 = vmatpush1.bf16.msra.mxu0 0
        %1445 = vmatprep.subr.bf16.mxu0 0
        %1446 = vmatpush1.bf16.msra.mxu0 0
        %1447 = vmatprep.subr.bf16.mxu0 0
        %1448 = vmatpush1.bf16.msra.mxu0 0
        %1449 = vmatprep.subr.bf16.mxu0 0
        %1450 = vmatpush1.bf16.msra.mxu0 0
        %1451 = vmatprep.subr.bf16.mxu0 0
        %1452 = vmatpush1.bf16.msra.mxu0 0
        %1453 = vmatprep.subr.bf16.mxu0 0
        %1454 = vmatpush1.bf16.msra.mxu0 0
        %1455 = vmatprep.mubr.bf16.mxu0 0
        %1456 = vmatmul.mubr.bf16.gmra.mrb[0].mxu0 %v1418
        %v1457 = vpop.f32.mrb[0].mxu0
        %v1458 = vadd.f32 0.0, %v1457
        %v1459 = vpop.f32.mrb[0].mxu0
        %v1460 = vpop.f32.mrb[0].mxu0
        %v1461 = vpop.f32.mrb[0].mxu0
        %1462 = vdwg.mxu0
        %1464 = vrot.lane.b32.xlu0 %v1232, 8
        %v1465 = vpop.permute.xlu0 %1464
        %1468 = vrot.lane.b32.xlu0 %v1345, 16
        %v1469 = vpop.permute.xlu0 %1468
        %1472 = vrot.lane.b32.xlu0 %v1458, 24
        %v1473 = vpop.permute.xlu0 %1472
        %v1475 = vsel %vm1013, %v1116, %v1465
        %vm1476 = vcmask 130048
        %v1477 = vsel %vm1476, %v1475, %v1469
        %vm1478 = vcmask 195584
        %v1479 = vsel %vm1478, %v1477, %v1473
        %v1480 = vpack.c.bf16 %v1479, %v1479
        %v1481 = vld [vmem:[#allocation14] sm:$0xf]
        %v1482 = vld [vmem:[#allocation14 + $0x4] sm:$0xf]
        %v1483 = vld [vmem:[#allocation14 + $0x8] sm:$0xf]
        %v1484 = vld [vmem:[#allocation14 + $0xc] sm:$0xf]
        %v1485 = vld [vmem:[#allocation16] sm:$0x1]
        %v1487 = vlaneseq
        %v1488 = vshrl.u32 %v1487, 7
        %v1489 = vsub.s32 0, %v1488
        %v1490 = vrot.slane %v1485, %v1489
        %v1496 = vunpack.c.l.b16 %v1481
        %v1497 = vunpack.c.l.b16 %v1482
        %v1498 = vunpack.c.l.b16 %v1483
        %v1499 = vunpack.c.l.b16 %v1484
        %v1500 = vpack.c.b16 %v1497, %v1496
        %v1501 = vpack.c.b16 %v1499, %v1498
        %v1505 = vsel %vm840, %v1480, 0
        %1507 = vmatprep.subr.bf16.mxu0 0
        %1508 = vmatpush1.bf16.msra.mxu0 %v1500
        %1509 = vmatprep.subr.bf16.mxu0 0
        %1510 = vmatpush1.bf16.msra.mxu0 %v1501
        %1511 = vmatprep.subr.bf16.mxu0 0
        %1512 = vmatpush1.bf16.msra.mxu0 0
        %1513 = vmatprep.subr.bf16.mxu0 0
        %1514 = vmatpush1.bf16.msra.mxu0 0
        %1515 = vmatprep.subr.bf16.mxu0 0
        %1516 = vmatpush1.bf16.msra.mxu0 0
        %1517 = vmatprep.subr.bf16.mxu0 0
        %1518 = vmatpush1.bf16.msra.mxu0 0
        %1519 = vmatprep.subr.bf16.mxu0 0
        %1520 = vmatpush1.bf16.msra.mxu0 0
        %1521 = vmatprep.subr.bf16.mxu0 0
        %1522 = vmatpush1.bf16.msra.mxu0 0
        %1523 = vmatprep.subr.bf16.mxu0 0
        %1524 = vmatpush1.bf16.msra.mxu0 0
        %1525 = vmatprep.subr.bf16.mxu0 0
        %1526 = vmatpush1.bf16.msra.mxu0 0
        %1527 = vmatprep.subr.bf16.mxu0 0
        %1528 = vmatpush1.bf16.msra.mxu0 0
        %1529 = vmatprep.subr.bf16.mxu0 0
        %1530 = vmatpush1.bf16.msra.mxu0 0
        %1531 = vmatprep.subr.bf16.mxu0 0
        %1532 = vmatpush1.bf16.msra.mxu0 0
        %1533 = vmatprep.subr.bf16.mxu0 0
        %1534 = vmatpush1.bf16.msra.mxu0 0
        %1535 = vmatprep.subr.bf16.mxu0 0
        %1536 = vmatpush1.bf16.msra.mxu0 0
        %1537 = vmatprep.subr.bf16.mxu0 0
        %1538 = vmatpush1.bf16.msra.mxu0 0
        %1539 = vmatprep.mubr.bf16.mxu0 0
        %1540 = vmatmul.mubr.bf16.gmra.mrb[0].mxu0 %v1505
        %v1541 = vpop.f32.mrb[0].mxu0
        %v1542 = vadd.f32 %v1490, %v1541
        %v1543 = vpop.f32.mrb[0].mxu0
        %v1544 = vpop.f32.mrb[0].mxu0
        %v1545 = vpop.f32.mrb[0].mxu0
        %1546 = vdwg.mxu0
        %v1547 = vadd.f32 %v1542, %v815
        %v1548 = vld [vmem:[#allocation17] sm:$0x1]
        %v1549 = vld [vmem:[#allocation19] sm:$0x1]
        %v1550 = vsel %vm840, %v1547, 0.0
        %1551 = vadd.xlane.f32.xlu0 %v1550
        %v1552 = vpop.xlane.xlu0 %1551
        %v1553 = vrcp.pop 32.0
        %v1554 = vmul.f32 %v1552, %v1553
        %v1555 = vsub.f32 %v1547, %v1554
        %v1556 = vmul.f32 %v1555, %v1555
        %v1557 = vsel %vm840, %v1556, 0.0
        %1558 = vadd.xlane.f32.xlu0 %v1557
        %v1559 = vpop.xlane.xlu0 %1558
        %v1560 = vmul.f32 %v1559, %v1553
        %v1561 = vadd.f32 %v1560, 1e-06
        %v1562 = vrsqrt.pop %v1561
        %v1563 = vmul.f32 %v1555, %v1562
        %v1565 = vlaneseq
        %v1566 = vshrl.u32 %v1565, 7
        %v1567 = vsub.s32 0, %v1566
        %v1568 = vrot.slane %v1548, %v1567
        %v1570 = vmul.f32 %v1563, %v1568
        %v1572 = vlaneseq
        %v1573 = vshrl.u32 %v1572, 7
        %v1574 = vsub.s32 0, %v1573
        %v1575 = vrot.slane %v1549, %v1574
        %v1577 = vadd.f32 %v1570, %v1575
        %v1578 = vpack.c.bf16 %v1577, %v1577
        %v1579 = vld [vmem:[#allocation20] sm:$0xf]
        %v1580 = vld [vmem:[#allocation20 + $0x4] sm:$0xf]
        %v1581 = vld [vmem:[#allocation20 + $0x8] sm:$0xf]
        %v1582 = vld [vmem:[#allocation20 + $0xc] sm:$0xf]
        %v1583 = vld [vmem:[#allocation22] sm:$0x1]
        %v1585 = vlaneseq
        %v1586 = vshrl.u32 %v1585, 7
        %v1587 = vsub.s32 0, %v1586
        %v1588 = vrot.slane %v1583, %v1587
        %v1594 = vunpack.c.l.b16 %v1579
        %v1595 = vunpack.c.l.b16 %v1580
        %v1596 = vunpack.c.l.b16 %v1581
        %v1597 = vunpack.c.l.b16 %v1582
        %v1598 = vpack.c.b16 %v1595, %v1594
        %v1599 = vpack.c.b16 %v1597, %v1596
        %v1603 = vsel %vm840, %v1578, 0
        %1605 = vmatprep.subr.bf16.mxu0 0
        %1606 = vmatpush1.bf16.msra.mxu0 %v1598
        %1607 = vmatprep.subr.bf16.mxu0 0
        %1608 = vmatpush1.bf16.msra.mxu0 %v1599
        %1609 = vmatprep.subr.bf16.mxu0 0
        %1610 = vmatpush1.bf16.msra.mxu0 0
        %1611 = vmatprep.subr.bf16.mxu0 0
        %1612 = vmatpush1.bf16.msra.mxu0 0
        %1613 = vmatprep.subr.bf16.mxu0 0
        %1614 = vmatpush1.bf16.msra.mxu0 0
        %1615 = vmatprep.subr.bf16.mxu0 0
        %1616 = vmatpush1.bf16.msra.mxu0 0
        %1617 = vmatprep.subr.bf16.mxu0 0
        %1618 = vmatpush1.bf16.msra.mxu0 0
        %1619 = vmatprep.subr.bf16.mxu0 0
        %1620 = vmatpush1.bf16.msra.mxu0 0
        %1621 = vmatprep.subr.bf16.mxu0 0
        %1622 = vmatpush1.bf16.msra.mxu0 0
        %1623 = vmatprep.subr.bf16.mxu0 0
        %1624 = vmatpush1.bf16.msra.mxu0 0
        %1625 = vmatprep.subr.bf16.mxu0 0
        %1626 = vmatpush1.bf16.msra.mxu0 0
        %1627 = vmatprep.subr.bf16.mxu0 0
        %1628 = vmatpush1.bf16.msra.mxu0 0
        %1629 = vmatprep.subr.bf16.mxu0 0
        %1630 = vmatpush1.bf16.msra.mxu0 0
        %1631 = vmatprep.subr.bf16.mxu0 0
        %1632 = vmatpush1.bf16.msra.mxu0 0
        %1633 = vmatprep.subr.bf16.mxu0 0
        %1634 = vmatpush1.bf16.msra.mxu0 0
        %1635 = vmatprep.subr.bf16.mxu0 0
        %1636 = vmatpush1.bf16.msra.mxu0 0
        %1637 = vmatprep.mubr.bf16.mxu0 0
        %1638 = vmatmul.mubr.bf16.gmra.mrb[0].mxu0 %v1603
        %v1639 = vpop.f32.mrb[0].mxu0
        %v1640 = vadd.f32 %v1588, %v1639
        %v1641 = vpop.f32.mrb[0].mxu0
        %v1642 = vpop.f32.mrb[0].mxu0
        %v1643 = vpop.f32.mrb[0].mxu0
        %1644 = vdwg.mxu0
        %v1645 = vmax.f32 %v1640, 0.0
        %v1646 = vpack.c.bf16 %v1645, %v1645
        %v1647 = vld [vmem:[#allocation23] sm:$0xf]
        %v1648 = vld [vmem:[#allocation23 + $0x4] sm:$0xf]
        %v1649 = vld [vmem:[#allocation23 + $0x8] sm:$0xf]
        %v1650 = vld [vmem:[#allocation23 + $0xc] sm:$0xf]
        %v1651 = vld [vmem:[#allocation23 + $0x10] sm:$0xf]
        %v1652 = vld [vmem:[#allocation23 + $0x14] sm:$0xf]
        %v1653 = vld [vmem:[#allocation23 + $0x18] sm:$0xf]
        %v1654 = vld [vmem:[#allocation23 + $0x1c] sm:$0xf]
        %v1655 = vld [vmem:[#allocation25] sm:$0x1]
        %v1657 = vlaneseq
        %v1658 = vshrl.u32 %v1657, 7
        %v1659 = vsub.s32 0, %v1658
        %v1660 = vrot.slane %v1655, %v1659
        %v1670 = vunpack.c.l.b16 %v1647
        %v1671 = vunpack.c.l.b16 %v1648
        %v1672 = vunpack.c.l.b16 %v1649
        %v1673 = vunpack.c.l.b16 %v1650
        %v1674 = vunpack.c.l.b16 %v1651
        %v1675 = vunpack.c.l.b16 %v1652
        %v1676 = vunpack.c.l.b16 %v1653
        %v1677 = vunpack.c.l.b16 %v1654
        %v1678 = vpack.c.b16 %v1671, %v1670
        %v1679 = vpack.c.b16 %v1673, %v1672
        %v1680 = vpack.c.b16 %v1675, %v1674
        %v1681 = vpack.c.b16 %v1677, %v1676
        %vm1686 = vcmask 523264
        %v1688 = vsel %vm1686, %v1646, 0
        %1690 = vmatprep.subr.bf16.mxu0 0
        %1691 = vmatpush1.bf16.msra.mxu0 %v1678
        %1692 = vmatprep.subr.bf16.mxu0 0
        %1693 = vmatpush1.bf16.msra.mxu0 %v1679
        %1694 = vmatprep.subr.bf16.mxu0 0
        %1695 = vmatpush1.bf16.msra.mxu0 %v1680
        %1696 = vmatprep.subr.bf16.mxu0 0
        %1697 = vmatpush1.bf16.msra.mxu0 %v1681
        %1698 = vmatprep.subr.bf16.mxu0 0
        %1699 = vmatpush1.bf16.msra.mxu0 0
        %1700 = vmatprep.subr.bf16.mxu0 0
        %1701 = vmatpush1.bf16.msra.mxu0 0
        %1702 = vmatprep.subr.bf16.mxu0 0
        %1703 = vmatpush1.bf16.msra.mxu0 0
        %1704 = vmatprep.subr.bf16.mxu0 0
        %1705 = vmatpush1.bf16.msra.mxu0 0
        %1706 = vmatprep.subr.bf16.mxu0 0
        %1707 = vmatpush1.bf16.msra.mxu0 0
        %1708 = vmatprep.subr.bf16.mxu0 0
        %1709 = vmatpush1.bf16.msra.mxu0 0
        %1710 = vmatprep.subr.bf16.mxu0 0
        %1711 = vmatpush1.bf16.msra.mxu0 0
        %1712 = vmatprep.subr.bf16.mxu0 0
        %1713 = vmatpush1.bf16.msra.mxu0 0
        %1714 = vmatprep.subr.bf16.mxu0 0
        %1715 = vmatpush1.bf16.msra.mxu0 0
        %1716 = vmatprep.subr.bf16.mxu0 0
        %1717 = vmatpush1.bf16.msra.mxu0 0
        %1718 = vmatprep.subr.bf16.mxu0 0
        %1719 = vmatpush1.bf16.msra.mxu0 0
        %1720 = vmatprep.subr.bf16.mxu0 0
        %1721 = vmatpush1.bf16.msra.mxu0 0
        %1722 = vmatprep.mubr.bf16.mxu0 0
        %1723 = vmatmul.mubr.bf16.gmra.mrb[0].mxu0 %v1688
        %v1724 = vpop.f32.mrb[0].mxu0
        %v1725 = vadd.f32 %v1660, %v1724
        %v1726 = vpop.f32.mrb[0].mxu0
        %v1727 = vpop.f32.mrb[0].mxu0
        %v1728 = vpop.f32.mrb[0].mxu0
        %1729 = vdwg.mxu0
        %v1730 = vadd.f32 %v1725, %v1577
        %v1731 = vld [vmem:[#allocation26] sm:$0x1]
        %v1732 = vld [vmem:[#allocation28] sm:$0x1]
        %v1733 = vsel %vm840, %v1730, 0.0
        %1734 = vadd.xlane.f32.xlu0 %v1733
        %v1735 = vpop.xlane.xlu0 %1734
        %v1736 = vmul.f32 %v1735, %v1553
        %v1737 = vsub.f32 %v1730, %v1736
        %v1738 = vmul.f32 %v1737, %v1737
        %v1739 = vsel %vm840, %v1738, 0.0
        %1740 = vadd.xlane.f32.xlu0 %v1739
        %v1741 = vpop.xlane.xlu0 %1740
        %v1742 = vmul.f32 %v1741, %v1553
        %v1743 = vadd.f32 %v1742, 1e-06
        %v1744 = vrsqrt.pop %v1743
        %v1745 = vmul.f32 %v1737, %v1744
        %v1747 = vlaneseq
        %v1748 = vshrl.u32 %v1747, 7
        %v1749 = vsub.s32 0, %v1748
        %v1750 = vrot.slane %v1731, %v1749
        %v1752 = vmul.f32 %v1745, %v1750
        %v1754 = vlaneseq
        %v1755 = vshrl.u32 %v1754, 7
        %v1756 = vsub.s32 0, %v1755
        %v1757 = vrot.slane %v1732, %v1756
        %v1759 = vadd.f32 %v1752, %v1757
        %1760 = vst.msk [vmem:[%s806] sm:$0xff] %vm840, %v1759
        %s1761 = sand.u32 %s417, 1
        %s1762 = scalar_lea.sflag [#allocation4], %s1761
        %s1763 = sand.u32 %s417, 1
        %s1764 = smul.addr %s1763, 8
        %s1765 = scalar_lea.vmem [#allocation29], %s1764
        %s1766 = sand.u32 %s443, 1
        %s1767 = scalar_lea.sflag [#allocation31], %s1766
        %s1768 = sand.u32 %s443, 1
        %s1769 = smul.addr %s1768, 32
        %s1770 = scalar_lea.vmem [#allocation30], %s1769
        // Predicated region
        $region157: #{tpu_custom_call.1} parent=87 // pred_check
          %p1771 = pneg %p427
        $region158: #{tpu_custom_call.1} parent=87 // pred_check_branch
          %1773 = sbr.rel (%p1771) target = $region160
        $region159: #{tpu_custom_call.1} parent=87 // pred_region
          %s1775 = ssub.s32 128, 128
          %1776 = vsyncadd %s1762, %s1775
          %s1777 = smul.addr %s47, 128
          %s1778 = scalar_lea.hbm %s17, %s1777
          %s1780 = sshll.u32 %s1765, 4
          %s1781 = int_to_ptr.vmem [resolvable:$true] %s1780
          %1783 = dma.vmem_to_hbm [thread:$0]  %s1781, 128, %s1778, %s1762
        $region160: #{tpu_custom_call.1} parent=87 // pred_fallthru
          _
        // Predicated region
        $region161: #{tpu_custom_call.1} parent=87 // pred_check
          %p1784 = pneg %p453
        $region162: #{tpu_custom_call.1} parent=87 // pred_check_branch
          %1786 = sbr.rel (%p1784) target = $region164
        $region163: #{tpu_custom_call.1} parent=87 // pred_region
          %s1788 = ssub.s32 512, 512
          %1789 = vsyncadd %s1767, %s1788
          %s1790 = smul.addr %s47, 4
          %s1791 = smul.addr %s1790, 128
          %s1792 = scalar_lea.hbm %s18, %s1791
          %s1793 = sshll.u32 %s1770, 4
          %s1794 = int_to_ptr.vmem [resolvable:$true] %s1793
          %1799 = dma.vmem_to_hbm [thread:$0]  %s1794, 512, %s1792, %s1767, 128, 128, 8
        $region164: #{tpu_custom_call.1} parent=87 // pred_fallthru
          _
      $region88: #{tpu_custom_call.1} parent=5 // pred_fallthru
        _
      %p1800 = scmp.le.s32.totalorder 2, %s42
      // Predicated region
      $region165: #{tpu_custom_call.1} parent=5 // pred_check
        %p1801 = pneg %p1800
      $region166: #{tpu_custom_call.1} parent=5 // pred_check_branch
        %1803 = sbr.rel (%p1801) target = $region168
      $region167: #{tpu_custom_call.1} parent=5 // pred_region
        %s1804 = ssub.s32 %s42, 2
        // Predicated region
        $region169: #{tpu_custom_call.1} parent=167 // pred_check
          %p1805 = pneg %p433
        $region170: #{tpu_custom_call.1} parent=167 // pred_check_branch
          %1807 = sbr.rel (%p1805) target = $region172
        $region171: #{tpu_custom_call.1} parent=167 // pred_region
          %s1808 = sand.u32 %s418, 1
          %s1809 = scalar_lea.sflag [#allocation4], %s1808
          %s1810 = sand.u32 %s418, 1
          %s1811 = smul.addr %s1810, 8
          %s1812 = scalar_lea.vmem [#allocation29], %s1811
          %1813 = dma.done %s1809, 128
        $region172: #{tpu_custom_call.1} parent=167 // pred_fallthru
          _
        // Predicated region
        $region173: #{tpu_custom_call.1} parent=167 // pred_check
          %p1814 = pneg %p459
        $region174: #{tpu_custom_call.1} parent=167 // pred_check_branch
          %1816 = sbr.rel (%p1814) target = $region176
        $region175: #{tpu_custom_call.1} parent=167 // pred_region
          %s1817 = sand.u32 %s444, 1
          %s1818 = scalar_lea.sflag [#allocation31], %s1817
          %s1819 = sand.u32 %s444, 1
          %s1820 = smul.addr %s1819, 32
          %s1821 = scalar_lea.vmem [#allocation30], %s1820
          %1822 = dma.done %s1818, 512
        $region176: #{tpu_custom_call.1} parent=167 // pred_fallthru
          _
      $region168: #{tpu_custom_call.1} parent=5 // pred_fallthru
        _
    $region6: #{tpu_custom_call.1} parent=1 // loop_footer
      %s46 = sadd.s32 1, %s42
    $region7: #{tpu_custom_call.1} parent=1 // loop_footer_branch
      %41 = sbr.rel target = $region3
    $region8: #{tpu_custom_call.1} parent=1 // loop_exit
      _
    %1823 = vsyncpa [#allocation3], 1
    %s1824 = scalar_lea.sflag [#allocation3], 1
    %1825 = vsyncpa %s1824, 1
    %1826 = vsyncpa [#allocation6], 1
    %1827 = vsyncpa [#allocation9], 1
    %1828 = vsyncpa [#allocation12], 1
    %1829 = vsyncpa [#allocation15], 1
    %1830 = vsyncpa [#allocation18], 1
    %1831 = vsyncpa [#allocation21], 1
    %1832 = vsyncpa [#allocation24], 1
    %1833 = vsyncpa [#allocation27], 1
    %1834 = vsyncpa [#allocation4], 1
    %s1835 = scalar_lea.sflag [#allocation4], 1
    %1836 = vsyncpa %s1835, 1
    %1837 = vsyncpa [#allocation31], 1
    %s1838 = scalar_lea.sflag [#allocation31], 1
    %1839 = vsyncpa %s1838, 1

</llo_original>
